<compile_context>
chip_gen: v7x
topology: tpu7x:2x2x1
jax: 0.10.0
libtpu: 0.0.40
codegen_flags: <defaults>
</compile_context>

<pallas_src>
import functools

import jax
import jax.numpy as jnp
from jax import lax
from jax.experimental import pallas as pl
from jax.experimental.pallas import tpu as pltpu

_HIGHEST = jax.lax.Precision.HIGHEST  # keep f32 matmul numerics identical to the reference
# (On v6e/v7x with large I / S*B, relax to default precision or bf16 operands with f32
#  accumulation -- gate behind the tolerance check. Irrelevant at these sizes.)


def _fused_lstm_kernel(x_ref, w_ih_ref, b_ref, w_comb_ref, w_hr_ref, out_ref, *,
                       hidden_size, proj_size):
    """Whole projected-LSTM forward in a single kernel invocation (no grid).

    x_ref     : (B, S, I)   batch-first input, untouched layout (no wrapper transpose)
    w_ih_ref  : (I, 4H)     input weights (transposed), gate order (i, f, o, g)
    b_ref     : (1, 4H)     b_ih + b_hh, gate order (i, f, o, g)
    w_comb_ref: (H, 4H)     (W_hh @ W_hr)^T -- output projection folded into the recurrence
    w_hr_ref  : (1, H) if P == 1 (VPU row layout) else (H, P) (MXU layout)
    out_ref   : (B, S*P)    lane-dense output slab; single store at kernel end
    """
    H = hidden_size
    P = proj_size
    B, S, _ = x_ref.shape

    # ---- Hoisted input projection: one MXU matmul over all B*S rows (in-kernel). ----
    # (B, S, I) -> (B*S, I) is a layout-preserving merge (S is a multiple of 8 sublanes).
    x2d = x_ref[...].reshape(B * S, x_ref.shape[2])
    gx = jnp.dot(x2d, w_ih_ref[...],
                 preferred_element_type=jnp.float32, precision=_HIGHEST) + b_ref[...]
    gx = gx.reshape(B, S, 4 * H)                       # batch-major; sliced with static t below

    # Resident weights: loaded once, reused every timestep.
    w_comb = w_comb_ref[...]                           # (H, 4H)
    w_hr = w_hr_ref[...]

    h_tilde = jnp.zeros((B, H), jnp.float32)           # carries o*tanh(c); h_t = h_tilde @ W_hr^T
    c = jnp.zeros((B, H), jnp.float32)
    outs = []

    # Static Python loop: S is small and fixed, so every slice / store index is compile-time
    # constant and the LLO scheduler sees the whole recurrence.
    # TODO(synk): for long sequences switch to lax.fori_loop(unroll=4..8) with an (S, B, H)
    #             VMEM scratch to bound code size and vreg live ranges.
    for t in range(S):
        # Recurrent term with the projection folded in: h_{t-1} @ W_hh^T == h_tilde @ W_comb^T.
        gates = gx[:, t, :] + jnp.dot(h_tilde, w_comb,
                                      preferred_element_type=jnp.float32,
                                      precision=_HIGHEST)                    # (B, 4H)

        # Gate order (i, f, o, g): one contiguous sigmoid slab + one tanh slab.
        sig = jax.nn.sigmoid(gates[:, :3 * H])
        i_g = sig[:, 0 * H:1 * H]
        f_g = sig[:, 1 * H:2 * H]
        o_g = sig[:, 2 * H:3 * H]
        g_g = jnp.tanh(gates[:, 3 * H:])

        c = f_g * c + i_g * g_g                        # f32 elementwise (VPU/EUP)
        h_tilde = o_g * jnp.tanh(c)                    # (B, H) -- the only loop-carried state

        # Output projection: OFF the recurrence's serial chain (thanks to W_comb folding),
        # so it overlaps with the next timestep.
        if P == 1:
            outs.append(jnp.sum(h_tilde * w_hr, axis=-1, keepdims=True))     # (B, 1): VPU + XLU
        else:
            outs.append(jnp.dot(h_tilde, w_hr,
                                preferred_element_type=jnp.float32,
                                precision=_HIGHEST))                          # (B, P): MXU

    # Single dense store: (B, S*P) row-major == (B, S, P) after a free wrapper reshape.
    out_ref[...] = jnp.concatenate(outs, axis=1).astype(out_ref.dtype)


def _reorder_gates(w):
    # torch gate order (i, f, g, o) -> (i, f, o, g): sigmoid/tanh act on contiguous slabs.
    wi, wf, wg, wo = jnp.split(w, 4, axis=0)
    return jnp.concatenate([wi, wf, wo, wg], axis=0)


@jax.jit
def should_model_forward(x, w_ih, w_hh, b_ih, b_hh, w_hr):
    """x: (B, S, I); weights follow torch.nn.LSTM(proj_size=P) layout. Returns (B, S, P)."""
    B, S, I = x.shape
    four_h = w_ih.shape[0]
    H = four_h // 4
    P = w_hr.shape[0]

    # Tiny one-time weight prep (would be cached in a real model).
    w_ih_t = jnp.transpose(_reorder_gates(w_ih)).astype(jnp.float32)          # (I, 4H)
    b = _reorder_gates(b_ih + b_hh).reshape(1, 4 * H).astype(jnp.float32)     # (1, 4H)
    # Fold the output projection into the recurrent weight:
    #   h_{t-1} @ W_hh^T = (h_tilde_{t-1} @ W_hr^T) @ W_hh^T = h_tilde_{t-1} @ (W_hh @ W_hr)^T
    w_comb_t = jnp.transpose(
        jnp.dot(_reorder_gates(w_hh).astype(jnp.float32), w_hr.astype(jnp.float32),
                precision=_HIGHEST))                                          # (H, 4H)
    w_hr_k = (w_hr.astype(jnp.float32) if P == 1
              else jnp.transpose(w_hr).astype(jnp.float32))                   # (1,H) / (H,P)

    kernel = functools.partial(_fused_lstm_kernel, hidden_size=H, proj_size=P)
    out_flat = pl.pallas_call(
        kernel,
        out_shape=jax.ShapeDtypeStruct((B, S * P), jnp.float32),
        in_specs=[pl.BlockSpec(memory_space=pltpu.MemorySpace.VMEM)] * 5,
        out_specs=pl.BlockSpec(memory_space=pltpu.MemorySpace.VMEM),
    )(x.astype(jnp.float32), w_ih_t, b, w_comb_t, w_hr_k)

    return out_flat.reshape(B, S, P).astype(x.dtype)                          # free reshape


def _reference_forward(x, w_ih, w_hh, b_ih, b_hh, w_hr):
    """Pure-JAX reference (PyTorch projected-LSTM semantics) for verification."""
    B, S, I = x.shape
    H = w_ih.shape[0] // 4
    P = w_hr.shape[0]

    def step(carry, x_t):
        h, c = carry
        gates = (jnp.dot(x_t, w_ih.T, precision=_HIGHEST) + b_ih
                 + jnp.dot(h, w_hh.T, precision=_HIGHEST) + b_hh)
        i_g = jax.nn.sigmoid(gates[:, 0 * H:1 * H])
        f_g = jax.nn.sigmoid(gates[:, 1 * H:2 * H])
        g_g = jnp.tanh(gates[:, 2 * H:3 * H])
        o_g = jax.nn.sigmoid(gates[:, 3 * H:4 * H])
        c_t = f_g * c + i_g * g_g
        h_t = jnp.dot(o_g * jnp.tanh(c_t), w_hr.T, precision=_HIGHEST)
        return (h_t, c_t), h_t

    h0 = jnp.zeros((B, P), jnp.float32)
    c0 = jnp.zeros((B, H), jnp.float32)
    _, ys = jax.lax.scan(step, (h0, c0), jnp.swapaxes(x, 0, 1))
    return jnp.swapaxes(ys, 0, 1)


if __name__ == "__main__":
    # Small shapes consistent with the module's forward (batch_first LSTM input).
    batch, seq, input_size = 4, 8, 8
    hidden_size, proj_size = 32, 1          # num_layers=1, dropout=0.0 (module defaults)

    key = jax.random.PRNGKey(0)
    kx, k1, k2, k3, k4, k5 = jax.random.split(key, 6)
    bound = 1.0 / jnp.sqrt(hidden_size)

    x = jax.random.normal(kx, (batch, seq, input_size), jnp.float32)
    w_ih = jax.random.uniform(k1, (4 * hidden_size, input_size), jnp.float32, -bound, bound)
    w_hh = jax.random.uniform(k2, (4 * hidden_size, proj_size), jnp.float32, -bound, bound)
    b_ih = jax.random.uniform(k3, (4 * hidden_size,), jnp.float32, -bound, bound)
    b_hh = jax.random.uniform(k4, (4 * hidden_size,), jnp.float32, -bound, bound)
    w_hr = jax.random.uniform(k5, (proj_size, hidden_size), jnp.float32, -bound, bound)

    out = should_model_forward(x, w_ih, w_hh, b_ih, b_hh, w_hr)
    out = jax.block_until_ready(out)

    ref = _reference_forward(x, w_ih, w_hh, b_ih, b_hh, w_hr)
    assert out.shape == (batch, seq, proj_size)
    assert jnp.allclose(out, ref, atol=1e-5, rtol=1e-5), "mismatch vs reference"

    print("KERNEL_OK")
</pallas_src>

<mosaic_0001>
module attributes {stable_mosaic.version = 11 : i64} {
  func.func @_fused_lstm_kernel(%arg0: memref<4x8x8xf32, #tpu.memory_space<vmem>>, %arg1: memref<8x128xf32, #tpu.memory_space<vmem>>, %arg2: memref<1x128xf32, #tpu.memory_space<vmem>>, %arg3: memref<32x128xf32, #tpu.memory_space<vmem>>, %arg4: memref<1x32xf32, #tpu.memory_space<vmem>>, %arg5: memref<4x8xf32, #tpu.memory_space<vmem>>) attributes {dimension_semantics = [], scalar_prefetch = 0 : i64, scratch_operands = 0 : i64, tpu.core_type = #tpu.core_type<tc>} {
    %c0 = arith.constant 0 : index
    %c0_0 = arith.constant 0 : index
    %c0_1 = arith.constant 0 : index
    %0 = vector.load %arg0[%c0, %c0_0, %c0_1] : memref<4x8x8xf32, #tpu.memory_space<vmem>>, vector<4x8x8xf32>
    %1 = vector.shape_cast %0 : vector<4x8x8xf32> to vector<32x8xf32>
    %c0_2 = arith.constant 0 : index
    %c0_3 = arith.constant 0 : index
    %2 = vector.load %arg1[%c0_2, %c0_3] : memref<8x128xf32, #tpu.memory_space<vmem>>, vector<8x128xf32>
    %cst = arith.constant dense<0.000000e+00> : vector<32x128xf32>
    %3 = tpu.matmul %1, %2, %cst {dimension_numbers = #tpu.dot_dimension_numbers<[1], [0], [0], [1], [0, 0, 1, 1], [], []>, precision = #tpu.contract_precision<fp32>} : vector<32x8xf32>, vector<8x128xf32>, vector<32x128xf32> -> vector<32x128xf32>
    %c0_4 = arith.constant 0 : index
    %c0_5 = arith.constant 0 : index
    %4 = vector.load %arg2[%c0_4, %c0_5] : memref<1x128xf32, #tpu.memory_space<vmem>>, vector<1x128xf32>
    %5 = vector.broadcast %4 : vector<1x128xf32> to vector<32x128xf32>
    %6 = arith.addf %3, %5 : vector<32x128xf32>
    %7 = vector.shape_cast %6 : vector<32x128xf32> to vector<4x8x128xf32>
    %c0_6 = arith.constant 0 : index
    %c0_7 = arith.constant 0 : index
    %8 = vector.load %arg3[%c0_6, %c0_7] : memref<32x128xf32, #tpu.memory_space<vmem>>, vector<32x128xf32>
    %c0_8 = arith.constant 0 : index
    %c0_9 = arith.constant 0 : index
    %9 = vector.load %arg4[%c0_8, %c0_9] : memref<1x32xf32, #tpu.memory_space<vmem>>, vector<1x32xf32>
    %cst_10 = arith.constant 0.000000e+00 : f32
    %10 = vector.broadcast %cst_10 : f32 to vector<4x32xf32>
    %cst_11 = arith.constant 0.000000e+00 : f32
    %11 = vector.broadcast %cst_11 : f32 to vector<4x32xf32>
    %12 = vector.extract_strided_slice %7 {offsets = [0, 0, 0], sizes = [4, 1, 128], strides = [1, 1, 1]} : vector<4x8x128xf32> to vector<4x1x128xf32>
    %13 = vector.shape_cast %12 : vector<4x1x128xf32> to vector<4x128xf32>
    %cst_12 = arith.constant dense<0.000000e+00> : vector<4x128xf32>
    %14 = tpu.matmul %10, %8, %cst_12 {dimension_numbers = #tpu.dot_dimension_numbers<[1], [0], [0], [1], [0, 0, 1, 1], [], []>, precision = #tpu.contract_precision<fp32>} : vector<4x32xf32>, vector<32x128xf32>, vector<4x128xf32> -> vector<4x128xf32>
    %15 = arith.addf %13, %14 : vector<4x128xf32>
    %16 = vector.extract_strided_slice %15 {offsets = [0, 0], sizes = [4, 96], strides = [1, 1]} : vector<4x128xf32> to vector<4x96xf32>
    %17 = arith.negf %16 : vector<4x96xf32>
    %18 = math.exp %17 : vector<4x96xf32>
    %cst_13 = arith.constant 1.000000e+00 : f32
    %19 = vector.broadcast %cst_13 : f32 to vector<4x96xf32>
    %20 = arith.addf %19, %18 : vector<4x96xf32>
    %21 = arith.divf %19, %20 : vector<4x96xf32>
    %22 = vector.extract_strided_slice %21 {offsets = [0, 0], sizes = [4, 32], strides = [1, 1]} : vector<4x96xf32> to vector<4x32xf32>
    %23 = vector.extract_strided_slice %21 {offsets = [0, 32], sizes = [4, 32], strides = [1, 1]} : vector<4x96xf32> to vector<4x32xf32>
    %24 = vector.extract_strided_slice %21 {offsets = [0, 64], sizes = [4, 32], strides = [1, 1]} : vector<4x96xf32> to vector<4x32xf32>
    %25 = vector.extract_strided_slice %15 {offsets = [0, 96], sizes = [4, 32], strides = [1, 1]} : vector<4x128xf32> to vector<4x32xf32>
    %26 = math.tanh %25 : vector<4x32xf32>
    %27 = arith.mulf %23, %11 : vector<4x32xf32>
    %28 = arith.mulf %22, %26 : vector<4x32xf32>
    %29 = arith.addf %27, %28 : vector<4x32xf32>
    %30 = math.tanh %29 : vector<4x32xf32>
    %31 = arith.mulf %24, %30 : vector<4x32xf32>
    %32 = vector.broadcast %9 : vector<1x32xf32> to vector<4x32xf32>
    %33 = arith.mulf %31, %32 : vector<4x32xf32>
    %cst_14 = arith.constant dense<0.000000e+00> : vector<4xf32>
    %34 = vector.multi_reduction <add>, %33, %cst_14 [1] : vector<4x32xf32> to vector<4xf32>
    %35 = vector.shape_cast %34 : vector<4xf32> to vector<4x1xf32>
    %36 = vector.extract_strided_slice %7 {offsets = [0, 1, 0], sizes = [4, 1, 128], strides = [1, 1, 1]} : vector<4x8x128xf32> to vector<4x1x128xf32>
    %37 = vector.shape_cast %36 : vector<4x1x128xf32> to vector<4x128xf32>
    %cst_15 = arith.constant dense<0.000000e+00> : vector<4x128xf32>
    %38 = tpu.matmul %31, %8, %cst_15 {dimension_numbers = #tpu.dot_dimension_numbers<[1], [0], [0], [1], [0, 0, 1, 1], [], []>, precision = #tpu.contract_precision<fp32>} : vector<4x32xf32>, vector<32x128xf32>, vector<4x128xf32> -> vector<4x128xf32>
    %39 = arith.addf %37, %38 : vector<4x128xf32>
    %40 = vector.extract_strided_slice %39 {offsets = [0, 0], sizes = [4, 96], strides = [1, 1]} : vector<4x128xf32> to vector<4x96xf32>
    %41 = arith.negf %40 : vector<4x96xf32>
    %42 = math.exp %41 : vector<4x96xf32>
    %cst_16 = arith.constant 1.000000e+00 : f32
    %43 = vector.broadcast %cst_16 : f32 to vector<4x96xf32>
    %44 = arith.addf %43, %42 : vector<4x96xf32>
    %45 = arith.divf %43, %44 : vector<4x96xf32>
    %46 = vector.extract_strided_slice %45 {offsets = [0, 0], sizes = [4, 32], strides = [1, 1]} : vector<4x96xf32> to vector<4x32xf32>
    %47 = vector.extract_strided_slice %45 {offsets = [0, 32], sizes = [4, 32], strides = [1, 1]} : vector<4x96xf32> to vector<4x32xf32>
    %48 = vector.extract_strided_slice %45 {offsets = [0, 64], sizes = [4, 32], strides = [1, 1]} : vector<4x96xf32> to vector<4x32xf32>
    %49 = vector.extract_strided_slice %39 {offsets = [0, 96], sizes = [4, 32], strides = [1, 1]} : vector<4x128xf32> to vector<4x32xf32>
    %50 = math.tanh %49 : vector<4x32xf32>
    %51 = arith.mulf %47, %29 : vector<4x32xf32>
    %52 = arith.mulf %46, %50 : vector<4x32xf32>
    %53 = arith.addf %51, %52 : vector<4x32xf32>
    %54 = math.tanh %53 : vector<4x32xf32>
    %55 = arith.mulf %48, %54 : vector<4x32xf32>
    %56 = vector.broadcast %9 : vector<1x32xf32> to vector<4x32xf32>
    %57 = arith.mulf %55, %56 : vector<4x32xf32>
    %cst_17 = arith.constant dense<0.000000e+00> : vector<4xf32>
    %58 = vector.multi_reduction <add>, %57, %cst_17 [1] : vector<4x32xf32> to vector<4xf32>
    %59 = vector.shape_cast %58 : vector<4xf32> to vector<4x1xf32>
    %60 = vector.extract_strided_slice %7 {offsets = [0, 2, 0], sizes = [4, 1, 128], strides = [1, 1, 1]} : vector<4x8x128xf32> to vector<4x1x128xf32>
    %61 = vector.shape_cast %60 : vector<4x1x128xf32> to vector<4x128xf32>
    %cst_18 = arith.constant dense<0.000000e+00> : vector<4x128xf32>
    %62 = tpu.matmul %55, %8, %cst_18 {dimension_numbers = #tpu.dot_dimension_numbers<[1], [0], [0], [1], [0, 0, 1, 1], [], []>, precision = #tpu.contract_precision<fp32>} : vector<4x32xf32>, vector<32x128xf32>, vector<4x128xf32> -> vector<4x128xf32>
    %63 = arith.addf %61, %62 : vector<4x128xf32>
    %64 = vector.extract_strided_slice %63 {offsets = [0, 0], sizes = [4, 96], strides = [1, 1]} : vector<4x128xf32> to vector<4x96xf32>
    %65 = arith.negf %64 : vector<4x96xf32>
    %66 = math.exp %65 : vector<4x96xf32>
    %cst_19 = arith.constant 1.000000e+00 : f32
    %67 = vector.broadcast %cst_19 : f32 to vector<4x96xf32>
    %68 = arith.addf %67, %66 : vector<4x96xf32>
    %69 = arith.divf %67, %68 : vector<4x96xf32>
    %70 = vector.extract_strided_slice %69 {offsets = [0, 0], sizes = [4, 32], strides = [1, 1]} : vector<4x96xf32> to vector<4x32xf32>
    %71 = vector.extract_strided_slice %69 {offsets = [0, 32], sizes = [4, 32], strides = [1, 1]} : vector<4x96xf32> to vector<4x32xf32>
    %72 = vector.extract_strided_slice %69 {offsets = [0, 64], sizes = [4, 32], strides = [1, 1]} : vector<4x96xf32> to vector<4x32xf32>
    %73 = vector.extract_strided_slice %63 {offsets = [0, 96], sizes = [4, 32], strides = [1, 1]} : vector<4x128xf32> to vector<4x32xf32>
    %74 = math.tanh %73 : vector<4x32xf32>
    %75 = arith.mulf %71, %53 : vector<4x32xf32>
    %76 = arith.mulf %70, %74 : vector<4x32xf32>
    %77 = arith.addf %75, %76 : vector<4x32xf32>
    %78 = math.tanh %77 : vector<4x32xf32>
    %79 = arith.mulf %72, %78 : vector<4x32xf32>
    %80 = vector.broadcast %9 : vector<1x32xf32> to vector<4x32xf32>
    %81 = arith.mulf %79, %80 : vector<4x32xf32>
    %cst_20 = arith.constant dense<0.000000e+00> : vector<4xf32>
    %82 = vector.multi_reduction <add>, %81, %cst_20 [1] : vector<4x32xf32> to vector<4xf32>
    %83 = vector.shape_cast %82 : vector<4xf32> to vector<4x1xf32>
    %84 = vector.extract_strided_slice %7 {offsets = [0, 3, 0], sizes = [4, 1, 128], strides = [1, 1, 1]} : vector<4x8x128xf32> to vector<4x1x128xf32>
    %85 = vector.shape_cast %84 : vector<4x1x128xf32> to vector<4x128xf32>
    %cst_21 = arith.constant dense<0.000000e+00> : vector<4x128xf32>
    %86 = tpu.matmul %79, %8, %cst_21 {dimension_numbers = #tpu.dot_dimension_numbers<[1], [0], [0], [1], [0, 0, 1, 1], [], []>, precision = #tpu.contract_precision<fp32>} : vector<4x32xf32>, vector<32x128xf32>, vector<4x128xf32> -> vector<4x128xf32>
    %87 = arith.addf %85, %86 : vector<4x128xf32>
    %88 = vector.extract_strided_slice %87 {offsets = [0, 0], sizes = [4, 96], strides = [1, 1]} : vector<4x128xf32> to vector<4x96xf32>
    %89 = arith.negf %88 : vector<4x96xf32>
    %90 = math.exp %89 : vector<4x96xf32>
    %cst_22 = arith.constant 1.000000e+00 : f32
    %91 = vector.broadcast %cst_22 : f32 to vector<4x96xf32>
    %92 = arith.addf %91, %90 : vector<4x96xf32>
    %93 = arith.divf %91, %92 : vector<4x96xf32>
    %94 = vector.extract_strided_slice %93 {offsets = [0, 0], sizes = [4, 32], strides = [1, 1]} : vector<4x96xf32> to vector<4x32xf32>
    %95 = vector.extract_strided_slice %93 {offsets = [0, 32], sizes = [4, 32], strides = [1, 1]} : vector<4x96xf32> to vector<4x32xf32>
    %96 = vector.extract_strided_slice %93 {offsets = [0, 64], sizes = [4, 32], strides = [1, 1]} : vector<4x96xf32> to vector<4x32xf32>
    %97 = vector.extract_strided_slice %87 {offsets = [0, 96], sizes = [4, 32], strides = [1, 1]} : vector<4x128xf32> to vector<4x32xf32>
    %98 = math.tanh %97 : vector<4x32xf32>
    %99 = arith.mulf %95, %77 : vector<4x32xf32>
    %100 = arith.mulf %94, %98 : vector<4x32xf32>
    %101 = arith.addf %99, %100 : vector<4x32xf32>
    %102 = math.tanh %101 : vector<4x32xf32>
    %103 = arith.mulf %96, %102 : vector<4x32xf32>
    %104 = vector.broadcast %9 : vector<1x32xf32> to vector<4x32xf32>
    %105 = arith.mulf %103, %104 : vector<4x32xf32>
    %cst_23 = arith.constant dense<0.000000e+00> : vector<4xf32>
    %106 = vector.multi_reduction <add>, %105, %cst_23 [1] : vector<4x32xf32> to vector<4xf32>
    %107 = vector.shape_cast %106 : vector<4xf32> to vector<4x1xf32>
    %108 = vector.extract_strided_slice %7 {offsets = [0, 4, 0], sizes = [4, 1, 128], strides = [1, 1, 1]} : vector<4x8x128xf32> to vector<4x1x128xf32>
    %109 = vector.shape_cast %108 : vector<4x1x128xf32> to vector<4x128xf32>
    %cst_24 = arith.constant dense<0.000000e+00> : vector<4x128xf32>
    %110 = tpu.matmul %103, %8, %cst_24 {dimension_numbers = #tpu.dot_dimension_numbers<[1], [0], [0], [1], [0, 0, 1, 1], [], []>, precision = #tpu.contract_precision<fp32>} : vector<4x32xf32>, vector<32x128xf32>, vector<4x128xf32> -> vector<4x128xf32>
    %111 = arith.addf %109, %110 : vector<4x128xf32>
    %112 = vector.extract_strided_slice %111 {offsets = [0, 0], sizes = [4, 96], strides = [1, 1]} : vector<4x128xf32> to vector<4x96xf32>
    %113 = arith.negf %112 : vector<4x96xf32>
    %114 = math.exp %113 : vector<4x96xf32>
    %cst_25 = arith.constant 1.000000e+00 : f32
    %115 = vector.broadcast %cst_25 : f32 to vector<4x96xf32>
    %116 = arith.addf %115, %114 : vector<4x96xf32>
    %117 = arith.divf %115, %116 : vector<4x96xf32>
    %118 = vector.extract_strided_slice %117 {offsets = [0, 0], sizes = [4, 32], strides = [1, 1]} : vector<4x96xf32> to vector<4x32xf32>
    %119 = vector.extract_strided_slice %117 {offsets = [0, 32], sizes = [4, 32], strides = [1, 1]} : vector<4x96xf32> to vector<4x32xf32>
    %120 = vector.extract_strided_slice %117 {offsets = [0, 64], sizes = [4, 32], strides = [1, 1]} : vector<4x96xf32> to vector<4x32xf32>
    %121 = vector.extract_strided_slice %111 {offsets = [0, 96], sizes = [4, 32], strides = [1, 1]} : vector<4x128xf32> to vector<4x32xf32>
    %122 = math.tanh %121 : vector<4x32xf32>
    %123 = arith.mulf %119, %101 : vector<4x32xf32>
    %124 = arith.mulf %118, %122 : vector<4x32xf32>
    %125 = arith.addf %123, %124 : vector<4x32xf32>
    %126 = math.tanh %125 : vector<4x32xf32>
    %127 = arith.mulf %120, %126 : vector<4x32xf32>
    %128 = vector.broadcast %9 : vector<1x32xf32> to vector<4x32xf32>
    %129 = arith.mulf %127, %128 : vector<4x32xf32>
    %cst_26 = arith.constant dense<0.000000e+00> : vector<4xf32>
    %130 = vector.multi_reduction <add>, %129, %cst_26 [1] : vector<4x32xf32> to vector<4xf32>
    %131 = vector.shape_cast %130 : vector<4xf32> to vector<4x1xf32>
    %132 = vector.extract_strided_slice %7 {offsets = [0, 5, 0], sizes = [4, 1, 128], strides = [1, 1, 1]} : vector<4x8x128xf32> to vector<4x1x128xf32>
    %133 = vector.shape_cast %132 : vector<4x1x128xf32> to vector<4x128xf32>
    %cst_27 = arith.constant dense<0.000000e+00> : vector<4x128xf32>
    %134 = tpu.matmul %127, %8, %cst_27 {dimension_numbers = #tpu.dot_dimension_numbers<[1], [0], [0], [1], [0, 0, 1, 1], [], []>, precision = #tpu.contract_precision<fp32>} : vector<4x32xf32>, vector<32x128xf32>, vector<4x128xf32> -> vector<4x128xf32>
    %135 = arith.addf %133, %134 : vector<4x128xf32>
    %136 = vector.extract_strided_slice %135 {offsets = [0, 0], sizes = [4, 96], strides = [1, 1]} : vector<4x128xf32> to vector<4x96xf32>
    %137 = arith.negf %136 : vector<4x96xf32>
    %138 = math.exp %137 : vector<4x96xf32>
    %cst_28 = arith.constant 1.000000e+00 : f32
    %139 = vector.broadcast %cst_28 : f32 to vector<4x96xf32>
    %140 = arith.addf %139, %138 : vector<4x96xf32>
    %141 = arith.divf %139, %140 : vector<4x96xf32>
    %142 = vector.extract_strided_slice %141 {offsets = [0, 0], sizes = [4, 32], strides = [1, 1]} : vector<4x96xf32> to vector<4x32xf32>
    %143 = vector.extract_strided_slice %141 {offsets = [0, 32], sizes = [4, 32], strides = [1, 1]} : vector<4x96xf32> to vector<4x32xf32>
    %144 = vector.extract_strided_slice %141 {offsets = [0, 64], sizes = [4, 32], strides = [1, 1]} : vector<4x96xf32> to vector<4x32xf32>
    %145 = vector.extract_strided_slice %135 {offsets = [0, 96], sizes = [4, 32], strides = [1, 1]} : vector<4x128xf32> to vector<4x32xf32>
    %146 = math.tanh %145 : vector<4x32xf32>
    %147 = arith.mulf %143, %125 : vector<4x32xf32>
    %148 = arith.mulf %142, %146 : vector<4x32xf32>
    %149 = arith.addf %147, %148 : vector<4x32xf32>
    %150 = math.tanh %149 : vector<4x32xf32>
    %151 = arith.mulf %144, %150 : vector<4x32xf32>
    %152 = vector.broadcast %9 : vector<1x32xf32> to vector<4x32xf32>
    %153 = arith.mulf %151, %152 : vector<4x32xf32>
    %cst_29 = arith.constant dense<0.000000e+00> : vector<4xf32>
    %154 = vector.multi_reduction <add>, %153, %cst_29 [1] : vector<4x32xf32> to vector<4xf32>
    %155 = vector.shape_cast %154 : vector<4xf32> to vector<4x1xf32>
    %156 = vector.extract_strided_slice %7 {offsets = [0, 6, 0], sizes = [4, 1, 128], strides = [1, 1, 1]} : vector<4x8x128xf32> to vector<4x1x128xf32>
    %157 = vector.shape_cast %156 : vector<4x1x128xf32> to vector<4x128xf32>
    %cst_30 = arith.constant dense<0.000000e+00> : vector<4x128xf32>
    %158 = tpu.matmul %151, %8, %cst_30 {dimension_numbers = #tpu.dot_dimension_numbers<[1], [0], [0], [1], [0, 0, 1, 1], [], []>, precision = #tpu.contract_precision<fp32>} : vector<4x32xf32>, vector<32x128xf32>, vector<4x128xf32> -> vector<4x128xf32>
    %159 = arith.addf %157, %158 : vector<4x128xf32>
    %160 = vector.extract_strided_slice %159 {offsets = [0, 0], sizes = [4, 96], strides = [1, 1]} : vector<4x128xf32> to vector<4x96xf32>
    %161 = arith.negf %160 : vector<4x96xf32>
    %162 = math.exp %161 : vector<4x96xf32>
    %cst_31 = arith.constant 1.000000e+00 : f32
    %163 = vector.broadcast %cst_31 : f32 to vector<4x96xf32>
    %164 = arith.addf %163, %162 : vector<4x96xf32>
    %165 = arith.divf %163, %164 : vector<4x96xf32>
    %166 = vector.extract_strided_slice %165 {offsets = [0, 0], sizes = [4, 32], strides = [1, 1]} : vector<4x96xf32> to vector<4x32xf32>
    %167 = vector.extract_strided_slice %165 {offsets = [0, 32], sizes = [4, 32], strides = [1, 1]} : vector<4x96xf32> to vector<4x32xf32>
    %168 = vector.extract_strided_slice %165 {offsets = [0, 64], sizes = [4, 32], strides = [1, 1]} : vector<4x96xf32> to vector<4x32xf32>
    %169 = vector.extract_strided_slice %159 {offsets = [0, 96], sizes = [4, 32], strides = [1, 1]} : vector<4x128xf32> to vector<4x32xf32>
    %170 = math.tanh %169 : vector<4x32xf32>
    %171 = arith.mulf %167, %149 : vector<4x32xf32>
    %172 = arith.mulf %166, %170 : vector<4x32xf32>
    %173 = arith.addf %171, %172 : vector<4x32xf32>
    %174 = math.tanh %173 : vector<4x32xf32>
    %175 = arith.mulf %168, %174 : vector<4x32xf32>
    %176 = vector.broadcast %9 : vector<1x32xf32> to vector<4x32xf32>
    %177 = arith.mulf %175, %176 : vector<4x32xf32>
    %cst_32 = arith.constant dense<0.000000e+00> : vector<4xf32>
    %178 = vector.multi_reduction <add>, %177, %cst_32 [1] : vector<4x32xf32> to vector<4xf32>
    %179 = vector.shape_cast %178 : vector<4xf32> to vector<4x1xf32>
    %180 = vector.extract_strided_slice %7 {offsets = [0, 7, 0], sizes = [4, 1, 128], strides = [1, 1, 1]} : vector<4x8x128xf32> to vector<4x1x128xf32>
    %181 = vector.shape_cast %180 : vector<4x1x128xf32> to vector<4x128xf32>
    %cst_33 = arith.constant dense<0.000000e+00> : vector<4x128xf32>
    %182 = tpu.matmul %175, %8, %cst_33 {dimension_numbers = #tpu.dot_dimension_numbers<[1], [0], [0], [1], [0, 0, 1, 1], [], []>, precision = #tpu.contract_precision<fp32>} : vector<4x32xf32>, vector<32x128xf32>, vector<4x128xf32> -> vector<4x128xf32>
    %183 = arith.addf %181, %182 : vector<4x128xf32>
    %184 = vector.extract_strided_slice %183 {offsets = [0, 0], sizes = [4, 96], strides = [1, 1]} : vector<4x128xf32> to vector<4x96xf32>
    %185 = arith.negf %184 : vector<4x96xf32>
    %186 = math.exp %185 : vector<4x96xf32>
    %cst_34 = arith.constant 1.000000e+00 : f32
    %187 = vector.broadcast %cst_34 : f32 to vector<4x96xf32>
    %188 = arith.addf %187, %186 : vector<4x96xf32>
    %189 = arith.divf %187, %188 : vector<4x96xf32>
    %190 = vector.extract_strided_slice %189 {offsets = [0, 0], sizes = [4, 32], strides = [1, 1]} : vector<4x96xf32> to vector<4x32xf32>
    %191 = vector.extract_strided_slice %189 {offsets = [0, 32], sizes = [4, 32], strides = [1, 1]} : vector<4x96xf32> to vector<4x32xf32>
    %192 = vector.extract_strided_slice %189 {offsets = [0, 64], sizes = [4, 32], strides = [1, 1]} : vector<4x96xf32> to vector<4x32xf32>
    %193 = vector.extract_strided_slice %183 {offsets = [0, 96], sizes = [4, 32], strides = [1, 1]} : vector<4x128xf32> to vector<4x32xf32>
    %194 = math.tanh %193 : vector<4x32xf32>
    %195 = arith.mulf %191, %173 : vector<4x32xf32>
    %196 = arith.mulf %190, %194 : vector<4x32xf32>
    %197 = arith.addf %195, %196 : vector<4x32xf32>
    %198 = math.tanh %197 : vector<4x32xf32>
    %199 = arith.mulf %192, %198 : vector<4x32xf32>
    %200 = vector.broadcast %9 : vector<1x32xf32> to vector<4x32xf32>
    %201 = arith.mulf %199, %200 : vector<4x32xf32>
    %cst_35 = arith.constant dense<0.000000e+00> : vector<4xf32>
    %202 = vector.multi_reduction <add>, %201, %cst_35 [1] : vector<4x32xf32> to vector<4xf32>
    %203 = vector.shape_cast %202 : vector<4xf32> to vector<4x1xf32>
    %204 = tpu.concatenate %35, %59, %83, %107, %131, %155, %179, %203 in 1 : vector<4x1xf32>, vector<4x1xf32>, vector<4x1xf32>, vector<4x1xf32>, vector<4x1xf32>, vector<4x1xf32>, vector<4x1xf32>, vector<4x1xf32> -> vector<4x8xf32>
    %c0_36 = arith.constant 0 : index
    %c0_37 = arith.constant 0 : index
    %205 = vector.load %arg5[%c0_36, %c0_37] : memref<4x8xf32, #tpu.memory_space<vmem>>, vector<4x8xf32>
    tpu.vector_store %arg5[%c0_36, %c0_37], %204 {strides = array<i32>} : memref<4x8xf32, #tpu.memory_space<vmem>>, vector<4x8xf32>,
    return
  }
}

</mosaic_0001>

<llo_original>
// kernel: should_model_forward.1
$region0: #{should_model_forward.1}
  #allocation0 [shape = 'u32[]', space=smem, size = 0x4, offset = 0x4, fixed_abs, tag = 'smem constant byte address 0x4 - core index']
  #allocation1 [shape = 'u32[144,128]{1,0:T(1,128)}', space=vmem, size = 0x12000, scoped, tag = 'internal scratch']
  %s0 = inlined_call_operand.vmem [shape: f32[4,8,8], index: 0, kind: input, shape index: {}]
  %s1 = inlined_call_operand.vmem [shape: f32[8,128], index: 1, kind: input, shape index: {}]
  %s2 = inlined_call_operand.vmem [shape: f32[1,128], index: 2, kind: input, shape index: {}]
  %s3 = inlined_call_operand.vmem [shape: f32[32,128], index: 3, kind: input, shape index: {}]
  %s4 = inlined_call_operand.vmem [shape: f32[1,32], index: 4, kind: input, shape index: {}]
  %s5 = inlined_call_operand.hbm [shape: f32[4,8], index: 5, kind: output, shape index: {}]
  %s6 = sld [smem:[#allocation0]]
  $region30: #{should_model_forward.1} parent=0
    _
  %s8 = ssub.s32 1, %s6
  %s9 = scalar_select 0, %s8, %s6
  $region1: #{should_model_forward.1} parent=0
    #allocation2 [shape = 'u8[2048]{0}', space=vmem, size = 0x800, scoped, tag = 'output window, operand 0, single buffered']
    #allocation3 [shape = 's32[1]{0}', space=sflag, size = 0x4, scoped, tag = 'scoped memory for should_model_forward.1']
    %10 = vsyncpa [#allocation3], 0
    // Predicated region
    $region2: #{should_model_forward.1} parent=1 // pred_check
      _
    $region3: #{should_model_forward.1} parent=1 // pred_check_branch
      %12 = sbr.rel (0) target = $region5
    $region4: #{should_model_forward.1} parent=1 // pred_region
      _
    $region5: #{should_model_forward.1} parent=1 // pred_fallthru
      _
    // Predicated region
    $region6: #{should_model_forward.1} parent=1 // pred_check
      _
    $region7: #{should_model_forward.1} parent=1 // pred_check_branch
      %14 = sbr.rel (0) target = $region9
    $region8: #{should_model_forward.1} parent=1 // pred_region
      _
    $region9: #{should_model_forward.1} parent=1 // pred_fallthru
      _
    // Predicated region
    $region10: #{should_model_forward.1} parent=1 // pred_check
      _
    $region11: #{should_model_forward.1} parent=1 // pred_check_branch
      %16 = sbr.rel (0) target = $region13
    $region12: #{should_model_forward.1} parent=1 // pred_region
      _
    $region13: #{should_model_forward.1} parent=1 // pred_fallthru
      _
    // Predicated region
    $region14: #{should_model_forward.1} parent=1 // pred_check
      _
    $region15: #{should_model_forward.1} parent=1 // pred_check_branch
      %18 = sbr.rel (0) target = $region17
    $region16: #{should_model_forward.1} parent=1 // pred_region
      _
    $region17: #{should_model_forward.1} parent=1 // pred_fallthru
      _
    // Predicated region
    $region18: #{should_model_forward.1} parent=1 // pred_check
      _
    $region19: #{should_model_forward.1} parent=1 // pred_check_branch
      %20 = sbr.rel (0) target = $region21
    $region20: #{should_model_forward.1} parent=1 // pred_region
      _
    $region21: #{should_model_forward.1} parent=1 // pred_fallthru
      _
    %v21 = vld [vmem:[%s0] sm:$0xff]
    %v22 = vld [vmem:[%s0 + $0x8] sm:$0xff]
    %v23 = vld [vmem:[%s0 + $0x10] sm:$0xff]
    %v24 = vld [vmem:[%s0 + $0x18] sm:$0xff]
    %v25 = vld [vmem:[%s1] sm:$0xff]
    %v26 = vld [vmem:[%s2] sm:$0x1]
    %v28 = vlaneseq
    %v29 = vshrl.u32 %v28, 7
    %v30 = vsub.s32 0, %v29
    %v31 = vrot.slane %v26, %v30
    %vm33 = vcmask 64512
    %v35 = vsel %vm33, %v21, 0
    %v38 = vsel %vm33, %v22, 0
    %v41 = vsel %vm33, %v23, 0
    %v44 = vsel %vm33, %v24, 0
    %46 = vmatprep.subr.mxu0 0.0
    %v47 = vand.u32 %v25, 4294901760
    %48 = vmatpush1.msra.mxu0 %v47
    %49 = vmatprep.subr.mxu0 0.0
    %50 = vmatpush1.msra.mxu0 0.0
    %51 = vmatprep.subr.mxu0 0.0
    %52 = vmatpush1.msra.mxu0 0.0
    %53 = vmatprep.subr.mxu0 0.0
    %54 = vmatpush1.msra.mxu0 0.0
    %55 = vmatprep.subr.mxu0 0.0
    %56 = vmatpush1.msra.mxu0 0.0
    %57 = vmatprep.subr.mxu0 0.0
    %58 = vmatpush1.msra.mxu0 0.0
    %59 = vmatprep.subr.mxu0 0.0
    %60 = vmatpush1.msra.mxu0 0.0
    %61 = vmatprep.subr.mxu0 0.0
    %62 = vmatpush1.msra.mxu0 0.0
    %63 = vmatprep.subr.mxu0 0.0
    %64 = vmatpush1.msra.mxu0 0.0
    %65 = vmatprep.subr.mxu0 0.0
    %66 = vmatpush1.msra.mxu0 0.0
    %67 = vmatprep.subr.mxu0 0.0
    %68 = vmatpush1.msra.mxu0 0.0
    %69 = vmatprep.subr.mxu0 0.0
    %70 = vmatpush1.msra.mxu0 0.0
    %71 = vmatprep.subr.mxu0 0.0
    %72 = vmatpush1.msra.mxu0 0.0
    %73 = vmatprep.subr.mxu0 0.0
    %74 = vmatpush1.msra.mxu0 0.0
    %75 = vmatprep.subr.mxu0 0.0
    %76 = vmatpush1.msra.mxu0 0.0
    %77 = vmatprep.subr.mxu0 0.0
    %78 = vmatpush1.msra.mxu0 0.0
    %79 = vmatprep.subr.mxu0 0.0
    %80 = vmatpush1.msra.mxu0 0.0
    %81 = vmatprep.subr.mxu0 0.0
    %82 = vmatpush1.msra.mxu0 0.0
    %83 = vmatprep.subr.mxu0 0.0
    %84 = vmatpush1.msra.mxu0 0.0
    %85 = vmatprep.subr.mxu0 0.0
    %86 = vmatpush1.msra.mxu0 0.0
    %87 = vmatprep.subr.mxu0 0.0
    %88 = vmatpush1.msra.mxu0 0.0
    %89 = vmatprep.subr.mxu0 0.0
    %90 = vmatpush1.msra.mxu0 0.0
    %91 = vmatprep.subr.mxu0 0.0
    %92 = vmatpush1.msra.mxu0 0.0
    %93 = vmatprep.subr.mxu0 0.0
    %94 = vmatpush1.msra.mxu0 0.0
    %95 = vmatprep.subr.mxu0 0.0
    %96 = vmatpush1.msra.mxu0 0.0
    %97 = vmatprep.subr.mxu0 0.0
    %98 = vmatpush1.msra.mxu0 0.0
    %99 = vmatprep.subr.mxu0 0.0
    %100 = vmatpush1.msra.mxu0 0.0
    %101 = vmatprep.subr.mxu0 0.0
    %102 = vmatpush1.msra.mxu0 0.0
    %103 = vmatprep.subr.mxu0 0.0
    %104 = vmatpush1.msra.mxu0 0.0
    %105 = vmatprep.subr.mxu0 0.0
    %106 = vmatpush1.msra.mxu0 0.0
    %107 = vmatprep.subr.mxu0 0.0
    %108 = vmatpush1.msra.mxu0 0.0
    %109 = vmatprep.subr.mxu0 0.0
    %110 = vmatpush1.msra.mxu0 0.0
    %111 = vmatprep.mubr.f32.mxu0 0.0
    %v112 = vand.u32 %v35, 4294901760
    %v113 = vsub.f32 %v35, %v112
    %v114 = vand.u32 %v113, 4294901760
    %v115 = vsub.f32 %v113, %v114
    %v116 = vand.u32 %v115, 4294901760
    %117 = vmatmul.mubr.f32.gmra.mrb[0].mxu0 %v116
    %v118 = vpop.f32.mrb[0].mxu0
    %v119 = vadd.f32 %v31, %v118
    %v120 = vpop.f32.mrb[0].mxu0
    %121 = vmatprep.mubr.f32.mxu0 0.0
    %v122 = vand.u32 %v38, 4294901760
    %v123 = vsub.f32 %v38, %v122
    %v124 = vand.u32 %v123, 4294901760
    %v125 = vsub.f32 %v123, %v124
    %v126 = vand.u32 %v125, 4294901760
    %127 = vmatmul.mubr.f32.gmra.mrb[0].mxu0 %v126
    %v128 = vpop.f32.mrb[0].mxu0
    %v129 = vadd.f32 %v31, %v128
    %v130 = vpop.f32.mrb[0].mxu0
    %131 = vmatprep.mubr.f32.mxu0 0.0
    %v132 = vand.u32 %v41, 4294901760
    %v133 = vsub.f32 %v41, %v132
    %v134 = vand.u32 %v133, 4294901760
    %v135 = vsub.f32 %v133, %v134
    %v136 = vand.u32 %v135, 4294901760
    %137 = vmatmul.mubr.f32.gmra.mrb[0].mxu0 %v136
    %v138 = vpop.f32.mrb[0].mxu0
    %v139 = vadd.f32 %v31, %v138
    %v140 = vpop.f32.mrb[0].mxu0
    %141 = vmatprep.mubr.f32.mxu0 0.0
    %v142 = vand.u32 %v44, 4294901760
    %v143 = vsub.f32 %v44, %v142
    %v144 = vand.u32 %v143, 4294901760
    %v145 = vsub.f32 %v143, %v144
    %v146 = vand.u32 %v145, 4294901760
    %147 = vmatmul.mubr.f32.gmra.mrb[0].mxu0 %v146
    %v148 = vpop.f32.mrb[0].mxu0
    %v149 = vadd.f32 %v31, %v148
    %v150 = vpop.f32.mrb[0].mxu0
    %151 = vdwg.mxu0
    %152 = vmatprep.subr.mxu0 0.0
    %v153 = vand.u32 %v25, 4294901760
    %v154 = vsub.f32 %v25, %v153
    %v155 = vand.u32 %v154, 4294901760
    %v156 = vsub.f32 %v154, %v155
    %v157 = vand.u32 %v156, 4294901760
    %158 = vmatpush1.msra.mxu0 %v157
    %159 = vmatprep.subr.mxu0 0.0
    %160 = vmatpush1.msra.mxu0 0.0
    %161 = vmatprep.subr.mxu0 0.0
    %162 = vmatpush1.msra.mxu0 0.0
    %163 = vmatprep.subr.mxu0 0.0
    %164 = vmatpush1.msra.mxu0 0.0
    %165 = vmatprep.subr.mxu0 0.0
    %166 = vmatpush1.msra.mxu0 0.0
    %167 = vmatprep.subr.mxu0 0.0
    %168 = vmatpush1.msra.mxu0 0.0
    %169 = vmatprep.subr.mxu0 0.0
    %170 = vmatpush1.msra.mxu0 0.0
    %171 = vmatprep.subr.mxu0 0.0
    %172 = vmatpush1.msra.mxu0 0.0
    %173 = vmatprep.subr.mxu0 0.0
    %174 = vmatpush1.msra.mxu0 0.0
    %175 = vmatprep.subr.mxu0 0.0
    %176 = vmatpush1.msra.mxu0 0.0
    %177 = vmatprep.subr.mxu0 0.0
    %178 = vmatpush1.msra.mxu0 0.0
    %179 = vmatprep.subr.mxu0 0.0
    %180 = vmatpush1.msra.mxu0 0.0
    %181 = vmatprep.subr.mxu0 0.0
    %182 = vmatpush1.msra.mxu0 0.0
    %183 = vmatprep.subr.mxu0 0.0
    %184 = vmatpush1.msra.mxu0 0.0
    %185 = vmatprep.subr.mxu0 0.0
    %186 = vmatpush1.msra.mxu0 0.0
    %187 = vmatprep.subr.mxu0 0.0
    %188 = vmatpush1.msra.mxu0 0.0
    %189 = vmatprep.subr.mxu0 0.0
    %190 = vmatpush1.msra.mxu0 0.0
    %191 = vmatprep.subr.mxu0 0.0
    %192 = vmatpush1.msra.mxu0 0.0
    %193 = vmatprep.subr.mxu0 0.0
    %194 = vmatpush1.msra.mxu0 0.0
    %195 = vmatprep.subr.mxu0 0.0
    %196 = vmatpush1.msra.mxu0 0.0
    %197 = vmatprep.subr.mxu0 0.0
    %198 = vmatpush1.msra.mxu0 0.0
    %199 = vmatprep.subr.mxu0 0.0
    %200 = vmatpush1.msra.mxu0 0.0
    %201 = vmatprep.subr.mxu0 0.0
    %202 = vmatpush1.msra.mxu0 0.0
    %203 = vmatprep.subr.mxu0 0.0
    %204 = vmatpush1.msra.mxu0 0.0
    %205 = vmatprep.subr.mxu0 0.0
    %206 = vmatpush1.msra.mxu0 0.0
    %207 = vmatprep.subr.mxu0 0.0
    %208 = vmatpush1.msra.mxu0 0.0
    %209 = vmatprep.subr.mxu0 0.0
    %210 = vmatpush1.msra.mxu0 0.0
    %211 = vmatprep.subr.mxu0 0.0
    %212 = vmatpush1.msra.mxu0 0.0
    %213 = vmatprep.subr.mxu0 0.0
    %214 = vmatpush1.msra.mxu0 0.0
    %215 = vmatprep.subr.mxu0 0.0
    %216 = vmatpush1.msra.mxu0 0.0
    %217 = vmatprep.subr.mxu0 0.0
    %218 = vmatpush1.msra.mxu0 0.0
    %219 = vmatprep.subr.mxu0 0.0
    %220 = vmatpush1.msra.mxu0 0.0
    %221 = vmatprep.mubr.f32.mxu0 0.0
    %v222 = vand.u32 %v35, 4294901760
    %223 = vmatmul.mubr.f32.gmra.mrb[0].mxu0 %v222
    %v224 = vpop.f32.mrb[0].mxu0
    %v225 = vadd.f32 %v119, %v224
    %v226 = vpop.f32.mrb[0].mxu0
    %227 = vmatprep.mubr.f32.mxu0 0.0
    %v228 = vand.u32 %v38, 4294901760
    %229 = vmatmul.mubr.f32.gmra.mrb[0].mxu0 %v228
    %v230 = vpop.f32.mrb[0].mxu0
    %v231 = vadd.f32 %v129, %v230
    %v232 = vpop.f32.mrb[0].mxu0
    %233 = vmatprep.mubr.f32.mxu0 0.0
    %v234 = vand.u32 %v41, 4294901760
    %235 = vmatmul.mubr.f32.gmra.mrb[0].mxu0 %v234
    %v236 = vpop.f32.mrb[0].mxu0
    %v237 = vadd.f32 %v139, %v236
    %v238 = vpop.f32.mrb[0].mxu0
    %239 = vmatprep.mubr.f32.mxu0 0.0
    %v240 = vand.u32 %v44, 4294901760
    %241 = vmatmul.mubr.f32.gmra.mrb[0].mxu0 %v240
    %v242 = vpop.f32.mrb[0].mxu0
    %v243 = vadd.f32 %v149, %v242
    %v244 = vpop.f32.mrb[0].mxu0
    %245 = vdwg.mxu0
    %246 = vmatprep.subr.mxu0 0.0
    %v247 = vand.u32 %v25, 4294901760
    %v248 = vsub.f32 %v25, %v247
    %249 = vmatpush1.msra.mxu0 %v248
    %250 = vmatprep.subr.mxu0 0.0
    %251 = vmatpush1.msra.mxu0 0.0
    %252 = vmatprep.subr.mxu0 0.0
    %253 = vmatpush1.msra.mxu0 0.0
    %254 = vmatprep.subr.mxu0 0.0
    %255 = vmatpush1.msra.mxu0 0.0
    %256 = vmatprep.subr.mxu0 0.0
    %257 = vmatpush1.msra.mxu0 0.0
    %258 = vmatprep.subr.mxu0 0.0
    %259 = vmatpush1.msra.mxu0 0.0
    %260 = vmatprep.subr.mxu0 0.0
    %261 = vmatpush1.msra.mxu0 0.0
    %262 = vmatprep.subr.mxu0 0.0
    %263 = vmatpush1.msra.mxu0 0.0
    %264 = vmatprep.subr.mxu0 0.0
    %265 = vmatpush1.msra.mxu0 0.0
    %266 = vmatprep.subr.mxu0 0.0
    %267 = vmatpush1.msra.mxu0 0.0
    %268 = vmatprep.subr.mxu0 0.0
    %269 = vmatpush1.msra.mxu0 0.0
    %270 = vmatprep.subr.mxu0 0.0
    %271 = vmatpush1.msra.mxu0 0.0
    %272 = vmatprep.subr.mxu0 0.0
    %273 = vmatpush1.msra.mxu0 0.0
    %274 = vmatprep.subr.mxu0 0.0
    %275 = vmatpush1.msra.mxu0 0.0
    %276 = vmatprep.subr.mxu0 0.0
    %277 = vmatpush1.msra.mxu0 0.0
    %278 = vmatprep.subr.mxu0 0.0
    %279 = vmatpush1.msra.mxu0 0.0
    %280 = vmatprep.subr.mxu0 0.0
    %281 = vmatpush1.msra.mxu0 0.0
    %282 = vmatprep.subr.mxu0 0.0
    %283 = vmatpush1.msra.mxu0 0.0
    %284 = vmatprep.subr.mxu0 0.0
    %285 = vmatpush1.msra.mxu0 0.0
    %286 = vmatprep.subr.mxu0 0.0
    %287 = vmatpush1.msra.mxu0 0.0
    %288 = vmatprep.subr.mxu0 0.0
    %289 = vmatpush1.msra.mxu0 0.0
    %290 = vmatprep.subr.mxu0 0.0
    %291 = vmatpush1.msra.mxu0 0.0
    %292 = vmatprep.subr.mxu0 0.0
    %293 = vmatpush1.msra.mxu0 0.0
    %294 = vmatprep.subr.mxu0 0.0
    %295 = vmatpush1.msra.mxu0 0.0
    %296 = vmatprep.subr.mxu0 0.0
    %297 = vmatpush1.msra.mxu0 0.0
    %298 = vmatprep.subr.mxu0 0.0
    %299 = vmatpush1.msra.mxu0 0.0
    %300 = vmatprep.subr.mxu0 0.0
    %301 = vmatpush1.msra.mxu0 0.0
    %302 = vmatprep.subr.mxu0 0.0
    %303 = vmatpush1.msra.mxu0 0.0
    %304 = vmatprep.subr.mxu0 0.0
    %305 = vmatpush1.msra.mxu0 0.0
    %306 = vmatprep.subr.mxu0 0.0
    %307 = vmatpush1.msra.mxu0 0.0
    %308 = vmatprep.subr.mxu0 0.0
    %309 = vmatpush1.msra.mxu0 0.0
    %310 = vmatprep.subr.mxu0 0.0
    %311 = vmatpush1.msra.mxu0 0.0
    %312 = vmatprep.mubr.f32.mxu0 0.0
    %v313 = vand.u32 %v35, 4294901760
    %v314 = vsub.f32 %v35, %v313
    %315 = vmatmul.mubr.f32.gmra.mrb[0].mxu0 %v314
    %v316 = vpop.f32.mrb[0].mxu0
    %v317 = vadd.f32 %v225, %v316
    %v318 = vpop.f32.mrb[0].mxu0
    %319 = vmatprep.mubr.f32.mxu0 0.0
    %v320 = vand.u32 %v38, 4294901760
    %v321 = vsub.f32 %v38, %v320
    %322 = vmatmul.mubr.f32.gmra.mrb[0].mxu0 %v321
    %v323 = vpop.f32.mrb[0].mxu0
    %v324 = vadd.f32 %v231, %v323
    %v325 = vpop.f32.mrb[0].mxu0
    %326 = vmatprep.mubr.f32.mxu0 0.0
    %v327 = vand.u32 %v41, 4294901760
    %v328 = vsub.f32 %v41, %v327
    %329 = vmatmul.mubr.f32.gmra.mrb[0].mxu0 %v328
    %v330 = vpop.f32.mrb[0].mxu0
    %v331 = vadd.f32 %v237, %v330
    %v332 = vpop.f32.mrb[0].mxu0
    %333 = vmatprep.mubr.f32.mxu0 0.0
    %v334 = vand.u32 %v44, 4294901760
    %v335 = vsub.f32 %v44, %v334
    %336 = vmatmul.mubr.f32.gmra.mrb[0].mxu0 %v335
    %v337 = vpop.f32.mrb[0].mxu0
    %v338 = vadd.f32 %v243, %v337
    %v339 = vpop.f32.mrb[0].mxu0
    %340 = vdwg.mxu0
    %341 = vmatprep.subr.mxu0 0.0
    %v342 = vand.u32 %v25, 4294901760
    %343 = vmatpush1.msra.mxu0 %v342
    %344 = vmatprep.subr.mxu0 0.0
    %345 = vmatpush1.msra.mxu0 0.0
    %346 = vmatprep.subr.mxu0 0.0
    %347 = vmatpush1.msra.mxu0 0.0
    %348 = vmatprep.subr.mxu0 0.0
    %349 = vmatpush1.msra.mxu0 0.0
    %350 = vmatprep.subr.mxu0 0.0
    %351 = vmatpush1.msra.mxu0 0.0
    %352 = vmatprep.subr.mxu0 0.0
    %353 = vmatpush1.msra.mxu0 0.0
    %354 = vmatprep.subr.mxu0 0.0
    %355 = vmatpush1.msra.mxu0 0.0
    %356 = vmatprep.subr.mxu0 0.0
    %357 = vmatpush1.msra.mxu0 0.0
    %358 = vmatprep.subr.mxu0 0.0
    %359 = vmatpush1.msra.mxu0 0.0
    %360 = vmatprep.subr.mxu0 0.0
    %361 = vmatpush1.msra.mxu0 0.0
    %362 = vmatprep.subr.mxu0 0.0
    %363 = vmatpush1.msra.mxu0 0.0
    %364 = vmatprep.subr.mxu0 0.0
    %365 = vmatpush1.msra.mxu0 0.0
    %366 = vmatprep.subr.mxu0 0.0
    %367 = vmatpush1.msra.mxu0 0.0
    %368 = vmatprep.subr.mxu0 0.0
    %369 = vmatpush1.msra.mxu0 0.0
    %370 = vmatprep.subr.mxu0 0.0
    %371 = vmatpush1.msra.mxu0 0.0
    %372 = vmatprep.subr.mxu0 0.0
    %373 = vmatpush1.msra.mxu0 0.0
    %374 = vmatprep.subr.mxu0 0.0
    %375 = vmatpush1.msra.mxu0 0.0
    %376 = vmatprep.subr.mxu0 0.0
    %377 = vmatpush1.msra.mxu0 0.0
    %378 = vmatprep.subr.mxu0 0.0
    %379 = vmatpush1.msra.mxu0 0.0
    %380 = vmatprep.subr.mxu0 0.0
    %381 = vmatpush1.msra.mxu0 0.0
    %382 = vmatprep.subr.mxu0 0.0
    %383 = vmatpush1.msra.mxu0 0.0
    %384 = vmatprep.subr.mxu0 0.0
    %385 = vmatpush1.msra.mxu0 0.0
    %386 = vmatprep.subr.mxu0 0.0
    %387 = vmatpush1.msra.mxu0 0.0
    %388 = vmatprep.subr.mxu0 0.0
    %389 = vmatpush1.msra.mxu0 0.0
    %390 = vmatprep.subr.mxu0 0.0
    %391 = vmatpush1.msra.mxu0 0.0
    %392 = vmatprep.subr.mxu0 0.0
    %393 = vmatpush1.msra.mxu0 0.0
    %394 = vmatprep.subr.mxu0 0.0
    %395 = vmatpush1.msra.mxu0 0.0
    %396 = vmatprep.subr.mxu0 0.0
    %397 = vmatpush1.msra.mxu0 0.0
    %398 = vmatprep.subr.mxu0 0.0
    %399 = vmatpush1.msra.mxu0 0.0
    %400 = vmatprep.subr.mxu0 0.0
    %401 = vmatpush1.msra.mxu0 0.0
    %402 = vmatprep.subr.mxu0 0.0
    %403 = vmatpush1.msra.mxu0 0.0
    %404 = vmatprep.subr.mxu0 0.0
    %405 = vmatpush1.msra.mxu0 0.0
    %406 = vmatprep.mubr.f32.mxu0 0.0
    %v407 = vand.u32 %v35, 4294901760
    %v408 = vsub.f32 %v35, %v407
    %v409 = vand.u32 %v408, 4294901760
    %410 = vmatmul.mubr.f32.gmra.mrb[0].mxu0 %v409
    %v411 = vpop.f32.mrb[0].mxu0
    %v412 = vadd.f32 %v317, %v411
    %v413 = vpop.f32.mrb[0].mxu0
    %414 = vmatprep.mubr.f32.mxu0 0.0
    %v415 = vand.u32 %v38, 4294901760
    %v416 = vsub.f32 %v38, %v415
    %v417 = vand.u32 %v416, 4294901760
    %418 = vmatmul.mubr.f32.gmra.mrb[0].mxu0 %v417
    %v419 = vpop.f32.mrb[0].mxu0
    %v420 = vadd.f32 %v324, %v419
    %v421 = vpop.f32.mrb[0].mxu0
    %422 = vmatprep.mubr.f32.mxu0 0.0
    %v423 = vand.u32 %v41, 4294901760
    %v424 = vsub.f32 %v41, %v423
    %v425 = vand.u32 %v424, 4294901760
    %426 = vmatmul.mubr.f32.gmra.mrb[0].mxu0 %v425
    %v427 = vpop.f32.mrb[0].mxu0
    %v428 = vadd.f32 %v331, %v427
    %v429 = vpop.f32.mrb[0].mxu0
    %430 = vmatprep.mubr.f32.mxu0 0.0
    %v431 = vand.u32 %v44, 4294901760
    %v432 = vsub.f32 %v44, %v431
    %v433 = vand.u32 %v432, 4294901760
    %434 = vmatmul.mubr.f32.gmra.mrb[0].mxu0 %v433
    %v435 = vpop.f32.mrb[0].mxu0
    %v436 = vadd.f32 %v338, %v435
    %v437 = vpop.f32.mrb[0].mxu0
    %438 = vdwg.mxu0
    %439 = vmatprep.subr.mxu0 0.0
    %v440 = vand.u32 %v25, 4294901760
    %v441 = vsub.f32 %v25, %v440
    %v442 = vand.u32 %v441, 4294901760
    %443 = vmatpush1.msra.mxu0 %v442
    %444 = vmatprep.subr.mxu0 0.0
    %445 = vmatpush1.msra.mxu0 0.0
    %446 = vmatprep.subr.mxu0 0.0
    %447 = vmatpush1.msra.mxu0 0.0
    %448 = vmatprep.subr.mxu0 0.0
    %449 = vmatpush1.msra.mxu0 0.0
    %450 = vmatprep.subr.mxu0 0.0
    %451 = vmatpush1.msra.mxu0 0.0
    %452 = vmatprep.subr.mxu0 0.0
    %453 = vmatpush1.msra.mxu0 0.0
    %454 = vmatprep.subr.mxu0 0.0
    %455 = vmatpush1.msra.mxu0 0.0
    %456 = vmatprep.subr.mxu0 0.0
    %457 = vmatpush1.msra.mxu0 0.0
    %458 = vmatprep.subr.mxu0 0.0
    %459 = vmatpush1.msra.mxu0 0.0
    %460 = vmatprep.subr.mxu0 0.0
    %461 = vmatpush1.msra.mxu0 0.0
    %462 = vmatprep.subr.mxu0 0.0
    %463 = vmatpush1.msra.mxu0 0.0
    %464 = vmatprep.subr.mxu0 0.0
    %465 = vmatpush1.msra.mxu0 0.0
    %466 = vmatprep.subr.mxu0 0.0
    %467 = vmatpush1.msra.mxu0 0.0
    %468 = vmatprep.subr.mxu0 0.0
    %469 = vmatpush1.msra.mxu0 0.0
    %470 = vmatprep.subr.mxu0 0.0
    %471 = vmatpush1.msra.mxu0 0.0
    %472 = vmatprep.subr.mxu0 0.0
    %473 = vmatpush1.msra.mxu0 0.0
    %474 = vmatprep.subr.mxu0 0.0
    %475 = vmatpush1.msra.mxu0 0.0
    %476 = vmatprep.subr.mxu0 0.0
    %477 = vmatpush1.msra.mxu0 0.0
    %478 = vmatprep.subr.mxu0 0.0
    %479 = vmatpush1.msra.mxu0 0.0
    %480 = vmatprep.subr.mxu0 0.0
    %481 = vmatpush1.msra.mxu0 0.0
    %482 = vmatprep.subr.mxu0 0.0
    %483 = vmatpush1.msra.mxu0 0.0
    %484 = vmatprep.subr.mxu0 0.0
    %485 = vmatpush1.msra.mxu0 0.0
    %486 = vmatprep.subr.mxu0 0.0
    %487 = vmatpush1.msra.mxu0 0.0
    %488 = vmatprep.subr.mxu0 0.0
    %489 = vmatpush1.msra.mxu0 0.0
    %490 = vmatprep.subr.mxu0 0.0
    %491 = vmatpush1.msra.mxu0 0.0
    %492 = vmatprep.subr.mxu0 0.0
    %493 = vmatpush1.msra.mxu0 0.0
    %494 = vmatprep.subr.mxu0 0.0
    %495 = vmatpush1.msra.mxu0 0.0
    %496 = vmatprep.subr.mxu0 0.0
    %497 = vmatpush1.msra.mxu0 0.0
    %498 = vmatprep.subr.mxu0 0.0
    %499 = vmatpush1.msra.mxu0 0.0
    %500 = vmatprep.subr.mxu0 0.0
    %501 = vmatpush1.msra.mxu0 0.0
    %502 = vmatprep.subr.mxu0 0.0
    %503 = vmatpush1.msra.mxu0 0.0
    %504 = vmatprep.subr.mxu0 0.0
    %505 = vmatpush1.msra.mxu0 0.0
    %506 = vmatprep.mubr.f32.mxu0 0.0
    %v507 = vand.u32 %v35, 4294901760
    %508 = vmatmul.mubr.f32.gmra.mrb[0].mxu0 %v507
    %v509 = vpop.f32.mrb[0].mxu0
    %v510 = vadd.f32 %v412, %v509
    %v511 = vpop.f32.mrb[0].mxu0
    %512 = vmatprep.mubr.f32.mxu0 0.0
    %v513 = vand.u32 %v38, 4294901760
    %514 = vmatmul.mubr.f32.gmra.mrb[0].mxu0 %v513
    %v515 = vpop.f32.mrb[0].mxu0
    %v516 = vadd.f32 %v420, %v515
    %v517 = vpop.f32.mrb[0].mxu0
    %518 = vmatprep.mubr.f32.mxu0 0.0
    %v519 = vand.u32 %v41, 4294901760
    %520 = vmatmul.mubr.f32.gmra.mrb[0].mxu0 %v519
    %v521 = vpop.f32.mrb[0].mxu0
    %v522 = vadd.f32 %v428, %v521
    %v523 = vpop.f32.mrb[0].mxu0
    %524 = vmatprep.mubr.f32.mxu0 0.0
    %v525 = vand.u32 %v44, 4294901760
    %526 = vmatmul.mubr.f32.gmra.mrb[0].mxu0 %v525
    %v527 = vpop.f32.mrb[0].mxu0
    %v528 = vadd.f32 %v436, %v527
    %v529 = vpop.f32.mrb[0].mxu0
    %530 = vdwg.mxu0
    %531 = vmatprep.subr.mxu0 0.0
    %v532 = vand.u32 %v25, 4294901760
    %533 = vmatpush1.msra.mxu0 %v532
    %534 = vmatprep.subr.mxu0 0.0
    %535 = vmatpush1.msra.mxu0 0.0
    %536 = vmatprep.subr.mxu0 0.0
    %537 = vmatpush1.msra.mxu0 0.0
    %538 = vmatprep.subr.mxu0 0.0
    %539 = vmatpush1.msra.mxu0 0.0
    %540 = vmatprep.subr.mxu0 0.0
    %541 = vmatpush1.msra.mxu0 0.0
    %542 = vmatprep.subr.mxu0 0.0
    %543 = vmatpush1.msra.mxu0 0.0
    %544 = vmatprep.subr.mxu0 0.0
    %545 = vmatpush1.msra.mxu0 0.0
    %546 = vmatprep.subr.mxu0 0.0
    %547 = vmatpush1.msra.mxu0 0.0
    %548 = vmatprep.subr.mxu0 0.0
    %549 = vmatpush1.msra.mxu0 0.0
    %550 = vmatprep.subr.mxu0 0.0
    %551 = vmatpush1.msra.mxu0 0.0
    %552 = vmatprep.subr.mxu0 0.0
    %553 = vmatpush1.msra.mxu0 0.0
    %554 = vmatprep.subr.mxu0 0.0
    %555 = vmatpush1.msra.mxu0 0.0
    %556 = vmatprep.subr.mxu0 0.0
    %557 = vmatpush1.msra.mxu0 0.0
    %558 = vmatprep.subr.mxu0 0.0
    %559 = vmatpush1.msra.mxu0 0.0
    %560 = vmatprep.subr.mxu0 0.0
    %561 = vmatpush1.msra.mxu0 0.0
    %562 = vmatprep.subr.mxu0 0.0
    %563 = vmatpush1.msra.mxu0 0.0
    %564 = vmatprep.subr.mxu0 0.0
    %565 = vmatpush1.msra.mxu0 0.0
    %566 = vmatprep.subr.mxu0 0.0
    %567 = vmatpush1.msra.mxu0 0.0
    %568 = vmatprep.subr.mxu0 0.0
    %569 = vmatpush1.msra.mxu0 0.0
    %570 = vmatprep.subr.mxu0 0.0
    %571 = vmatpush1.msra.mxu0 0.0
    %572 = vmatprep.subr.mxu0 0.0
    %573 = vmatpush1.msra.mxu0 0.0
    %574 = vmatprep.subr.mxu0 0.0
    %575 = vmatpush1.msra.mxu0 0.0
    %576 = vmatprep.subr.mxu0 0.0
    %577 = vmatpush1.msra.mxu0 0.0
    %578 = vmatprep.subr.mxu0 0.0
    %579 = vmatpush1.msra.mxu0 0.0
    %580 = vmatprep.subr.mxu0 0.0
    %581 = vmatpush1.msra.mxu0 0.0
    %582 = vmatprep.subr.mxu0 0.0
    %583 = vmatpush1.msra.mxu0 0.0
    %584 = vmatprep.subr.mxu0 0.0
    %585 = vmatpush1.msra.mxu0 0.0
    %586 = vmatprep.subr.mxu0 0.0
    %587 = vmatpush1.msra.mxu0 0.0
    %588 = vmatprep.subr.mxu0 0.0
    %589 = vmatpush1.msra.mxu0 0.0
    %590 = vmatprep.subr.mxu0 0.0
    %591 = vmatpush1.msra.mxu0 0.0
    %592 = vmatprep.subr.mxu0 0.0
    %593 = vmatpush1.msra.mxu0 0.0
    %594 = vmatprep.subr.mxu0 0.0
    %595 = vmatpush1.msra.mxu0 0.0
    %596 = vmatprep.mubr.f32.mxu0 0.0
    %v597 = vand.u32 %v35, 4294901760
    %598 = vmatmul.mubr.f32.gmra.mrb[0].mxu0 %v597
    %v599 = vpop.f32.mrb[0].mxu0
    %v600 = vadd.f32 %v510, %v599
    %v601 = vpop.f32.mrb[0].mxu0
    %602 = vmatprep.mubr.f32.mxu0 0.0
    %v603 = vand.u32 %v38, 4294901760
    %604 = vmatmul.mubr.f32.gmra.mrb[0].mxu0 %v603
    %v605 = vpop.f32.mrb[0].mxu0
    %v606 = vadd.f32 %v516, %v605
    %v607 = vpop.f32.mrb[0].mxu0
    %608 = vmatprep.mubr.f32.mxu0 0.0
    %v609 = vand.u32 %v41, 4294901760
    %610 = vmatmul.mubr.f32.gmra.mrb[0].mxu0 %v609
    %v611 = vpop.f32.mrb[0].mxu0
    %v612 = vadd.f32 %v522, %v611
    %v613 = vpop.f32.mrb[0].mxu0
    %614 = vmatprep.mubr.f32.mxu0 0.0
    %v615 = vand.u32 %v44, 4294901760
    %616 = vmatmul.mubr.f32.gmra.mrb[0].mxu0 %v615
    %v617 = vpop.f32.mrb[0].mxu0
    %v618 = vadd.f32 %v528, %v617
    %v619 = vpop.f32.mrb[0].mxu0
    %620 = vdwg.mxu0
    %v621 = vld [vmem:[%s3] sm:$0xff]
    %v622 = vld [vmem:[%s3 + $0x8] sm:$0xff]
    %v623 = vld [vmem:[%s3 + $0x10] sm:$0xff]
    %v624 = vld [vmem:[%s3 + $0x18] sm:$0xff]
    %v625 = vld [vmem:[%s4] sm:$0x1]
    %vm626 = vcmask 261120
    %v628 = vsel %vm626, 0.0, 0
    %630 = vmatprep.subr.mxu0 0.0
    %v631 = vand.u32 %v621, 4294901760
    %632 = vmatpush1.msra.mxu0 %v631
    %633 = vmatprep.subr.mxu0 0.0
    %v634 = vand.u32 %v622, 4294901760
    %635 = vmatpush1.msra.mxu0 %v634
    %636 = vmatprep.subr.mxu0 0.0
    %v637 = vand.u32 %v623, 4294901760
    %638 = vmatpush1.msra.mxu0 %v637
    %639 = vmatprep.subr.mxu0 0.0
    %v640 = vand.u32 %v624, 4294901760
    %641 = vmatpush1.msra.mxu0 %v640
    %642 = vmatprep.subr.mxu0 0.0
    %643 = vmatpush1.msra.mxu0 0.0
    %644 = vmatprep.subr.mxu0 0.0
    %645 = vmatpush1.msra.mxu0 0.0
    %646 = vmatprep.subr.mxu0 0.0
    %647 = vmatpush1.msra.mxu0 0.0
    %648 = vmatprep.subr.mxu0 0.0
    %649 = vmatpush1.msra.mxu0 0.0
    %650 = vmatprep.subr.mxu0 0.0
    %651 = vmatpush1.msra.mxu0 0.0
    %652 = vmatprep.subr.mxu0 0.0
    %653 = vmatpush1.msra.mxu0 0.0
    %654 = vmatprep.subr.mxu0 0.0
    %655 = vmatpush1.msra.mxu0 0.0
    %656 = vmatprep.subr.mxu0 0.0
    %657 = vmatpush1.msra.mxu0 0.0
    %658 = vmatprep.subr.mxu0 0.0
    %659 = vmatpush1.msra.mxu0 0.0
    %660 = vmatprep.subr.mxu0 0.0
    %661 = vmatpush1.msra.mxu0 0.0
    %662 = vmatprep.subr.mxu0 0.0
    %663 = vmatpush1.msra.mxu0 0.0
    %664 = vmatprep.subr.mxu0 0.0
    %665 = vmatpush1.msra.mxu0 0.0
    %666 = vmatprep.subr.mxu0 0.0
    %667 = vmatpush1.msra.mxu0 0.0
    %668 = vmatprep.subr.mxu0 0.0
    %669 = vmatpush1.msra.mxu0 0.0
    %670 = vmatprep.subr.mxu0 0.0
    %671 = vmatpush1.msra.mxu0 0.0
    %672 = vmatprep.subr.mxu0 0.0
    %673 = vmatpush1.msra.mxu0 0.0
    %674 = vmatprep.subr.mxu0 0.0
    %675 = vmatpush1.msra.mxu0 0.0
    %676 = vmatprep.subr.mxu0 0.0
    %677 = vmatpush1.msra.mxu0 0.0
    %678 = vmatprep.subr.mxu0 0.0
    %679 = vmatpush1.msra.mxu0 0.0
    %680 = vmatprep.subr.mxu0 0.0
    %681 = vmatpush1.msra.mxu0 0.0
    %682 = vmatprep.subr.mxu0 0.0
    %683 = vmatpush1.msra.mxu0 0.0
    %684 = vmatprep.subr.mxu0 0.0
    %685 = vmatpush1.msra.mxu0 0.0
    %686 = vmatprep.subr.mxu0 0.0
    %687 = vmatpush1.msra.mxu0 0.0
    %688 = vmatprep.subr.mxu0 0.0
    %689 = vmatpush1.msra.mxu0 0.0
    %690 = vmatprep.subr.mxu0 0.0
    %691 = vmatpush1.msra.mxu0 0.0
    %692 = vmatprep.subr.mxu0 0.0
    %693 = vmatpush1.msra.mxu0 0.0
    %694 = vmatprep.subr.mxu0 0.0
    %695 = vmatpush1.msra.mxu0 0.0
    %696 = vmatprep.subr.mxu0 0.0
    %697 = vmatpush1.msra.mxu0 0.0
    %698 = vmatprep.mubr.f32.mxu0 0.0
    %v699 = vand.u32 %v628, 4294901760
    %v700 = vsub.f32 %v628, %v699
    %v701 = vand.u32 %v700, 4294901760
    %v702 = vsub.f32 %v700, %v701
    %v703 = vand.u32 %v702, 4294901760
    %704 = vmatmul.mubr.f32.gmra.mrb[0].mxu0 %v703
    %v705 = vpop.f32.mrb[0].mxu0
    %v706 = vadd.f32 0.0, %v705
    %v707 = vpop.f32.mrb[0].mxu0
    %708 = vdwg.mxu0
    %709 = vmatprep.subr.mxu0 0.0
    %v710 = vand.u32 %v621, 4294901760
    %v711 = vsub.f32 %v621, %v710
    %v712 = vand.u32 %v711, 4294901760
    %v713 = vsub.f32 %v711, %v712
    %v714 = vand.u32 %v713, 4294901760
    %715 = vmatpush1.msra.mxu0 %v714
    %716 = vmatprep.subr.mxu0 0.0
    %v717 = vand.u32 %v622, 4294901760
    %v718 = vsub.f32 %v622, %v717
    %v719 = vand.u32 %v718, 4294901760
    %v720 = vsub.f32 %v718, %v719
    %v721 = vand.u32 %v720, 4294901760
    %722 = vmatpush1.msra.mxu0 %v721
    %723 = vmatprep.subr.mxu0 0.0
    %v724 = vand.u32 %v623, 4294901760
    %v725 = vsub.f32 %v623, %v724
    %v726 = vand.u32 %v725, 4294901760
    %v727 = vsub.f32 %v725, %v726
    %v728 = vand.u32 %v727, 4294901760
    %729 = vmatpush1.msra.mxu0 %v728
    %730 = vmatprep.subr.mxu0 0.0
    %v731 = vand.u32 %v624, 4294901760
    %v732 = vsub.f32 %v624, %v731
    %v733 = vand.u32 %v732, 4294901760
    %v734 = vsub.f32 %v732, %v733
    %v735 = vand.u32 %v734, 4294901760
    %736 = vmatpush1.msra.mxu0 %v735
    %737 = vmatprep.subr.mxu0 0.0
    %738 = vmatpush1.msra.mxu0 0.0
    %739 = vmatprep.subr.mxu0 0.0
    %740 = vmatpush1.msra.mxu0 0.0
    %741 = vmatprep.subr.mxu0 0.0
    %742 = vmatpush1.msra.mxu0 0.0
    %743 = vmatprep.subr.mxu0 0.0
    %744 = vmatpush1.msra.mxu0 0.0
    %745 = vmatprep.subr.mxu0 0.0
    %746 = vmatpush1.msra.mxu0 0.0
    %747 = vmatprep.subr.mxu0 0.0
    %748 = vmatpush1.msra.mxu0 0.0
    %749 = vmatprep.subr.mxu0 0.0
    %750 = vmatpush1.msra.mxu0 0.0
    %751 = vmatprep.subr.mxu0 0.0
    %752 = vmatpush1.msra.mxu0 0.0
    %753 = vmatprep.subr.mxu0 0.0
    %754 = vmatpush1.msra.mxu0 0.0
    %755 = vmatprep.subr.mxu0 0.0
    %756 = vmatpush1.msra.mxu0 0.0
    %757 = vmatprep.subr.mxu0 0.0
    %758 = vmatpush1.msra.mxu0 0.0
    %759 = vmatprep.subr.mxu0 0.0
    %760 = vmatpush1.msra.mxu0 0.0
    %761 = vmatprep.subr.mxu0 0.0
    %762 = vmatpush1.msra.mxu0 0.0
    %763 = vmatprep.subr.mxu0 0.0
    %764 = vmatpush1.msra.mxu0 0.0
    %765 = vmatprep.subr.mxu0 0.0
    %766 = vmatpush1.msra.mxu0 0.0
    %767 = vmatprep.subr.mxu0 0.0
    %768 = vmatpush1.msra.mxu0 0.0
    %769 = vmatprep.subr.mxu0 0.0
    %770 = vmatpush1.msra.mxu0 0.0
    %771 = vmatprep.subr.mxu0 0.0
    %772 = vmatpush1.msra.mxu0 0.0
    %773 = vmatprep.subr.mxu0 0.0
    %774 = vmatpush1.msra.mxu0 0.0
    %775 = vmatprep.subr.mxu0 0.0
    %776 = vmatpush1.msra.mxu0 0.0
    %777 = vmatprep.subr.mxu0 0.0
    %778 = vmatpush1.msra.mxu0 0.0
    %779 = vmatprep.subr.mxu0 0.0
    %780 = vmatpush1.msra.mxu0 0.0
    %781 = vmatprep.subr.mxu0 0.0
    %782 = vmatpush1.msra.mxu0 0.0
    %783 = vmatprep.subr.mxu0 0.0
    %784 = vmatpush1.msra.mxu0 0.0
    %785 = vmatprep.subr.mxu0 0.0
    %786 = vmatpush1.msra.mxu0 0.0
    %787 = vmatprep.subr.mxu0 0.0
    %788 = vmatpush1.msra.mxu0 0.0
    %789 = vmatprep.subr.mxu0 0.0
    %790 = vmatpush1.msra.mxu0 0.0
    %791 = vmatprep.subr.mxu0 0.0
    %792 = vmatpush1.msra.mxu0 0.0
    %793 = vmatprep.mubr.f32.mxu0 0.0
    %v794 = vand.u32 %v628, 4294901760
    %795 = vmatmul.mubr.f32.gmra.mrb[0].mxu0 %v794
    %v796 = vpop.f32.mrb[0].mxu0
    %v797 = vadd.f32 %v706, %v796
    %v798 = vpop.f32.mrb[0].mxu0
    %799 = vdwg.mxu0
    %800 = vmatprep.subr.mxu0 0.0
    %v801 = vand.u32 %v621, 4294901760
    %v802 = vsub.f32 %v621, %v801
    %803 = vmatpush1.msra.mxu0 %v802
    %804 = vmatprep.subr.mxu0 0.0
    %v805 = vand.u32 %v622, 4294901760
    %v806 = vsub.f32 %v622, %v805
    %807 = vmatpush1.msra.mxu0 %v806
    %808 = vmatprep.subr.mxu0 0.0
    %v809 = vand.u32 %v623, 4294901760
    %v810 = vsub.f32 %v623, %v809
    %811 = vmatpush1.msra.mxu0 %v810
    %812 = vmatprep.subr.mxu0 0.0
    %v813 = vand.u32 %v624, 4294901760
    %v814 = vsub.f32 %v624, %v813
    %815 = vmatpush1.msra.mxu0 %v814
    %816 = vmatprep.subr.mxu0 0.0
    %817 = vmatpush1.msra.mxu0 0.0
    %818 = vmatprep.subr.mxu0 0.0
    %819 = vmatpush1.msra.mxu0 0.0
    %820 = vmatprep.subr.mxu0 0.0
    %821 = vmatpush1.msra.mxu0 0.0
    %822 = vmatprep.subr.mxu0 0.0
    %823 = vmatpush1.msra.mxu0 0.0
    %824 = vmatprep.subr.mxu0 0.0
    %825 = vmatpush1.msra.mxu0 0.0
    %826 = vmatprep.subr.mxu0 0.0
    %827 = vmatpush1.msra.mxu0 0.0
    %828 = vmatprep.subr.mxu0 0.0
    %829 = vmatpush1.msra.mxu0 0.0
    %830 = vmatprep.subr.mxu0 0.0
    %831 = vmatpush1.msra.mxu0 0.0
    %832 = vmatprep.subr.mxu0 0.0
    %833 = vmatpush1.msra.mxu0 0.0
    %834 = vmatprep.subr.mxu0 0.0
    %835 = vmatpush1.msra.mxu0 0.0
    %836 = vmatprep.subr.mxu0 0.0
    %837 = vmatpush1.msra.mxu0 0.0
    %838 = vmatprep.subr.mxu0 0.0
    %839 = vmatpush1.msra.mxu0 0.0
    %840 = vmatprep.subr.mxu0 0.0
    %841 = vmatpush1.msra.mxu0 0.0
    %842 = vmatprep.subr.mxu0 0.0
    %843 = vmatpush1.msra.mxu0 0.0
    %844 = vmatprep.subr.mxu0 0.0
    %845 = vmatpush1.msra.mxu0 0.0
    %846 = vmatprep.subr.mxu0 0.0
    %847 = vmatpush1.msra.mxu0 0.0
    %848 = vmatprep.subr.mxu0 0.0
    %849 = vmatpush1.msra.mxu0 0.0
    %850 = vmatprep.subr.mxu0 0.0
    %851 = vmatpush1.msra.mxu0 0.0
    %852 = vmatprep.subr.mxu0 0.0
    %853 = vmatpush1.msra.mxu0 0.0
    %854 = vmatprep.subr.mxu0 0.0
    %855 = vmatpush1.msra.mxu0 0.0
    %856 = vmatprep.subr.mxu0 0.0
    %857 = vmatpush1.msra.mxu0 0.0
    %858 = vmatprep.subr.mxu0 0.0
    %859 = vmatpush1.msra.mxu0 0.0
    %860 = vmatprep.subr.mxu0 0.0
    %861 = vmatpush1.msra.mxu0 0.0
    %862 = vmatprep.subr.mxu0 0.0
    %863 = vmatpush1.msra.mxu0 0.0
    %864 = vmatprep.subr.mxu0 0.0
    %865 = vmatpush1.msra.mxu0 0.0
    %866 = vmatprep.subr.mxu0 0.0
    %867 = vmatpush1.msra.mxu0 0.0
    %868 = vmatprep.subr.mxu0 0.0
    %869 = vmatpush1.msra.mxu0 0.0
    %870 = vmatprep.subr.mxu0 0.0
    %871 = vmatpush1.msra.mxu0 0.0
    %872 = vmatprep.mubr.f32.mxu0 0.0
    %v873 = vand.u32 %v628, 4294901760
    %v874 = vsub.f32 %v628, %v873
    %875 = vmatmul.mubr.f32.gmra.mrb[0].mxu0 %v874
    %v876 = vpop.f32.mrb[0].mxu0
    %v877 = vadd.f32 %v797, %v876
    %v878 = vpop.f32.mrb[0].mxu0
    %879 = vdwg.mxu0
    %880 = vmatprep.subr.mxu0 0.0
    %v881 = vand.u32 %v621, 4294901760
    %882 = vmatpush1.msra.mxu0 %v881
    %883 = vmatprep.subr.mxu0 0.0
    %v884 = vand.u32 %v622, 4294901760
    %885 = vmatpush1.msra.mxu0 %v884
    %886 = vmatprep.subr.mxu0 0.0
    %v887 = vand.u32 %v623, 4294901760
    %888 = vmatpush1.msra.mxu0 %v887
    %889 = vmatprep.subr.mxu0 0.0
    %v890 = vand.u32 %v624, 4294901760
    %891 = vmatpush1.msra.mxu0 %v890
    %892 = vmatprep.subr.mxu0 0.0
    %893 = vmatpush1.msra.mxu0 0.0
    %894 = vmatprep.subr.mxu0 0.0
    %895 = vmatpush1.msra.mxu0 0.0
    %896 = vmatprep.subr.mxu0 0.0
    %897 = vmatpush1.msra.mxu0 0.0
    %898 = vmatprep.subr.mxu0 0.0
    %899 = vmatpush1.msra.mxu0 0.0
    %900 = vmatprep.subr.mxu0 0.0
    %901 = vmatpush1.msra.mxu0 0.0
    %902 = vmatprep.subr.mxu0 0.0
    %903 = vmatpush1.msra.mxu0 0.0
    %904 = vmatprep.subr.mxu0 0.0
    %905 = vmatpush1.msra.mxu0 0.0
    %906 = vmatprep.subr.mxu0 0.0
    %907 = vmatpush1.msra.mxu0 0.0
    %908 = vmatprep.subr.mxu0 0.0
    %909 = vmatpush1.msra.mxu0 0.0
    %910 = vmatprep.subr.mxu0 0.0
    %911 = vmatpush1.msra.mxu0 0.0
    %912 = vmatprep.subr.mxu0 0.0
    %913 = vmatpush1.msra.mxu0 0.0
    %914 = vmatprep.subr.mxu0 0.0
    %915 = vmatpush1.msra.mxu0 0.0
    %916 = vmatprep.subr.mxu0 0.0
    %917 = vmatpush1.msra.mxu0 0.0
    %918 = vmatprep.subr.mxu0 0.0
    %919 = vmatpush1.msra.mxu0 0.0
    %920 = vmatprep.subr.mxu0 0.0
    %921 = vmatpush1.msra.mxu0 0.0
    %922 = vmatprep.subr.mxu0 0.0
    %923 = vmatpush1.msra.mxu0 0.0
    %924 = vmatprep.subr.mxu0 0.0
    %925 = vmatpush1.msra.mxu0 0.0
    %926 = vmatprep.subr.mxu0 0.0
    %927 = vmatpush1.msra.mxu0 0.0
    %928 = vmatprep.subr.mxu0 0.0
    %929 = vmatpush1.msra.mxu0 0.0
    %930 = vmatprep.subr.mxu0 0.0
    %931 = vmatpush1.msra.mxu0 0.0
    %932 = vmatprep.subr.mxu0 0.0
    %933 = vmatpush1.msra.mxu0 0.0
    %934 = vmatprep.subr.mxu0 0.0
    %935 = vmatpush1.msra.mxu0 0.0
    %936 = vmatprep.subr.mxu0 0.0
    %937 = vmatpush1.msra.mxu0 0.0
    %938 = vmatprep.subr.mxu0 0.0
    %939 = vmatpush1.msra.mxu0 0.0
    %940 = vmatprep.subr.mxu0 0.0
    %941 = vmatpush1.msra.mxu0 0.0
    %942 = vmatprep.subr.mxu0 0.0
    %943 = vmatpush1.msra.mxu0 0.0
    %944 = vmatprep.subr.mxu0 0.0
    %945 = vmatpush1.msra.mxu0 0.0
    %946 = vmatprep.subr.mxu0 0.0
    %947 = vmatpush1.msra.mxu0 0.0
    %948 = vmatprep.mubr.f32.mxu0 0.0
    %v949 = vand.u32 %v628, 4294901760
    %v950 = vsub.f32 %v628, %v949
    %v951 = vand.u32 %v950, 4294901760
    %952 = vmatmul.mubr.f32.gmra.mrb[0].mxu0 %v951
    %v953 = vpop.f32.mrb[0].mxu0
    %v954 = vadd.f32 %v877, %v953
    %v955 = vpop.f32.mrb[0].mxu0
    %956 = vdwg.mxu0
    %957 = vmatprep.subr.mxu0 0.0
    %v958 = vand.u32 %v621, 4294901760
    %v959 = vsub.f32 %v621, %v958
    %v960 = vand.u32 %v959, 4294901760
    %961 = vmatpush1.msra.mxu0 %v960
    %962 = vmatprep.subr.mxu0 0.0
    %v963 = vand.u32 %v622, 4294901760
    %v964 = vsub.f32 %v622, %v963
    %v965 = vand.u32 %v964, 4294901760
    %966 = vmatpush1.msra.mxu0 %v965
    %967 = vmatprep.subr.mxu0 0.0
    %v968 = vand.u32 %v623, 4294901760
    %v969 = vsub.f32 %v623, %v968
    %v970 = vand.u32 %v969, 4294901760
    %971 = vmatpush1.msra.mxu0 %v970
    %972 = vmatprep.subr.mxu0 0.0
    %v973 = vand.u32 %v624, 4294901760
    %v974 = vsub.f32 %v624, %v973
    %v975 = vand.u32 %v974, 4294901760
    %976 = vmatpush1.msra.mxu0 %v975
    %977 = vmatprep.subr.mxu0 0.0
    %978 = vmatpush1.msra.mxu0 0.0
    %979 = vmatprep.subr.mxu0 0.0
    %980 = vmatpush1.msra.mxu0 0.0
    %981 = vmatprep.subr.mxu0 0.0
    %982 = vmatpush1.msra.mxu0 0.0
    %983 = vmatprep.subr.mxu0 0.0
    %984 = vmatpush1.msra.mxu0 0.0
    %985 = vmatprep.subr.mxu0 0.0
    %986 = vmatpush1.msra.mxu0 0.0
    %987 = vmatprep.subr.mxu0 0.0
    %988 = vmatpush1.msra.mxu0 0.0
    %989 = vmatprep.subr.mxu0 0.0
    %990 = vmatpush1.msra.mxu0 0.0
    %991 = vmatprep.subr.mxu0 0.0
    %992 = vmatpush1.msra.mxu0 0.0
    %993 = vmatprep.subr.mxu0 0.0
    %994 = vmatpush1.msra.mxu0 0.0
    %995 = vmatprep.subr.mxu0 0.0
    %996 = vmatpush1.msra.mxu0 0.0
    %997 = vmatprep.subr.mxu0 0.0
    %998 = vmatpush1.msra.mxu0 0.0
    %999 = vmatprep.subr.mxu0 0.0
    %1000 = vmatpush1.msra.mxu0 0.0
    %1001 = vmatprep.subr.mxu0 0.0
    %1002 = vmatpush1.msra.mxu0 0.0
    %1003 = vmatprep.subr.mxu0 0.0
    %1004 = vmatpush1.msra.mxu0 0.0
    %1005 = vmatprep.subr.mxu0 0.0
    %1006 = vmatpush1.msra.mxu0 0.0
    %1007 = vmatprep.subr.mxu0 0.0
    %1008 = vmatpush1.msra.mxu0 0.0
    %1009 = vmatprep.subr.mxu0 0.0
    %1010 = vmatpush1.msra.mxu0 0.0
    %1011 = vmatprep.subr.mxu0 0.0
    %1012 = vmatpush1.msra.mxu0 0.0
    %1013 = vmatprep.subr.mxu0 0.0
    %1014 = vmatpush1.msra.mxu0 0.0
    %1015 = vmatprep.subr.mxu0 0.0
    %1016 = vmatpush1.msra.mxu0 0.0
    %1017 = vmatprep.subr.mxu0 0.0
    %1018 = vmatpush1.msra.mxu0 0.0
    %1019 = vmatprep.subr.mxu0 0.0
    %1020 = vmatpush1.msra.mxu0 0.0
    %1021 = vmatprep.subr.mxu0 0.0
    %1022 = vmatpush1.msra.mxu0 0.0
    %1023 = vmatprep.subr.mxu0 0.0
    %1024 = vmatpush1.msra.mxu0 0.0
    %1025 = vmatprep.subr.mxu0 0.0
    %1026 = vmatpush1.msra.mxu0 0.0
    %1027 = vmatprep.subr.mxu0 0.0
    %1028 = vmatpush1.msra.mxu0 0.0
    %1029 = vmatprep.subr.mxu0 0.0
    %1030 = vmatpush1.msra.mxu0 0.0
    %1031 = vmatprep.subr.mxu0 0.0
    %1032 = vmatpush1.msra.mxu0 0.0
    %1033 = vmatprep.mubr.f32.mxu0 0.0
    %v1034 = vand.u32 %v628, 4294901760
    %1035 = vmatmul.mubr.f32.gmra.mrb[0].mxu0 %v1034
    %v1036 = vpop.f32.mrb[0].mxu0
    %v1037 = vadd.f32 %v954, %v1036
    %v1038 = vpop.f32.mrb[0].mxu0
    %1039 = vdwg.mxu0
    %1040 = vmatprep.subr.mxu0 0.0
    %v1041 = vand.u32 %v621, 4294901760
    %1042 = vmatpush1.msra.mxu0 %v1041
    %1043 = vmatprep.subr.mxu0 0.0
    %v1044 = vand.u32 %v622, 4294901760
    %1045 = vmatpush1.msra.mxu0 %v1044
    %1046 = vmatprep.subr.mxu0 0.0
    %v1047 = vand.u32 %v623, 4294901760
    %1048 = vmatpush1.msra.mxu0 %v1047
    %1049 = vmatprep.subr.mxu0 0.0
    %v1050 = vand.u32 %v624, 4294901760
    %1051 = vmatpush1.msra.mxu0 %v1050
    %1052 = vmatprep.subr.mxu0 0.0
    %1053 = vmatpush1.msra.mxu0 0.0
    %1054 = vmatprep.subr.mxu0 0.0
    %1055 = vmatpush1.msra.mxu0 0.0
    %1056 = vmatprep.subr.mxu0 0.0
    %1057 = vmatpush1.msra.mxu0 0.0
    %1058 = vmatprep.subr.mxu0 0.0
    %1059 = vmatpush1.msra.mxu0 0.0
    %1060 = vmatprep.subr.mxu0 0.0
    %1061 = vmatpush1.msra.mxu0 0.0
    %1062 = vmatprep.subr.mxu0 0.0
    %1063 = vmatpush1.msra.mxu0 0.0
    %1064 = vmatprep.subr.mxu0 0.0
    %1065 = vmatpush1.msra.mxu0 0.0
    %1066 = vmatprep.subr.mxu0 0.0
    %1067 = vmatpush1.msra.mxu0 0.0
    %1068 = vmatprep.subr.mxu0 0.0
    %1069 = vmatpush1.msra.mxu0 0.0
    %1070 = vmatprep.subr.mxu0 0.0
    %1071 = vmatpush1.msra.mxu0 0.0
    %1072 = vmatprep.subr.mxu0 0.0
    %1073 = vmatpush1.msra.mxu0 0.0
    %1074 = vmatprep.subr.mxu0 0.0
    %1075 = vmatpush1.msra.mxu0 0.0
    %1076 = vmatprep.subr.mxu0 0.0
    %1077 = vmatpush1.msra.mxu0 0.0
    %1078 = vmatprep.subr.mxu0 0.0
    %1079 = vmatpush1.msra.mxu0 0.0
    %1080 = vmatprep.subr.mxu0 0.0
    %1081 = vmatpush1.msra.mxu0 0.0
    %1082 = vmatprep.subr.mxu0 0.0
    %1083 = vmatpush1.msra.mxu0 0.0
    %1084 = vmatprep.subr.mxu0 0.0
    %1085 = vmatpush1.msra.mxu0 0.0
    %1086 = vmatprep.subr.mxu0 0.0
    %1087 = vmatpush1.msra.mxu0 0.0
    %1088 = vmatprep.subr.mxu0 0.0
    %1089 = vmatpush1.msra.mxu0 0.0
    %1090 = vmatprep.subr.mxu0 0.0
    %1091 = vmatpush1.msra.mxu0 0.0
    %1092 = vmatprep.subr.mxu0 0.0
    %1093 = vmatpush1.msra.mxu0 0.0
    %1094 = vmatprep.subr.mxu0 0.0
    %1095 = vmatpush1.msra.mxu0 0.0
    %1096 = vmatprep.subr.mxu0 0.0
    %1097 = vmatpush1.msra.mxu0 0.0
    %1098 = vmatprep.subr.mxu0 0.0
    %1099 = vmatpush1.msra.mxu0 0.0
    %1100 = vmatprep.subr.mxu0 0.0
    %1101 = vmatpush1.msra.mxu0 0.0
    %1102 = vmatprep.subr.mxu0 0.0
    %1103 = vmatpush1.msra.mxu0 0.0
    %1104 = vmatprep.subr.mxu0 0.0
    %1105 = vmatpush1.msra.mxu0 0.0
    %1106 = vmatprep.subr.mxu0 0.0
    %1107 = vmatpush1.msra.mxu0 0.0
    %1108 = vmatprep.mubr.f32.mxu0 0.0
    %v1109 = vand.u32 %v628, 4294901760
    %1110 = vmatmul.mubr.f32.gmra.mrb[0].mxu0 %v1109
    %v1111 = vpop.f32.mrb[0].mxu0
    %v1112 = vadd.f32 %v1037, %v1111
    %v1113 = vpop.f32.mrb[0].mxu0
    %1114 = vdwg.mxu0
    %v1116 = vrot.slane %v1112, 1
    %v1117 = vrot.slane %v1112, 2
    %v1118 = vrot.slane %v1112, 3
    %v1123 = vadd.f32 %v600, %v1112
    %v1124 = vadd.f32 %v606, %v1116
    %v1125 = vadd.f32 %v612, %v1117
    %v1126 = vadd.f32 %v618, %v1118
    %v1127 = vxor.u32 %v1123, 2147483648
    %v1128 = vxor.u32 %v1124, 2147483648
    %v1129 = vxor.u32 %v1125, 2147483648
    %v1130 = vxor.u32 %v1126, 2147483648
    %v1131 = vmul.f32 %v1127, 1.442695
    %v1132 = vpow.pop %v1131
    %v1133 = vmul.f32 %v1128, 1.442695
    %v1134 = vpow.pop %v1133
    %v1135 = vmul.f32 %v1129, 1.442695
    %v1136 = vpow.pop %v1135
    %v1137 = vmul.f32 %v1130, 1.442695
    %v1138 = vpow.pop %v1137
    %v1139 = vadd.f32 %v1132, 1.0
    %v1140 = vadd.f32 %v1134, 1.0
    %v1141 = vadd.f32 %v1136, 1.0
    %v1142 = vadd.f32 %v1138, 1.0
    %v1143 = vrcp.pop %v1139
    %v1144 = vmul.f32 1.0, %v1143
    %v1145 = vrcp.pop %v1140
    %v1146 = vmul.f32 1.0, %v1145
    %v1147 = vrcp.pop %v1141
    %v1148 = vmul.f32 1.0, %v1147
    %v1149 = vrcp.pop %v1142
    %v1150 = vmul.f32 1.0, %v1149
    %v1151 = vtanh.pop %v1123
    %v1152 = vtanh.pop %v1124
    %v1153 = vtanh.pop %v1125
    %v1154 = vtanh.pop %v1126
    %v1155 = vmul.f32 %v1144, 0.0
    %v1156 = vmul.f32 %v1146, 0.0
    %v1157 = vmul.f32 %v1148, 0.0
    %v1158 = vmul.f32 %v1150, 0.0
    %1163 = vrot.lane.b32.xlu0 %v1151, 32
    %v1164 = vpop.permute.xlu0 %1163
    %1165 = vrot.lane.b32.xlu0 %v1152, 32
    %v1166 = vpop.permute.xlu0 %1165
    %1167 = vrot.lane.b32.xlu0 %v1153, 32
    %v1168 = vpop.permute.xlu0 %1167
    %1169 = vrot.lane.b32.xlu0 %v1154, 32
    %v1170 = vpop.permute.xlu0 %1169
    %v1175 = vmul.f32 %v1144, %v1164
    %v1176 = vmul.f32 %v1146, %v1166
    %v1177 = vmul.f32 %v1148, %v1168
    %v1178 = vmul.f32 %v1150, %v1170
    %1183 = vrot.lane.b32.xlu0 %v1175, 32
    %v1184 = vpop.permute.xlu0 %1183
    %1185 = vrot.lane.b32.xlu0 %v1176, 32
    %v1186 = vpop.permute.xlu0 %1185
    %1187 = vrot.lane.b32.xlu0 %v1177, 32
    %v1188 = vpop.permute.xlu0 %1187
    %1189 = vrot.lane.b32.xlu0 %v1178, 32
    %v1190 = vpop.permute.xlu0 %1189
    %v1195 = vadd.f32 %v1155, %v1184
    %v1196 = vadd.f32 %v1156, %v1186
    %v1197 = vadd.f32 %v1157, %v1188
    %v1198 = vadd.f32 %v1158, %v1190
    %v1199 = vtanh.pop %v1195
    %v1200 = vtanh.pop %v1196
    %v1201 = vtanh.pop %v1197
    %v1202 = vtanh.pop %v1198
    %1207 = vrot.lane.b32.xlu0 %v1199, 32
    %v1208 = vpop.permute.xlu0 %1207
    %1209 = vrot.lane.b32.xlu0 %v1200, 32
    %v1210 = vpop.permute.xlu0 %1209
    %1211 = vrot.lane.b32.xlu0 %v1201, 32
    %v1212 = vpop.permute.xlu0 %1211
    %1213 = vrot.lane.b32.xlu0 %v1202, 32
    %v1214 = vpop.permute.xlu0 %1213
    %v1219 = vmul.f32 %v1144, %v1208
    %v1220 = vmul.f32 %v1146, %v1210
    %v1221 = vmul.f32 %v1148, %v1212
    %v1222 = vmul.f32 %v1150, %v1214
    %v1224 = vlaneseq
    %v1225 = vshrl.u32 %v1224, 7
    %v1226 = vsub.s32 0, %v1225
    %v1227 = vrot.slane %v625, %v1226
    %1228 = vrot.lane.b32.xlu0 %v1227, 64
    %v1229 = vpop.permute.xlu0 %1228
    %v1231 = vmul.f32 %v1219, %v1229
    %v1232 = vmul.f32 %v1220, %v1229
    %v1233 = vmul.f32 %v1221, %v1229
    %v1234 = vmul.f32 %v1222, %v1229
    %v1239 = vrot.slane %v1232, 7
    %vm1240 = vcmask 1041409
    %v1241 = vsel %vm1240, %v1239, %v1231
    %v1242 = vrot.slane %v1233, 6
    %vm1243 = vcmask 1042434
    %v1244 = vsel %vm1243, %v1242, %v1241
    %v1245 = vrot.slane %v1234, 5
    %vm1246 = vcmask 1043459
    %v1247 = vsel %vm1246, %v1245, %v1244
    %1248 = vrot.lane.b32.xlu0 %v1247, 64
    %v1249 = vpop.permute.xlu0 %1248
    %vm1251 = vcmask 257024
    %v1252 = vsel %vm1251, %v1249, 0.0
    %1253 = vadd.xlane.f32.xlu0 %v1252
    %v1254 = vpop.xlane.xlu0 %1253
    %v1259 = vrot.slane %v1220, 7
    %v1260 = vsel %vm1240, %v1259, %v1219
    %v1261 = vrot.slane %v1221, 6
    %v1262 = vsel %vm1243, %v1261, %v1260
    %v1263 = vrot.slane %v1222, 5
    %v1264 = vsel %vm1246, %v1263, %v1262
    %1265 = vrot.lane.b32.xlu0 %v1264, 64
    %v1266 = vpop.permute.xlu0 %1265
    %v1267 = vsel %vm626, %v1266, 0
    %1269 = vmatprep.subr.mxu0 0.0
    %v1270 = vand.u32 %v621, 4294901760
    %1271 = vmatpush1.msra.mxu0 %v1270
    %1272 = vmatprep.subr.mxu0 0.0
    %v1273 = vand.u32 %v622, 4294901760
    %1274 = vmatpush1.msra.mxu0 %v1273
    %1275 = vmatprep.subr.mxu0 0.0
    %v1276 = vand.u32 %v623, 4294901760
    %1277 = vmatpush1.msra.mxu0 %v1276
    %1278 = vmatprep.subr.mxu0 0.0
    %v1279 = vand.u32 %v624, 4294901760
    %1280 = vmatpush1.msra.mxu0 %v1279
    %1281 = vmatprep.subr.mxu0 0.0
    %1282 = vmatpush1.msra.mxu0 0.0
    %1283 = vmatprep.subr.mxu0 0.0
    %1284 = vmatpush1.msra.mxu0 0.0
    %1285 = vmatprep.subr.mxu0 0.0
    %1286 = vmatpush1.msra.mxu0 0.0
    %1287 = vmatprep.subr.mxu0 0.0
    %1288 = vmatpush1.msra.mxu0 0.0
    %1289 = vmatprep.subr.mxu0 0.0
    %1290 = vmatpush1.msra.mxu0 0.0
    %1291 = vmatprep.subr.mxu0 0.0
    %1292 = vmatpush1.msra.mxu0 0.0
    %1293 = vmatprep.subr.mxu0 0.0
    %1294 = vmatpush1.msra.mxu0 0.0
    %1295 = vmatprep.subr.mxu0 0.0
    %1296 = vmatpush1.msra.mxu0 0.0
    %1297 = vmatprep.subr.mxu0 0.0
    %1298 = vmatpush1.msra.mxu0 0.0
    %1299 = vmatprep.subr.mxu0 0.0
    %1300 = vmatpush1.msra.mxu0 0.0
    %1301 = vmatprep.subr.mxu0 0.0
    %1302 = vmatpush1.msra.mxu0 0.0
    %1303 = vmatprep.subr.mxu0 0.0
    %1304 = vmatpush1.msra.mxu0 0.0
    %1305 = vmatprep.subr.mxu0 0.0
    %1306 = vmatpush1.msra.mxu0 0.0
    %1307 = vmatprep.subr.mxu0 0.0
    %1308 = vmatpush1.msra.mxu0 0.0
    %1309 = vmatprep.subr.mxu0 0.0
    %1310 = vmatpush1.msra.mxu0 0.0
    %1311 = vmatprep.subr.mxu0 0.0
    %1312 = vmatpush1.msra.mxu0 0.0
    %1313 = vmatprep.subr.mxu0 0.0
    %1314 = vmatpush1.msra.mxu0 0.0
    %1315 = vmatprep.subr.mxu0 0.0
    %1316 = vmatpush1.msra.mxu0 0.0
    %1317 = vmatprep.subr.mxu0 0.0
    %1318 = vmatpush1.msra.mxu0 0.0
    %1319 = vmatprep.subr.mxu0 0.0
    %1320 = vmatpush1.msra.mxu0 0.0
    %1321 = vmatprep.subr.mxu0 0.0
    %1322 = vmatpush1.msra.mxu0 0.0
    %1323 = vmatprep.subr.mxu0 0.0
    %1324 = vmatpush1.msra.mxu0 0.0
    %1325 = vmatprep.subr.mxu0 0.0
    %1326 = vmatpush1.msra.mxu0 0.0
    %1327 = vmatprep.subr.mxu0 0.0
    %1328 = vmatpush1.msra.mxu0 0.0
    %1329 = vmatprep.subr.mxu0 0.0
    %1330 = vmatpush1.msra.mxu0 0.0
    %1331 = vmatprep.subr.mxu0 0.0
    %1332 = vmatpush1.msra.mxu0 0.0
    %1333 = vmatprep.subr.mxu0 0.0
    %1334 = vmatpush1.msra.mxu0 0.0
    %1335 = vmatprep.subr.mxu0 0.0
    %1336 = vmatpush1.msra.mxu0 0.0
    %1337 = vmatprep.mubr.f32.mxu0 0.0
    %v1338 = vand.u32 %v1267, 4294901760
    %v1339 = vsub.f32 %v1267, %v1338
    %v1340 = vand.u32 %v1339, 4294901760
    %v1341 = vsub.f32 %v1339, %v1340
    %v1342 = vand.u32 %v1341, 4294901760
    %1343 = vmatmul.mubr.f32.gmra.mrb[0].mxu0 %v1342
    %v1344 = vpop.f32.mrb[0].mxu0
    %v1345 = vadd.f32 0.0, %v1344
    %v1346 = vpop.f32.mrb[0].mxu0
    %1347 = vdwg.mxu0
    %1348 = vmatprep.subr.mxu0 0.0
    %v1349 = vand.u32 %v621, 4294901760
    %v1350 = vsub.f32 %v621, %v1349
    %v1351 = vand.u32 %v1350, 4294901760
    %v1352 = vsub.f32 %v1350, %v1351
    %v1353 = vand.u32 %v1352, 4294901760
    %1354 = vmatpush1.msra.mxu0 %v1353
    %1355 = vmatprep.subr.mxu0 0.0
    %v1356 = vand.u32 %v622, 4294901760
    %v1357 = vsub.f32 %v622, %v1356
    %v1358 = vand.u32 %v1357, 4294901760
    %v1359 = vsub.f32 %v1357, %v1358
    %v1360 = vand.u32 %v1359, 4294901760
    %1361 = vmatpush1.msra.mxu0 %v1360
    %1362 = vmatprep.subr.mxu0 0.0
    %v1363 = vand.u32 %v623, 4294901760
    %v1364 = vsub.f32 %v623, %v1363
    %v1365 = vand.u32 %v1364, 4294901760
    %v1366 = vsub.f32 %v1364, %v1365
    %v1367 = vand.u32 %v1366, 4294901760
    %1368 = vmatpush1.msra.mxu0 %v1367
    %1369 = vmatprep.subr.mxu0 0.0
    %v1370 = vand.u32 %v624, 4294901760
    %v1371 = vsub.f32 %v624, %v1370
    %v1372 = vand.u32 %v1371, 4294901760
    %v1373 = vsub.f32 %v1371, %v1372
    %v1374 = vand.u32 %v1373, 4294901760
    %1375 = vmatpush1.msra.mxu0 %v1374
    %1376 = vmatprep.subr.mxu0 0.0
    %1377 = vmatpush1.msra.mxu0 0.0
    %1378 = vmatprep.subr.mxu0 0.0
    %1379 = vmatpush1.msra.mxu0 0.0
    %1380 = vmatprep.subr.mxu0 0.0
    %1381 = vmatpush1.msra.mxu0 0.0
    %1382 = vmatprep.subr.mxu0 0.0
    %1383 = vmatpush1.msra.mxu0 0.0
    %1384 = vmatprep.subr.mxu0 0.0
    %1385 = vmatpush1.msra.mxu0 0.0
    %1386 = vmatprep.subr.mxu0 0.0
    %1387 = vmatpush1.msra.mxu0 0.0
    %1388 = vmatprep.subr.mxu0 0.0
    %1389 = vmatpush1.msra.mxu0 0.0
    %1390 = vmatprep.subr.mxu0 0.0
    %1391 = vmatpush1.msra.mxu0 0.0
    %1392 = vmatprep.subr.mxu0 0.0
    %1393 = vmatpush1.msra.mxu0 0.0
    %1394 = vmatprep.subr.mxu0 0.0
    %1395 = vmatpush1.msra.mxu0 0.0
    %1396 = vmatprep.subr.mxu0 0.0
    %1397 = vmatpush1.msra.mxu0 0.0
    %1398 = vmatprep.subr.mxu0 0.0
    %1399 = vmatpush1.msra.mxu0 0.0
    %1400 = vmatprep.subr.mxu0 0.0
    %1401 = vmatpush1.msra.mxu0 0.0
    %1402 = vmatprep.subr.mxu0 0.0
    %1403 = vmatpush1.msra.mxu0 0.0
    %1404 = vmatprep.subr.mxu0 0.0
    %1405 = vmatpush1.msra.mxu0 0.0
    %1406 = vmatprep.subr.mxu0 0.0
    %1407 = vmatpush1.msra.mxu0 0.0
    %1408 = vmatprep.subr.mxu0 0.0
    %1409 = vmatpush1.msra.mxu0 0.0
    %1410 = vmatprep.subr.mxu0 0.0
    %1411 = vmatpush1.msra.mxu0 0.0
    %1412 = vmatprep.subr.mxu0 0.0
    %1413 = vmatpush1.msra.mxu0 0.0
    %1414 = vmatprep.subr.mxu0 0.0
    %1415 = vmatpush1.msra.mxu0 0.0
    %1416 = vmatprep.subr.mxu0 0.0
    %1417 = vmatpush1.msra.mxu0 0.0
    %1418 = vmatprep.subr.mxu0 0.0
    %1419 = vmatpush1.msra.mxu0 0.0
    %1420 = vmatprep.subr.mxu0 0.0
    %1421 = vmatpush1.msra.mxu0 0.0
    %1422 = vmatprep.subr.mxu0 0.0
    %1423 = vmatpush1.msra.mxu0 0.0
    %1424 = vmatprep.subr.mxu0 0.0
    %1425 = vmatpush1.msra.mxu0 0.0
    %1426 = vmatprep.subr.mxu0 0.0
    %1427 = vmatpush1.msra.mxu0 0.0
    %1428 = vmatprep.subr.mxu0 0.0
    %1429 = vmatpush1.msra.mxu0 0.0
    %1430 = vmatprep.subr.mxu0 0.0
    %1431 = vmatpush1.msra.mxu0 0.0
    %1432 = vmatprep.mubr.f32.mxu0 0.0
    %v1433 = vand.u32 %v1267, 4294901760
    %1434 = vmatmul.mubr.f32.gmra.mrb[0].mxu0 %v1433
    %v1435 = vpop.f32.mrb[0].mxu0
    %v1436 = vadd.f32 %v1345, %v1435
    %v1437 = vpop.f32.mrb[0].mxu0
    %1438 = vdwg.mxu0
    %1439 = vmatprep.subr.mxu0 0.0
    %v1440 = vand.u32 %v621, 4294901760
    %v1441 = vsub.f32 %v621, %v1440
    %1442 = vmatpush1.msra.mxu0 %v1441
    %1443 = vmatprep.subr.mxu0 0.0
    %v1444 = vand.u32 %v622, 4294901760
    %v1445 = vsub.f32 %v622, %v1444
    %1446 = vmatpush1.msra.mxu0 %v1445
    %1447 = vmatprep.subr.mxu0 0.0
    %v1448 = vand.u32 %v623, 4294901760
    %v1449 = vsub.f32 %v623, %v1448
    %1450 = vmatpush1.msra.mxu0 %v1449
    %1451 = vmatprep.subr.mxu0 0.0
    %v1452 = vand.u32 %v624, 4294901760
    %v1453 = vsub.f32 %v624, %v1452
    %1454 = vmatpush1.msra.mxu0 %v1453
    %1455 = vmatprep.subr.mxu0 0.0
    %1456 = vmatpush1.msra.mxu0 0.0
    %1457 = vmatprep.subr.mxu0 0.0
    %1458 = vmatpush1.msra.mxu0 0.0
    %1459 = vmatprep.subr.mxu0 0.0
    %1460 = vmatpush1.msra.mxu0 0.0
    %1461 = vmatprep.subr.mxu0 0.0
    %1462 = vmatpush1.msra.mxu0 0.0
    %1463 = vmatprep.subr.mxu0 0.0
    %1464 = vmatpush1.msra.mxu0 0.0
    %1465 = vmatprep.subr.mxu0 0.0
    %1466 = vmatpush1.msra.mxu0 0.0
    %1467 = vmatprep.subr.mxu0 0.0
    %1468 = vmatpush1.msra.mxu0 0.0
    %1469 = vmatprep.subr.mxu0 0.0
    %1470 = vmatpush1.msra.mxu0 0.0
    %1471 = vmatprep.subr.mxu0 0.0
    %1472 = vmatpush1.msra.mxu0 0.0
    %1473 = vmatprep.subr.mxu0 0.0
    %1474 = vmatpush1.msra.mxu0 0.0
    %1475 = vmatprep.subr.mxu0 0.0
    %1476 = vmatpush1.msra.mxu0 0.0
    %1477 = vmatprep.subr.mxu0 0.0
    %1478 = vmatpush1.msra.mxu0 0.0
    %1479 = vmatprep.subr.mxu0 0.0
    %1480 = vmatpush1.msra.mxu0 0.0
    %1481 = vmatprep.subr.mxu0 0.0
    %1482 = vmatpush1.msra.mxu0 0.0
    %1483 = vmatprep.subr.mxu0 0.0
    %1484 = vmatpush1.msra.mxu0 0.0
    %1485 = vmatprep.subr.mxu0 0.0
    %1486 = vmatpush1.msra.mxu0 0.0
    %1487 = vmatprep.subr.mxu0 0.0
    %1488 = vmatpush1.msra.mxu0 0.0
    %1489 = vmatprep.subr.mxu0 0.0
    %1490 = vmatpush1.msra.mxu0 0.0
    %1491 = vmatprep.subr.mxu0 0.0
    %1492 = vmatpush1.msra.mxu0 0.0
    %1493 = vmatprep.subr.mxu0 0.0
    %1494 = vmatpush1.msra.mxu0 0.0
    %1495 = vmatprep.subr.mxu0 0.0
    %1496 = vmatpush1.msra.mxu0 0.0
    %1497 = vmatprep.subr.mxu0 0.0
    %1498 = vmatpush1.msra.mxu0 0.0
    %1499 = vmatprep.subr.mxu0 0.0
    %1500 = vmatpush1.msra.mxu0 0.0
    %1501 = vmatprep.subr.mxu0 0.0
    %1502 = vmatpush1.msra.mxu0 0.0
    %1503 = vmatprep.subr.mxu0 0.0
    %1504 = vmatpush1.msra.mxu0 0.0
    %1505 = vmatprep.subr.mxu0 0.0
    %1506 = vmatpush1.msra.mxu0 0.0
    %1507 = vmatprep.subr.mxu0 0.0
    %1508 = vmatpush1.msra.mxu0 0.0
    %1509 = vmatprep.subr.mxu0 0.0
    %1510 = vmatpush1.msra.mxu0 0.0
    %1511 = vmatprep.mubr.f32.mxu0 0.0
    %v1512 = vand.u32 %v1267, 4294901760
    %v1513 = vsub.f32 %v1267, %v1512
    %1514 = vmatmul.mubr.f32.gmra.mrb[0].mxu0 %v1513
    %v1515 = vpop.f32.mrb[0].mxu0
    %v1516 = vadd.f32 %v1436, %v1515
    %v1517 = vpop.f32.mrb[0].mxu0
    %1518 = vdwg.mxu0
    %1519 = vmatprep.subr.mxu0 0.0
    %v1520 = vand.u32 %v621, 4294901760
    %1521 = vmatpush1.msra.mxu0 %v1520
    %1522 = vmatprep.subr.mxu0 0.0
    %v1523 = vand.u32 %v622, 4294901760
    %1524 = vmatpush1.msra.mxu0 %v1523
    %1525 = vmatprep.subr.mxu0 0.0
    %v1526 = vand.u32 %v623, 4294901760
    %1527 = vmatpush1.msra.mxu0 %v1526
    %1528 = vmatprep.subr.mxu0 0.0
    %v1529 = vand.u32 %v624, 4294901760
    %1530 = vmatpush1.msra.mxu0 %v1529
    %1531 = vmatprep.subr.mxu0 0.0
    %1532 = vmatpush1.msra.mxu0 0.0
    %1533 = vmatprep.subr.mxu0 0.0
    %1534 = vmatpush1.msra.mxu0 0.0
    %1535 = vmatprep.subr.mxu0 0.0
    %1536 = vmatpush1.msra.mxu0 0.0
    %1537 = vmatprep.subr.mxu0 0.0
    %1538 = vmatpush1.msra.mxu0 0.0
    %1539 = vmatprep.subr.mxu0 0.0
    %1540 = vmatpush1.msra.mxu0 0.0
    %1541 = vmatprep.subr.mxu0 0.0
    %1542 = vmatpush1.msra.mxu0 0.0
    %1543 = vmatprep.subr.mxu0 0.0
    %1544 = vmatpush1.msra.mxu0 0.0
    %1545 = vmatprep.subr.mxu0 0.0
    %1546 = vmatpush1.msra.mxu0 0.0
    %1547 = vmatprep.subr.mxu0 0.0
    %1548 = vmatpush1.msra.mxu0 0.0
    %1549 = vmatprep.subr.mxu0 0.0
    %1550 = vmatpush1.msra.mxu0 0.0
    %1551 = vmatprep.subr.mxu0 0.0
    %1552 = vmatpush1.msra.mxu0 0.0
    %1553 = vmatprep.subr.mxu0 0.0
    %1554 = vmatpush1.msra.mxu0 0.0
    %1555 = vmatprep.subr.mxu0 0.0
    %1556 = vmatpush1.msra.mxu0 0.0
    %1557 = vmatprep.subr.mxu0 0.0
    %1558 = vmatpush1.msra.mxu0 0.0
    %1559 = vmatprep.subr.mxu0 0.0
    %1560 = vmatpush1.msra.mxu0 0.0
    %1561 = vmatprep.subr.mxu0 0.0
    %1562 = vmatpush1.msra.mxu0 0.0
    %1563 = vmatprep.subr.mxu0 0.0
    %1564 = vmatpush1.msra.mxu0 0.0
    %1565 = vmatprep.subr.mxu0 0.0
    %1566 = vmatpush1.msra.mxu0 0.0
    %1567 = vmatprep.subr.mxu0 0.0
    %1568 = vmatpush1.msra.mxu0 0.0
    %1569 = vmatprep.subr.mxu0 0.0
    %1570 = vmatpush1.msra.mxu0 0.0
    %1571 = vmatprep.subr.mxu0 0.0
    %1572 = vmatpush1.msra.mxu0 0.0
    %1573 = vmatprep.subr.mxu0 0.0
    %1574 = vmatpush1.msra.mxu0 0.0
    %1575 = vmatprep.subr.mxu0 0.0
    %1576 = vmatpush1.msra.mxu0 0.0
    %1577 = vmatprep.subr.mxu0 0.0
    %1578 = vmatpush1.msra.mxu0 0.0
    %1579 = vmatprep.subr.mxu0 0.0
    %1580 = vmatpush1.msra.mxu0 0.0
    %1581 = vmatprep.subr.mxu0 0.0
    %1582 = vmatpush1.msra.mxu0 0.0
    %1583 = vmatprep.subr.mxu0 0.0
    %1584 = vmatpush1.msra.mxu0 0.0
    %1585 = vmatprep.subr.mxu0 0.0
    %1586 = vmatpush1.msra.mxu0 0.0
    %1587 = vmatprep.mubr.f32.mxu0 0.0
    %v1588 = vand.u32 %v1267, 4294901760
    %v1589 = vsub.f32 %v1267, %v1588
    %v1590 = vand.u32 %v1589, 4294901760
    %1591 = vmatmul.mubr.f32.gmra.mrb[0].mxu0 %v1590
    %v1592 = vpop.f32.mrb[0].mxu0
    %v1593 = vadd.f32 %v1516, %v1592
    %v1594 = vpop.f32.mrb[0].mxu0
    %1595 = vdwg.mxu0
    %1596 = vmatprep.subr.mxu0 0.0
    %v1597 = vand.u32 %v621, 4294901760
    %v1598 = vsub.f32 %v621, %v1597
    %v1599 = vand.u32 %v1598, 4294901760
    %1600 = vmatpush1.msra.mxu0 %v1599
    %1601 = vmatprep.subr.mxu0 0.0
    %v1602 = vand.u32 %v622, 4294901760
    %v1603 = vsub.f32 %v622, %v1602
    %v1604 = vand.u32 %v1603, 4294901760
    %1605 = vmatpush1.msra.mxu0 %v1604
    %1606 = vmatprep.subr.mxu0 0.0
    %v1607 = vand.u32 %v623, 4294901760
    %v1608 = vsub.f32 %v623, %v1607
    %v1609 = vand.u32 %v1608, 4294901760
    %1610 = vmatpush1.msra.mxu0 %v1609
    %1611 = vmatprep.subr.mxu0 0.0
    %v1612 = vand.u32 %v624, 4294901760
    %v1613 = vsub.f32 %v624, %v1612
    %v1614 = vand.u32 %v1613, 4294901760
    %1615 = vmatpush1.msra.mxu0 %v1614
    %1616 = vmatprep.subr.mxu0 0.0
    %1617 = vmatpush1.msra.mxu0 0.0
    %1618 = vmatprep.subr.mxu0 0.0
    %1619 = vmatpush1.msra.mxu0 0.0
    %1620 = vmatprep.subr.mxu0 0.0
    %1621 = vmatpush1.msra.mxu0 0.0
    %1622 = vmatprep.subr.mxu0 0.0
    %1623 = vmatpush1.msra.mxu0 0.0
    %1624 = vmatprep.subr.mxu0 0.0
    %1625 = vmatpush1.msra.mxu0 0.0
    %1626 = vmatprep.subr.mxu0 0.0
    %1627 = vmatpush1.msra.mxu0 0.0
    %1628 = vmatprep.subr.mxu0 0.0
    %1629 = vmatpush1.msra.mxu0 0.0
    %1630 = vmatprep.subr.mxu0 0.0
    %1631 = vmatpush1.msra.mxu0 0.0
    %1632 = vmatprep.subr.mxu0 0.0
    %1633 = vmatpush1.msra.mxu0 0.0
    %1634 = vmatprep.subr.mxu0 0.0
    %1635 = vmatpush1.msra.mxu0 0.0
    %1636 = vmatprep.subr.mxu0 0.0
    %1637 = vmatpush1.msra.mxu0 0.0
    %1638 = vmatprep.subr.mxu0 0.0
    %1639 = vmatpush1.msra.mxu0 0.0
    %1640 = vmatprep.subr.mxu0 0.0
    %1641 = vmatpush1.msra.mxu0 0.0
    %1642 = vmatprep.subr.mxu0 0.0
    %1643 = vmatpush1.msra.mxu0 0.0
    %1644 = vmatprep.subr.mxu0 0.0
    %1645 = vmatpush1.msra.mxu0 0.0
    %1646 = vmatprep.subr.mxu0 0.0
    %1647 = vmatpush1.msra.mxu0 0.0
    %1648 = vmatprep.subr.mxu0 0.0
    %1649 = vmatpush1.msra.mxu0 0.0
    %1650 = vmatprep.subr.mxu0 0.0
    %1651 = vmatpush1.msra.mxu0 0.0
    %1652 = vmatprep.subr.mxu0 0.0
    %1653 = vmatpush1.msra.mxu0 0.0
    %1654 = vmatprep.subr.mxu0 0.0
    %1655 = vmatpush1.msra.mxu0 0.0
    %1656 = vmatprep.subr.mxu0 0.0
    %1657 = vmatpush1.msra.mxu0 0.0
    %1658 = vmatprep.subr.mxu0 0.0
    %1659 = vmatpush1.msra.mxu0 0.0
    %1660 = vmatprep.subr.mxu0 0.0
    %1661 = vmatpush1.msra.mxu0 0.0
    %1662 = vmatprep.subr.mxu0 0.0
    %1663 = vmatpush1.msra.mxu0 0.0
    %1664 = vmatprep.subr.mxu0 0.0
    %1665 = vmatpush1.msra.mxu0 0.0
    %1666 = vmatprep.subr.mxu0 0.0
    %1667 = vmatpush1.msra.mxu0 0.0
    %1668 = vmatprep.subr.mxu0 0.0
    %1669 = vmatpush1.msra.mxu0 0.0
    %1670 = vmatprep.subr.mxu0 0.0
    %1671 = vmatpush1.msra.mxu0 0.0
    %1672 = vmatprep.mubr.f32.mxu0 0.0
    %v1673 = vand.u32 %v1267, 4294901760
    %1674 = vmatmul.mubr.f32.gmra.mrb[0].mxu0 %v1673
    %v1675 = vpop.f32.mrb[0].mxu0
    %v1676 = vadd.f32 %v1593, %v1675
    %v1677 = vpop.f32.mrb[0].mxu0
    %1678 = vdwg.mxu0
    %1679 = vmatprep.subr.mxu0 0.0
    %v1680 = vand.u32 %v621, 4294901760
    %1681 = vmatpush1.msra.mxu0 %v1680
    %1682 = vmatprep.subr.mxu0 0.0
    %v1683 = vand.u32 %v622, 4294901760
    %1684 = vmatpush1.msra.mxu0 %v1683
    %1685 = vmatprep.subr.mxu0 0.0
    %v1686 = vand.u32 %v623, 4294901760
    %1687 = vmatpush1.msra.mxu0 %v1686
    %1688 = vmatprep.subr.mxu0 0.0
    %v1689 = vand.u32 %v624, 4294901760
    %1690 = vmatpush1.msra.mxu0 %v1689
    %1691 = vmatprep.subr.mxu0 0.0
    %1692 = vmatpush1.msra.mxu0 0.0
    %1693 = vmatprep.subr.mxu0 0.0
    %1694 = vmatpush1.msra.mxu0 0.0
    %1695 = vmatprep.subr.mxu0 0.0
    %1696 = vmatpush1.msra.mxu0 0.0
    %1697 = vmatprep.subr.mxu0 0.0
    %1698 = vmatpush1.msra.mxu0 0.0
    %1699 = vmatprep.subr.mxu0 0.0
    %1700 = vmatpush1.msra.mxu0 0.0
    %1701 = vmatprep.subr.mxu0 0.0
    %1702 = vmatpush1.msra.mxu0 0.0
    %1703 = vmatprep.subr.mxu0 0.0
    %1704 = vmatpush1.msra.mxu0 0.0
    %1705 = vmatprep.subr.mxu0 0.0
    %1706 = vmatpush1.msra.mxu0 0.0
    %1707 = vmatprep.subr.mxu0 0.0
    %1708 = vmatpush1.msra.mxu0 0.0
    %1709 = vmatprep.subr.mxu0 0.0
    %1710 = vmatpush1.msra.mxu0 0.0
    %1711 = vmatprep.subr.mxu0 0.0
    %1712 = vmatpush1.msra.mxu0 0.0
    %1713 = vmatprep.subr.mxu0 0.0
    %1714 = vmatpush1.msra.mxu0 0.0
    %1715 = vmatprep.subr.mxu0 0.0
    %1716 = vmatpush1.msra.mxu0 0.0
    %1717 = vmatprep.subr.mxu0 0.0
    %1718 = vmatpush1.msra.mxu0 0.0
    %1719 = vmatprep.subr.mxu0 0.0
    %1720 = vmatpush1.msra.mxu0 0.0
    %1721 = vmatprep.subr.mxu0 0.0
    %1722 = vmatpush1.msra.mxu0 0.0
    %1723 = vmatprep.subr.mxu0 0.0
    %1724 = vmatpush1.msra.mxu0 0.0
    %1725 = vmatprep.subr.mxu0 0.0
    %1726 = vmatpush1.msra.mxu0 0.0
    %1727 = vmatprep.subr.mxu0 0.0
    %1728 = vmatpush1.msra.mxu0 0.0
    %1729 = vmatprep.subr.mxu0 0.0
    %1730 = vmatpush1.msra.mxu0 0.0
    %1731 = vmatprep.subr.mxu0 0.0
    %1732 = vmatpush1.msra.mxu0 0.0
    %1733 = vmatprep.subr.mxu0 0.0
    %1734 = vmatpush1.msra.mxu0 0.0
    %1735 = vmatprep.subr.mxu0 0.0
    %1736 = vmatpush1.msra.mxu0 0.0
    %1737 = vmatprep.subr.mxu0 0.0
    %1738 = vmatpush1.msra.mxu0 0.0
    %1739 = vmatprep.subr.mxu0 0.0
    %1740 = vmatpush1.msra.mxu0 0.0
    %1741 = vmatprep.subr.mxu0 0.0
    %1742 = vmatpush1.msra.mxu0 0.0
    %1743 = vmatprep.subr.mxu0 0.0
    %1744 = vmatpush1.msra.mxu0 0.0
    %1745 = vmatprep.subr.mxu0 0.0
    %1746 = vmatpush1.msra.mxu0 0.0
    %1747 = vmatprep.mubr.f32.mxu0 0.0
    %v1748 = vand.u32 %v1267, 4294901760
    %1749 = vmatmul.mubr.f32.gmra.mrb[0].mxu0 %v1748
    %v1750 = vpop.f32.mrb[0].mxu0
    %v1751 = vadd.f32 %v1676, %v1750
    %v1752 = vpop.f32.mrb[0].mxu0
    %1753 = vdwg.mxu0
    %v1755 = vrot.slane %v1751, 7
    %v1756 = vrot.slane %v1751, 1
    %v1757 = vrot.slane %v1751, 2
    %v1762 = vadd.f32 %v600, %v1755
    %v1763 = vadd.f32 %v606, %v1751
    %v1764 = vadd.f32 %v612, %v1756
    %v1765 = vadd.f32 %v618, %v1757
    %v1766 = vxor.u32 %v1762, 2147483648
    %v1767 = vxor.u32 %v1763, 2147483648
    %v1768 = vxor.u32 %v1764, 2147483648
    %v1769 = vxor.u32 %v1765, 2147483648
    %v1770 = vmul.f32 %v1766, 1.442695
    %v1771 = vpow.pop %v1770
    %v1772 = vmul.f32 %v1767, 1.442695
    %v1773 = vpow.pop %v1772
    %v1774 = vmul.f32 %v1768, 1.442695
    %v1775 = vpow.pop %v1774
    %v1776 = vmul.f32 %v1769, 1.442695
    %v1777 = vpow.pop %v1776
    %v1778 = vadd.f32 %v1771, 1.0
    %v1779 = vadd.f32 %v1773, 1.0
    %v1780 = vadd.f32 %v1775, 1.0
    %v1781 = vadd.f32 %v1777, 1.0
    %v1782 = vrcp.pop %v1778
    %v1783 = vmul.f32 1.0, %v1782
    %v1784 = vrcp.pop %v1779
    %v1785 = vmul.f32 1.0, %v1784
    %v1786 = vrcp.pop %v1780
    %v1787 = vmul.f32 1.0, %v1786
    %v1788 = vrcp.pop %v1781
    %v1789 = vmul.f32 1.0, %v1788
    %v1790 = vtanh.pop %v1762
    %v1791 = vtanh.pop %v1763
    %v1792 = vtanh.pop %v1764
    %v1793 = vtanh.pop %v1765
    %v1798 = vrot.slane %v1195, 7
    %v1799 = vrot.slane %v1196, 7
    %v1800 = vrot.slane %v1197, 7
    %v1801 = vrot.slane %v1198, 7
    %v1806 = vmul.f32 %v1783, %v1798
    %v1807 = vmul.f32 %v1785, %v1799
    %v1808 = vmul.f32 %v1787, %v1800
    %v1809 = vmul.f32 %v1789, %v1801
    %1814 = vrot.lane.b32.xlu0 %v1790, 32
    %v1815 = vpop.permute.xlu0 %1814
    %1816 = vrot.lane.b32.xlu0 %v1791, 32
    %v1817 = vpop.permute.xlu0 %1816
    %1818 = vrot.lane.b32.xlu0 %v1792, 32
    %v1819 = vpop.permute.xlu0 %1818
    %1820 = vrot.lane.b32.xlu0 %v1793, 32
    %v1821 = vpop.permute.xlu0 %1820
    %v1826 = vmul.f32 %v1783, %v1815
    %v1827 = vmul.f32 %v1785, %v1817
    %v1828 = vmul.f32 %v1787, %v1819
    %v1829 = vmul.f32 %v1789, %v1821
    %1834 = vrot.lane.b32.xlu0 %v1826, 32
    %v1835 = vpop.permute.xlu0 %1834
    %1836 = vrot.lane.b32.xlu0 %v1827, 32
    %v1837 = vpop.permute.xlu0 %1836
    %1838 = vrot.lane.b32.xlu0 %v1828, 32
    %v1839 = vpop.permute.xlu0 %1838
    %1840 = vrot.lane.b32.xlu0 %v1829, 32
    %v1841 = vpop.permute.xlu0 %1840
    %v1846 = vadd.f32 %v1806, %v1835
    %v1847 = vadd.f32 %v1807, %v1837
    %v1848 = vadd.f32 %v1808, %v1839
    %v1849 = vadd.f32 %v1809, %v1841
    %v1850 = vtanh.pop %v1846
    %v1851 = vtanh.pop %v1847
    %v1852 = vtanh.pop %v1848
    %v1853 = vtanh.pop %v1849
    %1858 = vrot.lane.b32.xlu0 %v1850, 32
    %v1859 = vpop.permute.xlu0 %1858
    %1860 = vrot.lane.b32.xlu0 %v1851, 32
    %v1861 = vpop.permute.xlu0 %1860
    %1862 = vrot.lane.b32.xlu0 %v1852, 32
    %v1863 = vpop.permute.xlu0 %1862
    %1864 = vrot.lane.b32.xlu0 %v1853, 32
    %v1865 = vpop.permute.xlu0 %1864
    %v1870 = vmul.f32 %v1783, %v1859
    %v1871 = vmul.f32 %v1785, %v1861
    %v1872 = vmul.f32 %v1787, %v1863
    %v1873 = vmul.f32 %v1789, %v1865
    %v1874 = vmul.f32 %v1870, %v1229
    %v1875 = vmul.f32 %v1871, %v1229
    %v1876 = vmul.f32 %v1872, %v1229
    %v1877 = vmul.f32 %v1873, %v1229
    %v1882 = vrot.slane %v1875, 7
    %v1883 = vsel %vm1243, %v1882, %v1874
    %v1884 = vrot.slane %v1876, 6
    %v1885 = vsel %vm1246, %v1884, %v1883
    %v1886 = vrot.slane %v1877, 5
    %vm1887 = vcmask 1044484
    %v1888 = vsel %vm1887, %v1886, %v1885
    %1889 = vrot.lane.b32.xlu0 %v1888, 64
    %v1890 = vpop.permute.xlu0 %1889
    %vm1892 = vcmask 258049
    %v1893 = vsel %vm1892, %v1890, 0.0
    %1894 = vadd.xlane.f32.xlu0 %v1893
    %v1895 = vpop.xlane.xlu0 %1894
    %v1900 = vrot.slane %v1870, 1
    %v1901 = vsel %vm1240, %v1871, %v1900
    %v1902 = vrot.slane %v1872, 7
    %v1903 = vsel %vm1243, %v1902, %v1901
    %v1904 = vrot.slane %v1873, 6
    %v1905 = vsel %vm1246, %v1904, %v1903
    %1906 = vrot.lane.b32.xlu0 %v1905, 64
    %v1907 = vpop.permute.xlu0 %1906
    %v1908 = vsel %vm626, %v1907, 0
    %1910 = vmatprep.subr.mxu0 0.0
    %v1911 = vand.u32 %v621, 4294901760
    %1912 = vmatpush1.msra.mxu0 %v1911
    %1913 = vmatprep.subr.mxu0 0.0
    %v1914 = vand.u32 %v622, 4294901760
    %1915 = vmatpush1.msra.mxu0 %v1914
    %1916 = vmatprep.subr.mxu0 0.0
    %v1917 = vand.u32 %v623, 4294901760
    %1918 = vmatpush1.msra.mxu0 %v1917
    %1919 = vmatprep.subr.mxu0 0.0
    %v1920 = vand.u32 %v624, 4294901760
    %1921 = vmatpush1.msra.mxu0 %v1920
    %1922 = vmatprep.subr.mxu0 0.0
    %1923 = vmatpush1.msra.mxu0 0.0
    %1924 = vmatprep.subr.mxu0 0.0
    %1925 = vmatpush1.msra.mxu0 0.0
    %1926 = vmatprep.subr.mxu0 0.0
    %1927 = vmatpush1.msra.mxu0 0.0
    %1928 = vmatprep.subr.mxu0 0.0
    %1929 = vmatpush1.msra.mxu0 0.0
    %1930 = vmatprep.subr.mxu0 0.0
    %1931 = vmatpush1.msra.mxu0 0.0
    %1932 = vmatprep.subr.mxu0 0.0
    %1933 = vmatpush1.msra.mxu0 0.0
    %1934 = vmatprep.subr.mxu0 0.0
    %1935 = vmatpush1.msra.mxu0 0.0
    %1936 = vmatprep.subr.mxu0 0.0
    %1937 = vmatpush1.msra.mxu0 0.0
    %1938 = vmatprep.subr.mxu0 0.0
    %1939 = vmatpush1.msra.mxu0 0.0
    %1940 = vmatprep.subr.mxu0 0.0
    %1941 = vmatpush1.msra.mxu0 0.0
    %1942 = vmatprep.subr.mxu0 0.0
    %1943 = vmatpush1.msra.mxu0 0.0
    %1944 = vmatprep.subr.mxu0 0.0
    %1945 = vmatpush1.msra.mxu0 0.0
    %1946 = vmatprep.subr.mxu0 0.0
    %1947 = vmatpush1.msra.mxu0 0.0
    %1948 = vmatprep.subr.mxu0 0.0
    %1949 = vmatpush1.msra.mxu0 0.0
    %1950 = vmatprep.subr.mxu0 0.0
    %1951 = vmatpush1.msra.mxu0 0.0
    %1952 = vmatprep.subr.mxu0 0.0
    %1953 = vmatpush1.msra.mxu0 0.0
    %1954 = vmatprep.subr.mxu0 0.0
    %1955 = vmatpush1.msra.mxu0 0.0
    %1956 = vmatprep.subr.mxu0 0.0
    %1957 = vmatpush1.msra.mxu0 0.0
    %1958 = vmatprep.subr.mxu0 0.0
    %1959 = vmatpush1.msra.mxu0 0.0
    %1960 = vmatprep.subr.mxu0 0.0
    %1961 = vmatpush1.msra.mxu0 0.0
    %1962 = vmatprep.subr.mxu0 0.0
    %1963 = vmatpush1.msra.mxu0 0.0
    %1964 = vmatprep.subr.mxu0 0.0
    %1965 = vmatpush1.msra.mxu0 0.0
    %1966 = vmatprep.subr.mxu0 0.0
    %1967 = vmatpush1.msra.mxu0 0.0
    %1968 = vmatprep.subr.mxu0 0.0
    %1969 = vmatpush1.msra.mxu0 0.0
    %1970 = vmatprep.subr.mxu0 0.0
    %1971 = vmatpush1.msra.mxu0 0.0
    %1972 = vmatprep.subr.mxu0 0.0
    %1973 = vmatpush1.msra.mxu0 0.0
    %1974 = vmatprep.subr.mxu0 0.0
    %1975 = vmatpush1.msra.mxu0 0.0
    %1976 = vmatprep.subr.mxu0 0.0
    %1977 = vmatpush1.msra.mxu0 0.0
    %1978 = vmatprep.mubr.f32.mxu0 0.0
    %v1979 = vand.u32 %v1908, 4294901760
    %v1980 = vsub.f32 %v1908, %v1979
    %v1981 = vand.u32 %v1980, 4294901760
    %v1982 = vsub.f32 %v1980, %v1981
    %v1983 = vand.u32 %v1982, 4294901760
    %1984 = vmatmul.mubr.f32.gmra.mrb[0].mxu0 %v1983
    %v1985 = vpop.f32.mrb[0].mxu0
    %v1986 = vadd.f32 0.0, %v1985
    %v1987 = vpop.f32.mrb[0].mxu0
    %1988 = vdwg.mxu0
    %1989 = vmatprep.subr.mxu0 0.0
    %v1990 = vand.u32 %v621, 4294901760
    %v1991 = vsub.f32 %v621, %v1990
    %v1992 = vand.u32 %v1991, 4294901760
    %v1993 = vsub.f32 %v1991, %v1992
    %v1994 = vand.u32 %v1993, 4294901760
    %1995 = vmatpush1.msra.mxu0 %v1994
    %1996 = vmatprep.subr.mxu0 0.0
    %v1997 = vand.u32 %v622, 4294901760
    %v1998 = vsub.f32 %v622, %v1997
    %v1999 = vand.u32 %v1998, 4294901760
    %v2000 = vsub.f32 %v1998, %v1999
    %v2001 = vand.u32 %v2000, 4294901760
    %2002 = vmatpush1.msra.mxu0 %v2001
    %2003 = vmatprep.subr.mxu0 0.0
    %v2004 = vand.u32 %v623, 4294901760
    %v2005 = vsub.f32 %v623, %v2004
    %v2006 = vand.u32 %v2005, 4294901760
    %v2007 = vsub.f32 %v2005, %v2006
    %v2008 = vand.u32 %v2007, 4294901760
    %2009 = vmatpush1.msra.mxu0 %v2008
    %2010 = vmatprep.subr.mxu0 0.0
    %v2011 = vand.u32 %v624, 4294901760
    %v2012 = vsub.f32 %v624, %v2011
    %v2013 = vand.u32 %v2012, 4294901760
    %v2014 = vsub.f32 %v2012, %v2013
    %v2015 = vand.u32 %v2014, 4294901760
    %2016 = vmatpush1.msra.mxu0 %v2015
    %2017 = vmatprep.subr.mxu0 0.0
    %2018 = vmatpush1.msra.mxu0 0.0
    %2019 = vmatprep.subr.mxu0 0.0
    %2020 = vmatpush1.msra.mxu0 0.0
    %2021 = vmatprep.subr.mxu0 0.0
    %2022 = vmatpush1.msra.mxu0 0.0
    %2023 = vmatprep.subr.mxu0 0.0
    %2024 = vmatpush1.msra.mxu0 0.0
    %2025 = vmatprep.subr.mxu0 0.0
    %2026 = vmatpush1.msra.mxu0 0.0
    %2027 = vmatprep.subr.mxu0 0.0
    %2028 = vmatpush1.msra.mxu0 0.0
    %2029 = vmatprep.subr.mxu0 0.0
    %2030 = vmatpush1.msra.mxu0 0.0
    %2031 = vmatprep.subr.mxu0 0.0
    %2032 = vmatpush1.msra.mxu0 0.0
    %2033 = vmatprep.subr.mxu0 0.0
    %2034 = vmatpush1.msra.mxu0 0.0
    %2035 = vmatprep.subr.mxu0 0.0
    %2036 = vmatpush1.msra.mxu0 0.0
    %2037 = vmatprep.subr.mxu0 0.0
    %2038 = vmatpush1.msra.mxu0 0.0
    %2039 = vmatprep.subr.mxu0 0.0
    %2040 = vmatpush1.msra.mxu0 0.0
    %2041 = vmatprep.subr.mxu0 0.0
    %2042 = vmatpush1.msra.mxu0 0.0
    %2043 = vmatprep.subr.mxu0 0.0
    %2044 = vmatpush1.msra.mxu0 0.0
    %2045 = vmatprep.subr.mxu0 0.0
    %2046 = vmatpush1.msra.mxu0 0.0
    %2047 = vmatprep.subr.mxu0 0.0
    %2048 = vmatpush1.msra.mxu0 0.0
    %2049 = vmatprep.subr.mxu0 0.0
    %2050 = vmatpush1.msra.mxu0 0.0
    %2051 = vmatprep.subr.mxu0 0.0
    %2052 = vmatpush1.msra.mxu0 0.0
    %2053 = vmatprep.subr.mxu0 0.0
    %2054 = vmatpush1.msra.mxu0 0.0
    %2055 = vmatprep.subr.mxu0 0.0
    %2056 = vmatpush1.msra.mxu0 0.0
    %2057 = vmatprep.subr.mxu0 0.0
    %2058 = vmatpush1.msra.mxu0 0.0
    %2059 = vmatprep.subr.mxu0 0.0
    %2060 = vmatpush1.msra.mxu0 0.0
    %2061 = vmatprep.subr.mxu0 0.0
    %2062 = vmatpush1.msra.mxu0 0.0
    %2063 = vmatprep.subr.mxu0 0.0
    %2064 = vmatpush1.msra.mxu0 0.0
    %2065 = vmatprep.subr.mxu0 0.0
    %2066 = vmatpush1.msra.mxu0 0.0
    %2067 = vmatprep.subr.mxu0 0.0
    %2068 = vmatpush1.msra.mxu0 0.0
    %2069 = vmatprep.subr.mxu0 0.0
    %2070 = vmatpush1.msra.mxu0 0.0
    %2071 = vmatprep.subr.mxu0 0.0
    %2072 = vmatpush1.msra.mxu0 0.0
    %2073 = vmatprep.mubr.f32.mxu0 0.0
    %v2074 = vand.u32 %v1908, 4294901760
    %2075 = vmatmul.mubr.f32.gmra.mrb[0].mxu0 %v2074
    %v2076 = vpop.f32.mrb[0].mxu0
    %v2077 = vadd.f32 %v1986, %v2076
    %v2078 = vpop.f32.mrb[0].mxu0
    %2079 = vdwg.mxu0
    %2080 = vmatprep.subr.mxu0 0.0
    %v2081 = vand.u32 %v621, 4294901760
    %v2082 = vsub.f32 %v621, %v2081
    %2083 = vmatpush1.msra.mxu0 %v2082
    %2084 = vmatprep.subr.mxu0 0.0
    %v2085 = vand.u32 %v622, 4294901760
    %v2086 = vsub.f32 %v622, %v2085
    %2087 = vmatpush1.msra.mxu0 %v2086
    %2088 = vmatprep.subr.mxu0 0.0
    %v2089 = vand.u32 %v623, 4294901760
    %v2090 = vsub.f32 %v623, %v2089
    %2091 = vmatpush1.msra.mxu0 %v2090
    %2092 = vmatprep.subr.mxu0 0.0
    %v2093 = vand.u32 %v624, 4294901760
    %v2094 = vsub.f32 %v624, %v2093
    %2095 = vmatpush1.msra.mxu0 %v2094
    %2096 = vmatprep.subr.mxu0 0.0
    %2097 = vmatpush1.msra.mxu0 0.0
    %2098 = vmatprep.subr.mxu0 0.0
    %2099 = vmatpush1.msra.mxu0 0.0
    %2100 = vmatprep.subr.mxu0 0.0
    %2101 = vmatpush1.msra.mxu0 0.0
    %2102 = vmatprep.subr.mxu0 0.0
    %2103 = vmatpush1.msra.mxu0 0.0
    %2104 = vmatprep.subr.mxu0 0.0
    %2105 = vmatpush1.msra.mxu0 0.0
    %2106 = vmatprep.subr.mxu0 0.0
    %2107 = vmatpush1.msra.mxu0 0.0
    %2108 = vmatprep.subr.mxu0 0.0
    %2109 = vmatpush1.msra.mxu0 0.0
    %2110 = vmatprep.subr.mxu0 0.0
    %2111 = vmatpush1.msra.mxu0 0.0
    %2112 = vmatprep.subr.mxu0 0.0
    %2113 = vmatpush1.msra.mxu0 0.0
    %2114 = vmatprep.subr.mxu0 0.0
    %2115 = vmatpush1.msra.mxu0 0.0
    %2116 = vmatprep.subr.mxu0 0.0
    %2117 = vmatpush1.msra.mxu0 0.0
    %2118 = vmatprep.subr.mxu0 0.0
    %2119 = vmatpush1.msra.mxu0 0.0
    %2120 = vmatprep.subr.mxu0 0.0
    %2121 = vmatpush1.msra.mxu0 0.0
    %2122 = vmatprep.subr.mxu0 0.0
    %2123 = vmatpush1.msra.mxu0 0.0
    %2124 = vmatprep.subr.mxu0 0.0
    %2125 = vmatpush1.msra.mxu0 0.0
    %2126 = vmatprep.subr.mxu0 0.0
    %2127 = vmatpush1.msra.mxu0 0.0
    %2128 = vmatprep.subr.mxu0 0.0
    %2129 = vmatpush1.msra.mxu0 0.0
    %2130 = vmatprep.subr.mxu0 0.0
    %2131 = vmatpush1.msra.mxu0 0.0
    %2132 = vmatprep.subr.mxu0 0.0
    %2133 = vmatpush1.msra.mxu0 0.0
    %2134 = vmatprep.subr.mxu0 0.0
    %2135 = vmatpush1.msra.mxu0 0.0
    %2136 = vmatprep.subr.mxu0 0.0
    %2137 = vmatpush1.msra.mxu0 0.0
    %2138 = vmatprep.subr.mxu0 0.0
    %2139 = vmatpush1.msra.mxu0 0.0
    %2140 = vmatprep.subr.mxu0 0.0
    %2141 = vmatpush1.msra.mxu0 0.0
    %2142 = vmatprep.subr.mxu0 0.0
    %2143 = vmatpush1.msra.mxu0 0.0
    %2144 = vmatprep.subr.mxu0 0.0
    %2145 = vmatpush1.msra.mxu0 0.0
    %2146 = vmatprep.subr.mxu0 0.0
    %2147 = vmatpush1.msra.mxu0 0.0
    %2148 = vmatprep.subr.mxu0 0.0
    %2149 = vmatpush1.msra.mxu0 0.0
    %2150 = vmatprep.subr.mxu0 0.0
    %2151 = vmatpush1.msra.mxu0 0.0
    %2152 = vmatprep.mubr.f32.mxu0 0.0
    %v2153 = vand.u32 %v1908, 4294901760
    %v2154 = vsub.f32 %v1908, %v2153
    %2155 = vmatmul.mubr.f32.gmra.mrb[0].mxu0 %v2154
    %v2156 = vpop.f32.mrb[0].mxu0
    %v2157 = vadd.f32 %v2077, %v2156
    %v2158 = vpop.f32.mrb[0].mxu0
    %2159 = vdwg.mxu0
    %2160 = vmatprep.subr.mxu0 0.0
    %v2161 = vand.u32 %v621, 4294901760
    %2162 = vmatpush1.msra.mxu0 %v2161
    %2163 = vmatprep.subr.mxu0 0.0
    %v2164 = vand.u32 %v622, 4294901760
    %2165 = vmatpush1.msra.mxu0 %v2164
    %2166 = vmatprep.subr.mxu0 0.0
    %v2167 = vand.u32 %v623, 4294901760
    %2168 = vmatpush1.msra.mxu0 %v2167
    %2169 = vmatprep.subr.mxu0 0.0
    %v2170 = vand.u32 %v624, 4294901760
    %2171 = vmatpush1.msra.mxu0 %v2170
    %2172 = vmatprep.subr.mxu0 0.0
    %2173 = vmatpush1.msra.mxu0 0.0
    %2174 = vmatprep.subr.mxu0 0.0
    %2175 = vmatpush1.msra.mxu0 0.0
    %2176 = vmatprep.subr.mxu0 0.0
    %2177 = vmatpush1.msra.mxu0 0.0
    %2178 = vmatprep.subr.mxu0 0.0
    %2179 = vmatpush1.msra.mxu0 0.0
    %2180 = vmatprep.subr.mxu0 0.0
    %2181 = vmatpush1.msra.mxu0 0.0
    %2182 = vmatprep.subr.mxu0 0.0
    %2183 = vmatpush1.msra.mxu0 0.0
    %2184 = vmatprep.subr.mxu0 0.0
    %2185 = vmatpush1.msra.mxu0 0.0
    %2186 = vmatprep.subr.mxu0 0.0
    %2187 = vmatpush1.msra.mxu0 0.0
    %2188 = vmatprep.subr.mxu0 0.0
    %2189 = vmatpush1.msra.mxu0 0.0
    %2190 = vmatprep.subr.mxu0 0.0
    %2191 = vmatpush1.msra.mxu0 0.0
    %2192 = vmatprep.subr.mxu0 0.0
    %2193 = vmatpush1.msra.mxu0 0.0
    %2194 = vmatprep.subr.mxu0 0.0
    %2195 = vmatpush1.msra.mxu0 0.0
    %2196 = vmatprep.subr.mxu0 0.0
    %2197 = vmatpush1.msra.mxu0 0.0
    %2198 = vmatprep.subr.mxu0 0.0
    %2199 = vmatpush1.msra.mxu0 0.0
    %2200 = vmatprep.subr.mxu0 0.0
    %2201 = vmatpush1.msra.mxu0 0.0
    %2202 = vmatprep.subr.mxu0 0.0
    %2203 = vmatpush1.msra.mxu0 0.0
    %2204 = vmatprep.subr.mxu0 0.0
    %2205 = vmatpush1.msra.mxu0 0.0
    %2206 = vmatprep.subr.mxu0 0.0
    %2207 = vmatpush1.msra.mxu0 0.0
    %2208 = vmatprep.subr.mxu0 0.0
    %2209 = vmatpush1.msra.mxu0 0.0
    %2210 = vmatprep.subr.mxu0 0.0
    %2211 = vmatpush1.msra.mxu0 0.0
    %2212 = vmatprep.subr.mxu0 0.0
    %2213 = vmatpush1.msra.mxu0 0.0
    %2214 = vmatprep.subr.mxu0 0.0
    %2215 = vmatpush1.msra.mxu0 0.0
    %2216 = vmatprep.subr.mxu0 0.0
    %2217 = vmatpush1.msra.mxu0 0.0
    %2218 = vmatprep.subr.mxu0 0.0
    %2219 = vmatpush1.msra.mxu0 0.0
    %2220 = vmatprep.subr.mxu0 0.0
    %2221 = vmatpush1.msra.mxu0 0.0
    %2222 = vmatprep.subr.mxu0 0.0
    %2223 = vmatpush1.msra.mxu0 0.0
    %2224 = vmatprep.subr.mxu0 0.0
    %2225 = vmatpush1.msra.mxu0 0.0
    %2226 = vmatprep.subr.mxu0 0.0
    %2227 = vmatpush1.msra.mxu0 0.0
    %2228 = vmatprep.mubr.f32.mxu0 0.0
    %v2229 = vand.u32 %v1908, 4294901760
    %v2230 = vsub.f32 %v1908, %v2229
    %v2231 = vand.u32 %v2230, 4294901760
    %2232 = vmatmul.mubr.f32.gmra.mrb[0].mxu0 %v2231
    %v2233 = vpop.f32.mrb[0].mxu0
    %v2234 = vadd.f32 %v2157, %v2233
    %v2235 = vpop.f32.mrb[0].mxu0
    %2236 = vdwg.mxu0
    %2237 = vmatprep.subr.mxu0 0.0
    %v2238 = vand.u32 %v621, 4294901760
    %v2239 = vsub.f32 %v621, %v2238
    %v2240 = vand.u32 %v2239, 4294901760
    %2241 = vmatpush1.msra.mxu0 %v2240
    %2242 = vmatprep.subr.mxu0 0.0
    %v2243 = vand.u32 %v622, 4294901760
    %v2244 = vsub.f32 %v622, %v2243
    %v2245 = vand.u32 %v2244, 4294901760
    %2246 = vmatpush1.msra.mxu0 %v2245
    %2247 = vmatprep.subr.mxu0 0.0
    %v2248 = vand.u32 %v623, 4294901760
    %v2249 = vsub.f32 %v623, %v2248
    %v2250 = vand.u32 %v2249, 4294901760
    %2251 = vmatpush1.msra.mxu0 %v2250
    %2252 = vmatprep.subr.mxu0 0.0
    %v2253 = vand.u32 %v624, 4294901760
    %v2254 = vsub.f32 %v624, %v2253
    %v2255 = vand.u32 %v2254, 4294901760
    %2256 = vmatpush1.msra.mxu0 %v2255
    %2257 = vmatprep.subr.mxu0 0.0
    %2258 = vmatpush1.msra.mxu0 0.0
    %2259 = vmatprep.subr.mxu0 0.0
    %2260 = vmatpush1.msra.mxu0 0.0
    %2261 = vmatprep.subr.mxu0 0.0
    %2262 = vmatpush1.msra.mxu0 0.0
    %2263 = vmatprep.subr.mxu0 0.0
    %2264 = vmatpush1.msra.mxu0 0.0
    %2265 = vmatprep.subr.mxu0 0.0
    %2266 = vmatpush1.msra.mxu0 0.0
    %2267 = vmatprep.subr.mxu0 0.0
    %2268 = vmatpush1.msra.mxu0 0.0
    %2269 = vmatprep.subr.mxu0 0.0
    %2270 = vmatpush1.msra.mxu0 0.0
    %2271 = vmatprep.subr.mxu0 0.0
    %2272 = vmatpush1.msra.mxu0 0.0
    %2273 = vmatprep.subr.mxu0 0.0
    %2274 = vmatpush1.msra.mxu0 0.0
    %2275 = vmatprep.subr.mxu0 0.0
    %2276 = vmatpush1.msra.mxu0 0.0
    %2277 = vmatprep.subr.mxu0 0.0
    %2278 = vmatpush1.msra.mxu0 0.0
    %2279 = vmatprep.subr.mxu0 0.0
    %2280 = vmatpush1.msra.mxu0 0.0
    %2281 = vmatprep.subr.mxu0 0.0
    %2282 = vmatpush1.msra.mxu0 0.0
    %2283 = vmatprep.subr.mxu0 0.0
    %2284 = vmatpush1.msra.mxu0 0.0
    %2285 = vmatprep.subr.mxu0 0.0
    %2286 = vmatpush1.msra.mxu0 0.0
    %2287 = vmatprep.subr.mxu0 0.0
    %2288 = vmatpush1.msra.mxu0 0.0
    %2289 = vmatprep.subr.mxu0 0.0
    %2290 = vmatpush1.msra.mxu0 0.0
    %2291 = vmatprep.subr.mxu0 0.0
    %2292 = vmatpush1.msra.mxu0 0.0
    %2293 = vmatprep.subr.mxu0 0.0
    %2294 = vmatpush1.msra.mxu0 0.0
    %2295 = vmatprep.subr.mxu0 0.0
    %2296 = vmatpush1.msra.mxu0 0.0
    %2297 = vmatprep.subr.mxu0 0.0
    %2298 = vmatpush1.msra.mxu0 0.0
    %2299 = vmatprep.subr.mxu0 0.0
    %2300 = vmatpush1.msra.mxu0 0.0
    %2301 = vmatprep.subr.mxu0 0.0
    %2302 = vmatpush1.msra.mxu0 0.0
    %2303 = vmatprep.subr.mxu0 0.0
    %2304 = vmatpush1.msra.mxu0 0.0
    %2305 = vmatprep.subr.mxu0 0.0
    %2306 = vmatpush1.msra.mxu0 0.0
    %2307 = vmatprep.subr.mxu0 0.0
    %2308 = vmatpush1.msra.mxu0 0.0
    %2309 = vmatprep.subr.mxu0 0.0
    %2310 = vmatpush1.msra.mxu0 0.0
    %2311 = vmatprep.subr.mxu0 0.0
    %2312 = vmatpush1.msra.mxu0 0.0
    %2313 = vmatprep.mubr.f32.mxu0 0.0
    %v2314 = vand.u32 %v1908, 4294901760
    %2315 = vmatmul.mubr.f32.gmra.mrb[0].mxu0 %v2314
    %v2316 = vpop.f32.mrb[0].mxu0
    %v2317 = vadd.f32 %v2234, %v2316
    %v2318 = vpop.f32.mrb[0].mxu0
    %2319 = vdwg.mxu0
    %2320 = vmatprep.subr.mxu0 0.0
    %v2321 = vand.u32 %v621, 4294901760
    %2322 = vmatpush1.msra.mxu0 %v2321
    %2323 = vmatprep.subr.mxu0 0.0
    %v2324 = vand.u32 %v622, 4294901760
    %2325 = vmatpush1.msra.mxu0 %v2324
    %2326 = vmatprep.subr.mxu0 0.0
    %v2327 = vand.u32 %v623, 4294901760
    %2328 = vmatpush1.msra.mxu0 %v2327
    %2329 = vmatprep.subr.mxu0 0.0
    %v2330 = vand.u32 %v624, 4294901760
    %2331 = vmatpush1.msra.mxu0 %v2330
    %2332 = vmatprep.subr.mxu0 0.0
    %2333 = vmatpush1.msra.mxu0 0.0
    %2334 = vmatprep.subr.mxu0 0.0
    %2335 = vmatpush1.msra.mxu0 0.0
    %2336 = vmatprep.subr.mxu0 0.0
    %2337 = vmatpush1.msra.mxu0 0.0
    %2338 = vmatprep.subr.mxu0 0.0
    %2339 = vmatpush1.msra.mxu0 0.0
    %2340 = vmatprep.subr.mxu0 0.0
    %2341 = vmatpush1.msra.mxu0 0.0
    %2342 = vmatprep.subr.mxu0 0.0
    %2343 = vmatpush1.msra.mxu0 0.0
    %2344 = vmatprep.subr.mxu0 0.0
    %2345 = vmatpush1.msra.mxu0 0.0
    %2346 = vmatprep.subr.mxu0 0.0
    %2347 = vmatpush1.msra.mxu0 0.0
    %2348 = vmatprep.subr.mxu0 0.0
    %2349 = vmatpush1.msra.mxu0 0.0
    %2350 = vmatprep.subr.mxu0 0.0
    %2351 = vmatpush1.msra.mxu0 0.0
    %2352 = vmatprep.subr.mxu0 0.0
    %2353 = vmatpush1.msra.mxu0 0.0
    %2354 = vmatprep.subr.mxu0 0.0
    %2355 = vmatpush1.msra.mxu0 0.0
    %2356 = vmatprep.subr.mxu0 0.0
    %2357 = vmatpush1.msra.mxu0 0.0
    %2358 = vmatprep.subr.mxu0 0.0
    %2359 = vmatpush1.msra.mxu0 0.0
    %2360 = vmatprep.subr.mxu0 0.0
    %2361 = vmatpush1.msra.mxu0 0.0
    %2362 = vmatprep.subr.mxu0 0.0
    %2363 = vmatpush1.msra.mxu0 0.0
    %2364 = vmatprep.subr.mxu0 0.0
    %2365 = vmatpush1.msra.mxu0 0.0
    %2366 = vmatprep.subr.mxu0 0.0
    %2367 = vmatpush1.msra.mxu0 0.0
    %2368 = vmatprep.subr.mxu0 0.0
    %2369 = vmatpush1.msra.mxu0 0.0
    %2370 = vmatprep.subr.mxu0 0.0
    %2371 = vmatpush1.msra.mxu0 0.0
    %2372 = vmatprep.subr.mxu0 0.0
    %2373 = vmatpush1.msra.mxu0 0.0
    %2374 = vmatprep.subr.mxu0 0.0
    %2375 = vmatpush1.msra.mxu0 0.0
    %2376 = vmatprep.subr.mxu0 0.0
    %2377 = vmatpush1.msra.mxu0 0.0
    %2378 = vmatprep.subr.mxu0 0.0
    %2379 = vmatpush1.msra.mxu0 0.0
    %2380 = vmatprep.subr.mxu0 0.0
    %2381 = vmatpush1.msra.mxu0 0.0
    %2382 = vmatprep.subr.mxu0 0.0
    %2383 = vmatpush1.msra.mxu0 0.0
    %2384 = vmatprep.subr.mxu0 0.0
    %2385 = vmatpush1.msra.mxu0 0.0
    %2386 = vmatprep.subr.mxu0 0.0
    %2387 = vmatpush1.msra.mxu0 0.0
    %2388 = vmatprep.mubr.f32.mxu0 0.0
    %v2389 = vand.u32 %v1908, 4294901760
    %2390 = vmatmul.mubr.f32.gmra.mrb[0].mxu0 %v2389
    %v2391 = vpop.f32.mrb[0].mxu0
    %v2392 = vadd.f32 %v2317, %v2391
    %v2393 = vpop.f32.mrb[0].mxu0
    %2394 = vdwg.mxu0
    %v2396 = vrot.slane %v2392, 6
    %v2397 = vrot.slane %v2392, 7
    %v2398 = vrot.slane %v2392, 1
    %v2403 = vadd.f32 %v600, %v2396
    %v2404 = vadd.f32 %v606, %v2397
    %v2405 = vadd.f32 %v612, %v2392
    %v2406 = vadd.f32 %v618, %v2398
    %v2407 = vxor.u32 %v2403, 2147483648
    %v2408 = vxor.u32 %v2404, 2147483648
    %v2409 = vxor.u32 %v2405, 2147483648
    %v2410 = vxor.u32 %v2406, 2147483648
    %v2411 = vmul.f32 %v2407, 1.442695
    %v2412 = vpow.pop %v2411
    %v2413 = vmul.f32 %v2408, 1.442695
    %v2414 = vpow.pop %v2413
    %v2415 = vmul.f32 %v2409, 1.442695
    %v2416 = vpow.pop %v2415
    %v2417 = vmul.f32 %v2410, 1.442695
    %v2418 = vpow.pop %v2417
    %v2419 = vadd.f32 %v2412, 1.0
    %v2420 = vadd.f32 %v2414, 1.0
    %v2421 = vadd.f32 %v2416, 1.0
    %v2422 = vadd.f32 %v2418, 1.0
    %v2423 = vrcp.pop %v2419
    %v2424 = vmul.f32 1.0, %v2423
    %v2425 = vrcp.pop %v2420
    %v2426 = vmul.f32 1.0, %v2425
    %v2427 = vrcp.pop %v2421
    %v2428 = vmul.f32 1.0, %v2427
    %v2429 = vrcp.pop %v2422
    %v2430 = vmul.f32 1.0, %v2429
    %v2431 = vtanh.pop %v2403
    %v2432 = vtanh.pop %v2404
    %v2433 = vtanh.pop %v2405
    %v2434 = vtanh.pop %v2406
    %v2439 = vrot.slane %v1846, 7
    %v2440 = vrot.slane %v1847, 7
    %v2441 = vrot.slane %v1848, 7
    %v2442 = vrot.slane %v1849, 7
    %v2447 = vmul.f32 %v2424, %v2439
    %v2448 = vmul.f32 %v2426, %v2440
    %v2449 = vmul.f32 %v2428, %v2441
    %v2450 = vmul.f32 %v2430, %v2442
    %2455 = vrot.lane.b32.xlu0 %v2431, 32
    %v2456 = vpop.permute.xlu0 %2455
    %2457 = vrot.lane.b32.xlu0 %v2432, 32
    %v2458 = vpop.permute.xlu0 %2457
    %2459 = vrot.lane.b32.xlu0 %v2433, 32
    %v2460 = vpop.permute.xlu0 %2459
    %2461 = vrot.lane.b32.xlu0 %v2434, 32
    %v2462 = vpop.permute.xlu0 %2461
    %v2467 = vmul.f32 %v2424, %v2456
    %v2468 = vmul.f32 %v2426, %v2458
    %v2469 = vmul.f32 %v2428, %v2460
    %v2470 = vmul.f32 %v2430, %v2462
    %2475 = vrot.lane.b32.xlu0 %v2467, 32
    %v2476 = vpop.permute.xlu0 %2475
    %2477 = vrot.lane.b32.xlu0 %v2468, 32
    %v2478 = vpop.permute.xlu0 %2477
    %2479 = vrot.lane.b32.xlu0 %v2469, 32
    %v2480 = vpop.permute.xlu0 %2479
    %2481 = vrot.lane.b32.xlu0 %v2470, 32
    %v2482 = vpop.permute.xlu0 %2481
    %v2487 = vadd.f32 %v2447, %v2476
    %v2488 = vadd.f32 %v2448, %v2478
    %v2489 = vadd.f32 %v2449, %v2480
    %v2490 = vadd.f32 %v2450, %v2482
    %v2491 = vtanh.pop %v2487
    %v2492 = vtanh.pop %v2488
    %v2493 = vtanh.pop %v2489
    %v2494 = vtanh.pop %v2490
    %2499 = vrot.lane.b32.xlu0 %v2491, 32
    %v2500 = vpop.permute.xlu0 %2499
    %2501 = vrot.lane.b32.xlu0 %v2492, 32
    %v2502 = vpop.permute.xlu0 %2501
    %2503 = vrot.lane.b32.xlu0 %v2493, 32
    %v2504 = vpop.permute.xlu0 %2503
    %2505 = vrot.lane.b32.xlu0 %v2494, 32
    %v2506 = vpop.permute.xlu0 %2505
    %v2511 = vmul.f32 %v2424, %v2500
    %v2512 = vmul.f32 %v2426, %v2502
    %v2513 = vmul.f32 %v2428, %v2504
    %v2514 = vmul.f32 %v2430, %v2506
    %v2515 = vmul.f32 %v2511, %v1229
    %v2516 = vmul.f32 %v2512, %v1229
    %v2517 = vmul.f32 %v2513, %v1229
    %v2518 = vmul.f32 %v2514, %v1229
    %v2523 = vrot.slane %v2516, 7
    %v2524 = vsel %vm1246, %v2523, %v2515
    %v2525 = vrot.slane %v2517, 6
    %v2526 = vsel %vm1887, %v2525, %v2524
    %v2527 = vrot.slane %v2518, 5
    %vm2528 = vcmask 1045509
    %v2529 = vsel %vm2528, %v2527, %v2526
    %2530 = vrot.lane.b32.xlu0 %v2529, 64
    %v2531 = vpop.permute.xlu0 %2530
    %vm2533 = vcmask 259074
    %v2534 = vsel %vm2533, %v2531, 0.0
    %2535 = vadd.xlane.f32.xlu0 %v2534
    %v2536 = vpop.xlane.xlu0 %2535
    %v2541 = vrot.slane %v2511, 2
    %v2542 = vrot.slane %v2512, 1
    %v2543 = vsel %vm1240, %v2542, %v2541
    %v2544 = vsel %vm1243, %v2513, %v2543
    %v2545 = vrot.slane %v2514, 7
    %v2546 = vsel %vm1246, %v2545, %v2544
    %2547 = vrot.lane.b32.xlu0 %v2546, 64
    %v2548 = vpop.permute.xlu0 %2547
    %v2549 = vsel %vm626, %v2548, 0
    %2551 = vmatprep.subr.mxu0 0.0
    %v2552 = vand.u32 %v621, 4294901760
    %2553 = vmatpush1.msra.mxu0 %v2552
    %2554 = vmatprep.subr.mxu0 0.0
    %v2555 = vand.u32 %v622, 4294901760
    %2556 = vmatpush1.msra.mxu0 %v2555
    %2557 = vmatprep.subr.mxu0 0.0
    %v2558 = vand.u32 %v623, 4294901760
    %2559 = vmatpush1.msra.mxu0 %v2558
    %2560 = vmatprep.subr.mxu0 0.0
    %v2561 = vand.u32 %v624, 4294901760
    %2562 = vmatpush1.msra.mxu0 %v2561
    %2563 = vmatprep.subr.mxu0 0.0
    %2564 = vmatpush1.msra.mxu0 0.0
    %2565 = vmatprep.subr.mxu0 0.0
    %2566 = vmatpush1.msra.mxu0 0.0
    %2567 = vmatprep.subr.mxu0 0.0
    %2568 = vmatpush1.msra.mxu0 0.0
    %2569 = vmatprep.subr.mxu0 0.0
    %2570 = vmatpush1.msra.mxu0 0.0
    %2571 = vmatprep.subr.mxu0 0.0
    %2572 = vmatpush1.msra.mxu0 0.0
    %2573 = vmatprep.subr.mxu0 0.0
    %2574 = vmatpush1.msra.mxu0 0.0
    %2575 = vmatprep.subr.mxu0 0.0
    %2576 = vmatpush1.msra.mxu0 0.0
    %2577 = vmatprep.subr.mxu0 0.0
    %2578 = vmatpush1.msra.mxu0 0.0
    %2579 = vmatprep.subr.mxu0 0.0
    %2580 = vmatpush1.msra.mxu0 0.0
    %2581 = vmatprep.subr.mxu0 0.0
    %2582 = vmatpush1.msra.mxu0 0.0
    %2583 = vmatprep.subr.mxu0 0.0
    %2584 = vmatpush1.msra.mxu0 0.0
    %2585 = vmatprep.subr.mxu0 0.0
    %2586 = vmatpush1.msra.mxu0 0.0
    %2587 = vmatprep.subr.mxu0 0.0
    %2588 = vmatpush1.msra.mxu0 0.0
    %2589 = vmatprep.subr.mxu0 0.0
    %2590 = vmatpush1.msra.mxu0 0.0
    %2591 = vmatprep.subr.mxu0 0.0
    %2592 = vmatpush1.msra.mxu0 0.0
    %2593 = vmatprep.subr.mxu0 0.0
    %2594 = vmatpush1.msra.mxu0 0.0
    %2595 = vmatprep.subr.mxu0 0.0
    %2596 = vmatpush1.msra.mxu0 0.0
    %2597 = vmatprep.subr.mxu0 0.0
    %2598 = vmatpush1.msra.mxu0 0.0
    %2599 = vmatprep.subr.mxu0 0.0
    %2600 = vmatpush1.msra.mxu0 0.0
    %2601 = vmatprep.subr.mxu0 0.0
    %2602 = vmatpush1.msra.mxu0 0.0
    %2603 = vmatprep.subr.mxu0 0.0
    %2604 = vmatpush1.msra.mxu0 0.0
    %2605 = vmatprep.subr.mxu0 0.0
    %2606 = vmatpush1.msra.mxu0 0.0
    %2607 = vmatprep.subr.mxu0 0.0
    %2608 = vmatpush1.msra.mxu0 0.0
    %2609 = vmatprep.subr.mxu0 0.0
    %2610 = vmatpush1.msra.mxu0 0.0
    %2611 = vmatprep.subr.mxu0 0.0
    %2612 = vmatpush1.msra.mxu0 0.0
    %2613 = vmatprep.subr.mxu0 0.0
    %2614 = vmatpush1.msra.mxu0 0.0
    %2615 = vmatprep.subr.mxu0 0.0
    %2616 = vmatpush1.msra.mxu0 0.0
    %2617 = vmatprep.subr.mxu0 0.0
    %2618 = vmatpush1.msra.mxu0 0.0
    %2619 = vmatprep.mubr.f32.mxu0 0.0
    %v2620 = vand.u32 %v2549, 4294901760
    %v2621 = vsub.f32 %v2549, %v2620
    %v2622 = vand.u32 %v2621, 4294901760
    %v2623 = vsub.f32 %v2621, %v2622
    %v2624 = vand.u32 %v2623, 4294901760
    %2625 = vmatmul.mubr.f32.gmra.mrb[0].mxu0 %v2624
    %v2626 = vpop.f32.mrb[0].mxu0
    %v2627 = vadd.f32 0.0, %v2626
    %v2628 = vpop.f32.mrb[0].mxu0
    %2629 = vdwg.mxu0
    %2630 = vmatprep.subr.mxu0 0.0
    %v2631 = vand.u32 %v621, 4294901760
    %v2632 = vsub.f32 %v621, %v2631
    %v2633 = vand.u32 %v2632, 4294901760
    %v2634 = vsub.f32 %v2632, %v2633
    %v2635 = vand.u32 %v2634, 4294901760
    %2636 = vmatpush1.msra.mxu0 %v2635
    %2637 = vmatprep.subr.mxu0 0.0
    %v2638 = vand.u32 %v622, 4294901760
    %v2639 = vsub.f32 %v622, %v2638
    %v2640 = vand.u32 %v2639, 4294901760
    %v2641 = vsub.f32 %v2639, %v2640
    %v2642 = vand.u32 %v2641, 4294901760
    %2643 = vmatpush1.msra.mxu0 %v2642
    %2644 = vmatprep.subr.mxu0 0.0
    %v2645 = vand.u32 %v623, 4294901760
    %v2646 = vsub.f32 %v623, %v2645
    %v2647 = vand.u32 %v2646, 4294901760
    %v2648 = vsub.f32 %v2646, %v2647
    %v2649 = vand.u32 %v2648, 4294901760
    %2650 = vmatpush1.msra.mxu0 %v2649
    %2651 = vmatprep.subr.mxu0 0.0
    %v2652 = vand.u32 %v624, 4294901760
    %v2653 = vsub.f32 %v624, %v2652
    %v2654 = vand.u32 %v2653, 4294901760
    %v2655 = vsub.f32 %v2653, %v2654
    %v2656 = vand.u32 %v2655, 4294901760
    %2657 = vmatpush1.msra.mxu0 %v2656
    %2658 = vmatprep.subr.mxu0 0.0
    %2659 = vmatpush1.msra.mxu0 0.0
    %2660 = vmatprep.subr.mxu0 0.0
    %2661 = vmatpush1.msra.mxu0 0.0
    %2662 = vmatprep.subr.mxu0 0.0
    %2663 = vmatpush1.msra.mxu0 0.0
    %2664 = vmatprep.subr.mxu0 0.0
    %2665 = vmatpush1.msra.mxu0 0.0
    %2666 = vmatprep.subr.mxu0 0.0
    %2667 = vmatpush1.msra.mxu0 0.0
    %2668 = vmatprep.subr.mxu0 0.0
    %2669 = vmatpush1.msra.mxu0 0.0
    %2670 = vmatprep.subr.mxu0 0.0
    %2671 = vmatpush1.msra.mxu0 0.0
    %2672 = vmatprep.subr.mxu0 0.0
    %2673 = vmatpush1.msra.mxu0 0.0
    %2674 = vmatprep.subr.mxu0 0.0
    %2675 = vmatpush1.msra.mxu0 0.0
    %2676 = vmatprep.subr.mxu0 0.0
    %2677 = vmatpush1.msra.mxu0 0.0
    %2678 = vmatprep.subr.mxu0 0.0
    %2679 = vmatpush1.msra.mxu0 0.0
    %2680 = vmatprep.subr.mxu0 0.0
    %2681 = vmatpush1.msra.mxu0 0.0
    %2682 = vmatprep.subr.mxu0 0.0
    %2683 = vmatpush1.msra.mxu0 0.0
    %2684 = vmatprep.subr.mxu0 0.0
    %2685 = vmatpush1.msra.mxu0 0.0
    %2686 = vmatprep.subr.mxu0 0.0
    %2687 = vmatpush1.msra.mxu0 0.0
    %2688 = vmatprep.subr.mxu0 0.0
    %2689 = vmatpush1.msra.mxu0 0.0
    %2690 = vmatprep.subr.mxu0 0.0
    %2691 = vmatpush1.msra.mxu0 0.0
    %2692 = vmatprep.subr.mxu0 0.0
    %2693 = vmatpush1.msra.mxu0 0.0
    %2694 = vmatprep.subr.mxu0 0.0
    %2695 = vmatpush1.msra.mxu0 0.0
    %2696 = vmatprep.subr.mxu0 0.0
    %2697 = vmatpush1.msra.mxu0 0.0
    %2698 = vmatprep.subr.mxu0 0.0
    %2699 = vmatpush1.msra.mxu0 0.0
    %2700 = vmatprep.subr.mxu0 0.0
    %2701 = vmatpush1.msra.mxu0 0.0
    %2702 = vmatprep.subr.mxu0 0.0
    %2703 = vmatpush1.msra.mxu0 0.0
    %2704 = vmatprep.subr.mxu0 0.0
    %2705 = vmatpush1.msra.mxu0 0.0
    %2706 = vmatprep.subr.mxu0 0.0
    %2707 = vmatpush1.msra.mxu0 0.0
    %2708 = vmatprep.subr.mxu0 0.0
    %2709 = vmatpush1.msra.mxu0 0.0
    %2710 = vmatprep.subr.mxu0 0.0
    %2711 = vmatpush1.msra.mxu0 0.0
    %2712 = vmatprep.subr.mxu0 0.0
    %2713 = vmatpush1.msra.mxu0 0.0
    %2714 = vmatprep.mubr.f32.mxu0 0.0
    %v2715 = vand.u32 %v2549, 4294901760
    %2716 = vmatmul.mubr.f32.gmra.mrb[0].mxu0 %v2715
    %v2717 = vpop.f32.mrb[0].mxu0
    %v2718 = vadd.f32 %v2627, %v2717
    %v2719 = vpop.f32.mrb[0].mxu0
    %2720 = vdwg.mxu0
    %2721 = vmatprep.subr.mxu0 0.0
    %v2722 = vand.u32 %v621, 4294901760
    %v2723 = vsub.f32 %v621, %v2722
    %2724 = vmatpush1.msra.mxu0 %v2723
    %2725 = vmatprep.subr.mxu0 0.0
    %v2726 = vand.u32 %v622, 4294901760
    %v2727 = vsub.f32 %v622, %v2726
    %2728 = vmatpush1.msra.mxu0 %v2727
    %2729 = vmatprep.subr.mxu0 0.0
    %v2730 = vand.u32 %v623, 4294901760
    %v2731 = vsub.f32 %v623, %v2730
    %2732 = vmatpush1.msra.mxu0 %v2731
    %2733 = vmatprep.subr.mxu0 0.0
    %v2734 = vand.u32 %v624, 4294901760
    %v2735 = vsub.f32 %v624, %v2734
    %2736 = vmatpush1.msra.mxu0 %v2735
    %2737 = vmatprep.subr.mxu0 0.0
    %2738 = vmatpush1.msra.mxu0 0.0
    %2739 = vmatprep.subr.mxu0 0.0
    %2740 = vmatpush1.msra.mxu0 0.0
    %2741 = vmatprep.subr.mxu0 0.0
    %2742 = vmatpush1.msra.mxu0 0.0
    %2743 = vmatprep.subr.mxu0 0.0
    %2744 = vmatpush1.msra.mxu0 0.0
    %2745 = vmatprep.subr.mxu0 0.0
    %2746 = vmatpush1.msra.mxu0 0.0
    %2747 = vmatprep.subr.mxu0 0.0
    %2748 = vmatpush1.msra.mxu0 0.0
    %2749 = vmatprep.subr.mxu0 0.0
    %2750 = vmatpush1.msra.mxu0 0.0
    %2751 = vmatprep.subr.mxu0 0.0
    %2752 = vmatpush1.msra.mxu0 0.0
    %2753 = vmatprep.subr.mxu0 0.0
    %2754 = vmatpush1.msra.mxu0 0.0
    %2755 = vmatprep.subr.mxu0 0.0
    %2756 = vmatpush1.msra.mxu0 0.0
    %2757 = vmatprep.subr.mxu0 0.0
    %2758 = vmatpush1.msra.mxu0 0.0
    %2759 = vmatprep.subr.mxu0 0.0
    %2760 = vmatpush1.msra.mxu0 0.0
    %2761 = vmatprep.subr.mxu0 0.0
    %2762 = vmatpush1.msra.mxu0 0.0
    %2763 = vmatprep.subr.mxu0 0.0
    %2764 = vmatpush1.msra.mxu0 0.0
    %2765 = vmatprep.subr.mxu0 0.0
    %2766 = vmatpush1.msra.mxu0 0.0
    %2767 = vmatprep.subr.mxu0 0.0
    %2768 = vmatpush1.msra.mxu0 0.0
    %2769 = vmatprep.subr.mxu0 0.0
    %2770 = vmatpush1.msra.mxu0 0.0
    %2771 = vmatprep.subr.mxu0 0.0
    %2772 = vmatpush1.msra.mxu0 0.0
    %2773 = vmatprep.subr.mxu0 0.0
    %2774 = vmatpush1.msra.mxu0 0.0
    %2775 = vmatprep.subr.mxu0 0.0
    %2776 = vmatpush1.msra.mxu0 0.0
    %2777 = vmatprep.subr.mxu0 0.0
    %2778 = vmatpush1.msra.mxu0 0.0
    %2779 = vmatprep.subr.mxu0 0.0
    %2780 = vmatpush1.msra.mxu0 0.0
    %2781 = vmatprep.subr.mxu0 0.0
    %2782 = vmatpush1.msra.mxu0 0.0
    %2783 = vmatprep.subr.mxu0 0.0
    %2784 = vmatpush1.msra.mxu0 0.0
    %2785 = vmatprep.subr.mxu0 0.0
    %2786 = vmatpush1.msra.mxu0 0.0
    %2787 = vmatprep.subr.mxu0 0.0
    %2788 = vmatpush1.msra.mxu0 0.0
    %2789 = vmatprep.subr.mxu0 0.0
    %2790 = vmatpush1.msra.mxu0 0.0
    %2791 = vmatprep.subr.mxu0 0.0
    %2792 = vmatpush1.msra.mxu0 0.0
    %2793 = vmatprep.mubr.f32.mxu0 0.0
    %v2794 = vand.u32 %v2549, 4294901760
    %v2795 = vsub.f32 %v2549, %v2794
    %2796 = vmatmul.mubr.f32.gmra.mrb[0].mxu0 %v2795
    %v2797 = vpop.f32.mrb[0].mxu0
    %v2798 = vadd.f32 %v2718, %v2797
    %v2799 = vpop.f32.mrb[0].mxu0
    %2800 = vdwg.mxu0
    %2801 = vmatprep.subr.mxu0 0.0
    %v2802 = vand.u32 %v621, 4294901760
    %2803 = vmatpush1.msra.mxu0 %v2802
    %2804 = vmatprep.subr.mxu0 0.0
    %v2805 = vand.u32 %v622, 4294901760
    %2806 = vmatpush1.msra.mxu0 %v2805
    %2807 = vmatprep.subr.mxu0 0.0
    %v2808 = vand.u32 %v623, 4294901760
    %2809 = vmatpush1.msra.mxu0 %v2808
    %2810 = vmatprep.subr.mxu0 0.0
    %v2811 = vand.u32 %v624, 4294901760
    %2812 = vmatpush1.msra.mxu0 %v2811
    %2813 = vmatprep.subr.mxu0 0.0
    %2814 = vmatpush1.msra.mxu0 0.0
    %2815 = vmatprep.subr.mxu0 0.0
    %2816 = vmatpush1.msra.mxu0 0.0
    %2817 = vmatprep.subr.mxu0 0.0
    %2818 = vmatpush1.msra.mxu0 0.0
    %2819 = vmatprep.subr.mxu0 0.0
    %2820 = vmatpush1.msra.mxu0 0.0
    %2821 = vmatprep.subr.mxu0 0.0
    %2822 = vmatpush1.msra.mxu0 0.0
    %2823 = vmatprep.subr.mxu0 0.0
    %2824 = vmatpush1.msra.mxu0 0.0
    %2825 = vmatprep.subr.mxu0 0.0
    %2826 = vmatpush1.msra.mxu0 0.0
    %2827 = vmatprep.subr.mxu0 0.0
    %2828 = vmatpush1.msra.mxu0 0.0
    %2829 = vmatprep.subr.mxu0 0.0
    %2830 = vmatpush1.msra.mxu0 0.0
    %2831 = vmatprep.subr.mxu0 0.0
    %2832 = vmatpush1.msra.mxu0 0.0
    %2833 = vmatprep.subr.mxu0 0.0
    %2834 = vmatpush1.msra.mxu0 0.0
    %2835 = vmatprep.subr.mxu0 0.0
    %2836 = vmatpush1.msra.mxu0 0.0
    %2837 = vmatprep.subr.mxu0 0.0
    %2838 = vmatpush1.msra.mxu0 0.0
    %2839 = vmatprep.subr.mxu0 0.0
    %2840 = vmatpush1.msra.mxu0 0.0
    %2841 = vmatprep.subr.mxu0 0.0
    %2842 = vmatpush1.msra.mxu0 0.0
    %2843 = vmatprep.subr.mxu0 0.0
    %2844 = vmatpush1.msra.mxu0 0.0
    %2845 = vmatprep.subr.mxu0 0.0
    %2846 = vmatpush1.msra.mxu0 0.0
    %2847 = vmatprep.subr.mxu0 0.0
    %2848 = vmatpush1.msra.mxu0 0.0
    %2849 = vmatprep.subr.mxu0 0.0
    %2850 = vmatpush1.msra.mxu0 0.0
    %2851 = vmatprep.subr.mxu0 0.0
    %2852 = vmatpush1.msra.mxu0 0.0
    %2853 = vmatprep.subr.mxu0 0.0
    %2854 = vmatpush1.msra.mxu0 0.0
    %2855 = vmatprep.subr.mxu0 0.0
    %2856 = vmatpush1.msra.mxu0 0.0
    %2857 = vmatprep.subr.mxu0 0.0
    %2858 = vmatpush1.msra.mxu0 0.0
    %2859 = vmatprep.subr.mxu0 0.0
    %2860 = vmatpush1.msra.mxu0 0.0
    %2861 = vmatprep.subr.mxu0 0.0
    %2862 = vmatpush1.msra.mxu0 0.0
    %2863 = vmatprep.subr.mxu0 0.0
    %2864 = vmatpush1.msra.mxu0 0.0
    %2865 = vmatprep.subr.mxu0 0.0
    %2866 = vmatpush1.msra.mxu0 0.0
    %2867 = vmatprep.subr.mxu0 0.0
    %2868 = vmatpush1.msra.mxu0 0.0
    %2869 = vmatprep.mubr.f32.mxu0 0.0
    %v2870 = vand.u32 %v2549, 4294901760
    %v2871 = vsub.f32 %v2549, %v2870
    %v2872 = vand.u32 %v2871, 4294901760
    %2873 = vmatmul.mubr.f32.gmra.mrb[0].mxu0 %v2872
    %v2874 = vpop.f32.mrb[0].mxu0
    %v2875 = vadd.f32 %v2798, %v2874
    %v2876 = vpop.f32.mrb[0].mxu0
    %2877 = vdwg.mxu0
    %2878 = vmatprep.subr.mxu0 0.0
    %v2879 = vand.u32 %v621, 4294901760
    %v2880 = vsub.f32 %v621, %v2879
    %v2881 = vand.u32 %v2880, 4294901760
    %2882 = vmatpush1.msra.mxu0 %v2881
    %2883 = vmatprep.subr.mxu0 0.0
    %v2884 = vand.u32 %v622, 4294901760
    %v2885 = vsub.f32 %v622, %v2884
    %v2886 = vand.u32 %v2885, 4294901760
    %2887 = vmatpush1.msra.mxu0 %v2886
    %2888 = vmatprep.subr.mxu0 0.0
    %v2889 = vand.u32 %v623, 4294901760
    %v2890 = vsub.f32 %v623, %v2889
    %v2891 = vand.u32 %v2890, 4294901760
    %2892 = vmatpush1.msra.mxu0 %v2891
    %2893 = vmatprep.subr.mxu0 0.0
    %v2894 = vand.u32 %v624, 4294901760
    %v2895 = vsub.f32 %v624, %v2894
    %v2896 = vand.u32 %v2895, 4294901760
    %2897 = vmatpush1.msra.mxu0 %v2896
    %2898 = vmatprep.subr.mxu0 0.0
    %2899 = vmatpush1.msra.mxu0 0.0
    %2900 = vmatprep.subr.mxu0 0.0
    %2901 = vmatpush1.msra.mxu0 0.0
    %2902 = vmatprep.subr.mxu0 0.0
    %2903 = vmatpush1.msra.mxu0 0.0
    %2904 = vmatprep.subr.mxu0 0.0
    %2905 = vmatpush1.msra.mxu0 0.0
    %2906 = vmatprep.subr.mxu0 0.0
    %2907 = vmatpush1.msra.mxu0 0.0
    %2908 = vmatprep.subr.mxu0 0.0
    %2909 = vmatpush1.msra.mxu0 0.0
    %2910 = vmatprep.subr.mxu0 0.0
    %2911 = vmatpush1.msra.mxu0 0.0
    %2912 = vmatprep.subr.mxu0 0.0
    %2913 = vmatpush1.msra.mxu0 0.0
    %2914 = vmatprep.subr.mxu0 0.0
    %2915 = vmatpush1.msra.mxu0 0.0
    %2916 = vmatprep.subr.mxu0 0.0
    %2917 = vmatpush1.msra.mxu0 0.0
    %2918 = vmatprep.subr.mxu0 0.0
    %2919 = vmatpush1.msra.mxu0 0.0
    %2920 = vmatprep.subr.mxu0 0.0
    %2921 = vmatpush1.msra.mxu0 0.0
    %2922 = vmatprep.subr.mxu0 0.0
    %2923 = vmatpush1.msra.mxu0 0.0
    %2924 = vmatprep.subr.mxu0 0.0
    %2925 = vmatpush1.msra.mxu0 0.0
    %2926 = vmatprep.subr.mxu0 0.0
    %2927 = vmatpush1.msra.mxu0 0.0
    %2928 = vmatprep.subr.mxu0 0.0
    %2929 = vmatpush1.msra.mxu0 0.0
    %2930 = vmatprep.subr.mxu0 0.0
    %2931 = vmatpush1.msra.mxu0 0.0
    %2932 = vmatprep.subr.mxu0 0.0
    %2933 = vmatpush1.msra.mxu0 0.0
    %2934 = vmatprep.subr.mxu0 0.0
    %2935 = vmatpush1.msra.mxu0 0.0
    %2936 = vmatprep.subr.mxu0 0.0
    %2937 = vmatpush1.msra.mxu0 0.0
    %2938 = vmatprep.subr.mxu0 0.0
    %2939 = vmatpush1.msra.mxu0 0.0
    %2940 = vmatprep.subr.mxu0 0.0
    %2941 = vmatpush1.msra.mxu0 0.0
    %2942 = vmatprep.subr.mxu0 0.0
    %2943 = vmatpush1.msra.mxu0 0.0
    %2944 = vmatprep.subr.mxu0 0.0
    %2945 = vmatpush1.msra.mxu0 0.0
    %2946 = vmatprep.subr.mxu0 0.0
    %2947 = vmatpush1.msra.mxu0 0.0
    %2948 = vmatprep.subr.mxu0 0.0
    %2949 = vmatpush1.msra.mxu0 0.0
    %2950 = vmatprep.subr.mxu0 0.0
    %2951 = vmatpush1.msra.mxu0 0.0
    %2952 = vmatprep.subr.mxu0 0.0
    %2953 = vmatpush1.msra.mxu0 0.0
    %2954 = vmatprep.mubr.f32.mxu0 0.0
    %v2955 = vand.u32 %v2549, 4294901760
    %2956 = vmatmul.mubr.f32.gmra.mrb[0].mxu0 %v2955
    %v2957 = vpop.f32.mrb[0].mxu0
    %v2958 = vadd.f32 %v2875, %v2957
    %v2959 = vpop.f32.mrb[0].mxu0
    %2960 = vdwg.mxu0
    %2961 = vmatprep.subr.mxu0 0.0
    %v2962 = vand.u32 %v621, 4294901760
    %2963 = vmatpush1.msra.mxu0 %v2962
    %2964 = vmatprep.subr.mxu0 0.0
    %v2965 = vand.u32 %v622, 4294901760
    %2966 = vmatpush1.msra.mxu0 %v2965
    %2967 = vmatprep.subr.mxu0 0.0
    %v2968 = vand.u32 %v623, 4294901760
    %2969 = vmatpush1.msra.mxu0 %v2968
    %2970 = vmatprep.subr.mxu0 0.0
    %v2971 = vand.u32 %v624, 4294901760
    %2972 = vmatpush1.msra.mxu0 %v2971
    %2973 = vmatprep.subr.mxu0 0.0
    %2974 = vmatpush1.msra.mxu0 0.0
    %2975 = vmatprep.subr.mxu0 0.0
    %2976 = vmatpush1.msra.mxu0 0.0
    %2977 = vmatprep.subr.mxu0 0.0
    %2978 = vmatpush1.msra.mxu0 0.0
    %2979 = vmatprep.subr.mxu0 0.0
    %2980 = vmatpush1.msra.mxu0 0.0
    %2981 = vmatprep.subr.mxu0 0.0
    %2982 = vmatpush1.msra.mxu0 0.0
    %2983 = vmatprep.subr.mxu0 0.0
    %2984 = vmatpush1.msra.mxu0 0.0
    %2985 = vmatprep.subr.mxu0 0.0
    %2986 = vmatpush1.msra.mxu0 0.0
    %2987 = vmatprep.subr.mxu0 0.0
    %2988 = vmatpush1.msra.mxu0 0.0
    %2989 = vmatprep.subr.mxu0 0.0
    %2990 = vmatpush1.msra.mxu0 0.0
    %2991 = vmatprep.subr.mxu0 0.0
    %2992 = vmatpush1.msra.mxu0 0.0
    %2993 = vmatprep.subr.mxu0 0.0
    %2994 = vmatpush1.msra.mxu0 0.0
    %2995 = vmatprep.subr.mxu0 0.0
    %2996 = vmatpush1.msra.mxu0 0.0
    %2997 = vmatprep.subr.mxu0 0.0
    %2998 = vmatpush1.msra.mxu0 0.0
    %2999 = vmatprep.subr.mxu0 0.0
    %3000 = vmatpush1.msra.mxu0 0.0
    %3001 = vmatprep.subr.mxu0 0.0
    %3002 = vmatpush1.msra.mxu0 0.0
    %3003 = vmatprep.subr.mxu0 0.0
    %3004 = vmatpush1.msra.mxu0 0.0
    %3005 = vmatprep.subr.mxu0 0.0
    %3006 = vmatpush1.msra.mxu0 0.0
    %3007 = vmatprep.subr.mxu0 0.0
    %3008 = vmatpush1.msra.mxu0 0.0
    %3009 = vmatprep.subr.mxu0 0.0
    %3010 = vmatpush1.msra.mxu0 0.0
    %3011 = vmatprep.subr.mxu0 0.0
    %3012 = vmatpush1.msra.mxu0 0.0
    %3013 = vmatprep.subr.mxu0 0.0
    %3014 = vmatpush1.msra.mxu0 0.0
    %3015 = vmatprep.subr.mxu0 0.0
    %3016 = vmatpush1.msra.mxu0 0.0
    %3017 = vmatprep.subr.mxu0 0.0
    %3018 = vmatpush1.msra.mxu0 0.0
    %3019 = vmatprep.subr.mxu0 0.0
    %3020 = vmatpush1.msra.mxu0 0.0
    %3021 = vmatprep.subr.mxu0 0.0
    %3022 = vmatpush1.msra.mxu0 0.0
    %3023 = vmatprep.subr.mxu0 0.0
    %3024 = vmatpush1.msra.mxu0 0.0
    %3025 = vmatprep.subr.mxu0 0.0
    %3026 = vmatpush1.msra.mxu0 0.0
    %3027 = vmatprep.subr.mxu0 0.0
    %3028 = vmatpush1.msra.mxu0 0.0
    %3029 = vmatprep.mubr.f32.mxu0 0.0
    %v3030 = vand.u32 %v2549, 4294901760
    %3031 = vmatmul.mubr.f32.gmra.mrb[0].mxu0 %v3030
    %v3032 = vpop.f32.mrb[0].mxu0
    %v3033 = vadd.f32 %v2958, %v3032
    %v3034 = vpop.f32.mrb[0].mxu0
    %3035 = vdwg.mxu0
    %v3037 = vrot.slane %v3033, 5
    %v3038 = vrot.slane %v3033, 6
    %v3039 = vrot.slane %v3033, 7
    %v3044 = vadd.f32 %v600, %v3037
    %v3045 = vadd.f32 %v606, %v3038
    %v3046 = vadd.f32 %v612, %v3039
    %v3047 = vadd.f32 %v618, %v3033
    %v3048 = vxor.u32 %v3044, 2147483648
    %v3049 = vxor.u32 %v3045, 2147483648
    %v3050 = vxor.u32 %v3046, 2147483648
    %v3051 = vxor.u32 %v3047, 2147483648
    %v3052 = vmul.f32 %v3048, 1.442695
    %v3053 = vpow.pop %v3052
    %v3054 = vmul.f32 %v3049, 1.442695
    %v3055 = vpow.pop %v3054
    %v3056 = vmul.f32 %v3050, 1.442695
    %v3057 = vpow.pop %v3056
    %v3058 = vmul.f32 %v3051, 1.442695
    %v3059 = vpow.pop %v3058
    %v3060 = vadd.f32 %v3053, 1.0
    %v3061 = vadd.f32 %v3055, 1.0
    %v3062 = vadd.f32 %v3057, 1.0
    %v3063 = vadd.f32 %v3059, 1.0
    %v3064 = vrcp.pop %v3060
    %v3065 = vmul.f32 1.0, %v3064
    %v3066 = vrcp.pop %v3061
    %v3067 = vmul.f32 1.0, %v3066
    %v3068 = vrcp.pop %v3062
    %v3069 = vmul.f32 1.0, %v3068
    %v3070 = vrcp.pop %v3063
    %v3071 = vmul.f32 1.0, %v3070
    %v3072 = vtanh.pop %v3044
    %v3073 = vtanh.pop %v3045
    %v3074 = vtanh.pop %v3046
    %v3075 = vtanh.pop %v3047
    %v3080 = vrot.slane %v2487, 7
    %v3081 = vrot.slane %v2488, 7
    %v3082 = vrot.slane %v2489, 7
    %v3083 = vrot.slane %v2490, 7
    %v3088 = vmul.f32 %v3065, %v3080
    %v3089 = vmul.f32 %v3067, %v3081
    %v3090 = vmul.f32 %v3069, %v3082
    %v3091 = vmul.f32 %v3071, %v3083
    %3096 = vrot.lane.b32.xlu0 %v3072, 32
    %v3097 = vpop.permute.xlu0 %3096
    %3098 = vrot.lane.b32.xlu0 %v3073, 32
    %v3099 = vpop.permute.xlu0 %3098
    %3100 = vrot.lane.b32.xlu0 %v3074, 32
    %v3101 = vpop.permute.xlu0 %3100
    %3102 = vrot.lane.b32.xlu0 %v3075, 32
    %v3103 = vpop.permute.xlu0 %3102
    %v3108 = vmul.f32 %v3065, %v3097
    %v3109 = vmul.f32 %v3067, %v3099
    %v3110 = vmul.f32 %v3069, %v3101
    %v3111 = vmul.f32 %v3071, %v3103
    %3116 = vrot.lane.b32.xlu0 %v3108, 32
    %v3117 = vpop.permute.xlu0 %3116
    %3118 = vrot.lane.b32.xlu0 %v3109, 32
    %v3119 = vpop.permute.xlu0 %3118
    %3120 = vrot.lane.b32.xlu0 %v3110, 32
    %v3121 = vpop.permute.xlu0 %3120
    %3122 = vrot.lane.b32.xlu0 %v3111, 32
    %v3123 = vpop.permute.xlu0 %3122
    %v3128 = vadd.f32 %v3088, %v3117
    %v3129 = vadd.f32 %v3089, %v3119
    %v3130 = vadd.f32 %v3090, %v3121
    %v3131 = vadd.f32 %v3091, %v3123
    %v3132 = vtanh.pop %v3128
    %v3133 = vtanh.pop %v3129
    %v3134 = vtanh.pop %v3130
    %v3135 = vtanh.pop %v3131
    %3140 = vrot.lane.b32.xlu0 %v3132, 32
    %v3141 = vpop.permute.xlu0 %3140
    %3142 = vrot.lane.b32.xlu0 %v3133, 32
    %v3143 = vpop.permute.xlu0 %3142
    %3144 = vrot.lane.b32.xlu0 %v3134, 32
    %v3145 = vpop.permute.xlu0 %3144
    %3146 = vrot.lane.b32.xlu0 %v3135, 32
    %v3147 = vpop.permute.xlu0 %3146
    %v3152 = vmul.f32 %v3065, %v3141
    %v3153 = vmul.f32 %v3067, %v3143
    %v3154 = vmul.f32 %v3069, %v3145
    %v3155 = vmul.f32 %v3071, %v3147
    %v3156 = vmul.f32 %v3152, %v1229
    %v3157 = vmul.f32 %v3153, %v1229
    %v3158 = vmul.f32 %v3154, %v1229
    %v3159 = vmul.f32 %v3155, %v1229
    %v3164 = vrot.slane %v3157, 7
    %v3165 = vsel %vm1887, %v3164, %v3156
    %v3166 = vrot.slane %v3158, 6
    %v3167 = vsel %vm2528, %v3166, %v3165
    %v3168 = vrot.slane %v3159, 5
    %vm3169 = vcmask 1046534
    %v3170 = vsel %vm3169, %v3168, %v3167
    %3171 = vrot.lane.b32.xlu0 %v3170, 64
    %v3172 = vpop.permute.xlu0 %3171
    %vm3174 = vcmask 260099
    %v3175 = vsel %vm3174, %v3172, 0.0
    %3176 = vadd.xlane.f32.xlu0 %v3175
    %v3177 = vpop.xlane.xlu0 %3176
    %v3182 = vrot.slane %v3152, 3
    %v3183 = vrot.slane %v3153, 2
    %v3184 = vsel %vm1240, %v3183, %v3182
    %v3185 = vrot.slane %v3154, 1
    %v3186 = vsel %vm1243, %v3185, %v3184
    %v3187 = vsel %vm1246, %v3155, %v3186
    %3188 = vrot.lane.b32.xlu0 %v3187, 64
    %v3189 = vpop.permute.xlu0 %3188
    %v3190 = vsel %vm626, %v3189, 0
    %3192 = vmatprep.subr.mxu0 0.0
    %v3193 = vand.u32 %v621, 4294901760
    %3194 = vmatpush1.msra.mxu0 %v3193
    %3195 = vmatprep.subr.mxu0 0.0
    %v3196 = vand.u32 %v622, 4294901760
    %3197 = vmatpush1.msra.mxu0 %v3196
    %3198 = vmatprep.subr.mxu0 0.0
    %v3199 = vand.u32 %v623, 4294901760
    %3200 = vmatpush1.msra.mxu0 %v3199
    %3201 = vmatprep.subr.mxu0 0.0
    %v3202 = vand.u32 %v624, 4294901760
    %3203 = vmatpush1.msra.mxu0 %v3202
    %3204 = vmatprep.subr.mxu0 0.0
    %3205 = vmatpush1.msra.mxu0 0.0
    %3206 = vmatprep.subr.mxu0 0.0
    %3207 = vmatpush1.msra.mxu0 0.0
    %3208 = vmatprep.subr.mxu0 0.0
    %3209 = vmatpush1.msra.mxu0 0.0
    %3210 = vmatprep.subr.mxu0 0.0
    %3211 = vmatpush1.msra.mxu0 0.0
    %3212 = vmatprep.subr.mxu0 0.0
    %3213 = vmatpush1.msra.mxu0 0.0
    %3214 = vmatprep.subr.mxu0 0.0
    %3215 = vmatpush1.msra.mxu0 0.0
    %3216 = vmatprep.subr.mxu0 0.0
    %3217 = vmatpush1.msra.mxu0 0.0
    %3218 = vmatprep.subr.mxu0 0.0
    %3219 = vmatpush1.msra.mxu0 0.0
    %3220 = vmatprep.subr.mxu0 0.0
    %3221 = vmatpush1.msra.mxu0 0.0
    %3222 = vmatprep.subr.mxu0 0.0
    %3223 = vmatpush1.msra.mxu0 0.0
    %3224 = vmatprep.subr.mxu0 0.0
    %3225 = vmatpush1.msra.mxu0 0.0
    %3226 = vmatprep.subr.mxu0 0.0
    %3227 = vmatpush1.msra.mxu0 0.0
    %3228 = vmatprep.subr.mxu0 0.0
    %3229 = vmatpush1.msra.mxu0 0.0
    %3230 = vmatprep.subr.mxu0 0.0
    %3231 = vmatpush1.msra.mxu0 0.0
    %3232 = vmatprep.subr.mxu0 0.0
    %3233 = vmatpush1.msra.mxu0 0.0
    %3234 = vmatprep.subr.mxu0 0.0
    %3235 = vmatpush1.msra.mxu0 0.0
    %3236 = vmatprep.subr.mxu0 0.0
    %3237 = vmatpush1.msra.mxu0 0.0
    %3238 = vmatprep.subr.mxu0 0.0
    %3239 = vmatpush1.msra.mxu0 0.0
    %3240 = vmatprep.subr.mxu0 0.0
    %3241 = vmatpush1.msra.mxu0 0.0
    %3242 = vmatprep.subr.mxu0 0.0
    %3243 = vmatpush1.msra.mxu0 0.0
    %3244 = vmatprep.subr.mxu0 0.0
    %3245 = vmatpush1.msra.mxu0 0.0
    %3246 = vmatprep.subr.mxu0 0.0
    %3247 = vmatpush1.msra.mxu0 0.0
    %3248 = vmatprep.subr.mxu0 0.0
    %3249 = vmatpush1.msra.mxu0 0.0
    %3250 = vmatprep.subr.mxu0 0.0
    %3251 = vmatpush1.msra.mxu0 0.0
    %3252 = vmatprep.subr.mxu0 0.0
    %3253 = vmatpush1.msra.mxu0 0.0
    %3254 = vmatprep.subr.mxu0 0.0
    %3255 = vmatpush1.msra.mxu0 0.0
    %3256 = vmatprep.subr.mxu0 0.0
    %3257 = vmatpush1.msra.mxu0 0.0
    %3258 = vmatprep.subr.mxu0 0.0
    %3259 = vmatpush1.msra.mxu0 0.0
    %3260 = vmatprep.mubr.f32.mxu0 0.0
    %v3261 = vand.u32 %v3190, 4294901760
    %v3262 = vsub.f32 %v3190, %v3261
    %v3263 = vand.u32 %v3262, 4294901760
    %v3264 = vsub.f32 %v3262, %v3263
    %v3265 = vand.u32 %v3264, 4294901760
    %3266 = vmatmul.mubr.f32.gmra.mrb[0].mxu0 %v3265
    %v3267 = vpop.f32.mrb[0].mxu0
    %v3268 = vadd.f32 0.0, %v3267
    %v3269 = vpop.f32.mrb[0].mxu0
    %3270 = vdwg.mxu0
    %3271 = vmatprep.subr.mxu0 0.0
    %v3272 = vand.u32 %v621, 4294901760
    %v3273 = vsub.f32 %v621, %v3272
    %v3274 = vand.u32 %v3273, 4294901760
    %v3275 = vsub.f32 %v3273, %v3274
    %v3276 = vand.u32 %v3275, 4294901760
    %3277 = vmatpush1.msra.mxu0 %v3276
    %3278 = vmatprep.subr.mxu0 0.0
    %v3279 = vand.u32 %v622, 4294901760
    %v3280 = vsub.f32 %v622, %v3279
    %v3281 = vand.u32 %v3280, 4294901760
    %v3282 = vsub.f32 %v3280, %v3281
    %v3283 = vand.u32 %v3282, 4294901760
    %3284 = vmatpush1.msra.mxu0 %v3283
    %3285 = vmatprep.subr.mxu0 0.0
    %v3286 = vand.u32 %v623, 4294901760
    %v3287 = vsub.f32 %v623, %v3286
    %v3288 = vand.u32 %v3287, 4294901760
    %v3289 = vsub.f32 %v3287, %v3288
    %v3290 = vand.u32 %v3289, 4294901760
    %3291 = vmatpush1.msra.mxu0 %v3290
    %3292 = vmatprep.subr.mxu0 0.0
    %v3293 = vand.u32 %v624, 4294901760
    %v3294 = vsub.f32 %v624, %v3293
    %v3295 = vand.u32 %v3294, 4294901760
    %v3296 = vsub.f32 %v3294, %v3295
    %v3297 = vand.u32 %v3296, 4294901760
    %3298 = vmatpush1.msra.mxu0 %v3297
    %3299 = vmatprep.subr.mxu0 0.0
    %3300 = vmatpush1.msra.mxu0 0.0
    %3301 = vmatprep.subr.mxu0 0.0
    %3302 = vmatpush1.msra.mxu0 0.0
    %3303 = vmatprep.subr.mxu0 0.0
    %3304 = vmatpush1.msra.mxu0 0.0
    %3305 = vmatprep.subr.mxu0 0.0
    %3306 = vmatpush1.msra.mxu0 0.0
    %3307 = vmatprep.subr.mxu0 0.0
    %3308 = vmatpush1.msra.mxu0 0.0
    %3309 = vmatprep.subr.mxu0 0.0
    %3310 = vmatpush1.msra.mxu0 0.0
    %3311 = vmatprep.subr.mxu0 0.0
    %3312 = vmatpush1.msra.mxu0 0.0
    %3313 = vmatprep.subr.mxu0 0.0
    %3314 = vmatpush1.msra.mxu0 0.0
    %3315 = vmatprep.subr.mxu0 0.0
    %3316 = vmatpush1.msra.mxu0 0.0
    %3317 = vmatprep.subr.mxu0 0.0
    %3318 = vmatpush1.msra.mxu0 0.0
    %3319 = vmatprep.subr.mxu0 0.0
    %3320 = vmatpush1.msra.mxu0 0.0
    %3321 = vmatprep.subr.mxu0 0.0
    %3322 = vmatpush1.msra.mxu0 0.0
    %3323 = vmatprep.subr.mxu0 0.0
    %3324 = vmatpush1.msra.mxu0 0.0
    %3325 = vmatprep.subr.mxu0 0.0
    %3326 = vmatpush1.msra.mxu0 0.0
    %3327 = vmatprep.subr.mxu0 0.0
    %3328 = vmatpush1.msra.mxu0 0.0
    %3329 = vmatprep.subr.mxu0 0.0
    %3330 = vmatpush1.msra.mxu0 0.0
    %3331 = vmatprep.subr.mxu0 0.0
    %3332 = vmatpush1.msra.mxu0 0.0
    %3333 = vmatprep.subr.mxu0 0.0
    %3334 = vmatpush1.msra.mxu0 0.0
    %3335 = vmatprep.subr.mxu0 0.0
    %3336 = vmatpush1.msra.mxu0 0.0
    %3337 = vmatprep.subr.mxu0 0.0
    %3338 = vmatpush1.msra.mxu0 0.0
    %3339 = vmatprep.subr.mxu0 0.0
    %3340 = vmatpush1.msra.mxu0 0.0
    %3341 = vmatprep.subr.mxu0 0.0
    %3342 = vmatpush1.msra.mxu0 0.0
    %3343 = vmatprep.subr.mxu0 0.0
    %3344 = vmatpush1.msra.mxu0 0.0
    %3345 = vmatprep.subr.mxu0 0.0
    %3346 = vmatpush1.msra.mxu0 0.0
    %3347 = vmatprep.subr.mxu0 0.0
    %3348 = vmatpush1.msra.mxu0 0.0
    %3349 = vmatprep.subr.mxu0 0.0
    %3350 = vmatpush1.msra.mxu0 0.0
    %3351 = vmatprep.subr.mxu0 0.0
    %3352 = vmatpush1.msra.mxu0 0.0
    %3353 = vmatprep.subr.mxu0 0.0
    %3354 = vmatpush1.msra.mxu0 0.0
    %3355 = vmatprep.mubr.f32.mxu0 0.0
    %v3356 = vand.u32 %v3190, 4294901760
    %3357 = vmatmul.mubr.f32.gmra.mrb[0].mxu0 %v3356
    %v3358 = vpop.f32.mrb[0].mxu0
    %v3359 = vadd.f32 %v3268, %v3358
    %v3360 = vpop.f32.mrb[0].mxu0
    %3361 = vdwg.mxu0
    %3362 = vmatprep.subr.mxu0 0.0
    %v3363 = vand.u32 %v621, 4294901760
    %v3364 = vsub.f32 %v621, %v3363
    %3365 = vmatpush1.msra.mxu0 %v3364
    %3366 = vmatprep.subr.mxu0 0.0
    %v3367 = vand.u32 %v622, 4294901760
    %v3368 = vsub.f32 %v622, %v3367
    %3369 = vmatpush1.msra.mxu0 %v3368
    %3370 = vmatprep.subr.mxu0 0.0
    %v3371 = vand.u32 %v623, 4294901760
    %v3372 = vsub.f32 %v623, %v3371
    %3373 = vmatpush1.msra.mxu0 %v3372
    %3374 = vmatprep.subr.mxu0 0.0
    %v3375 = vand.u32 %v624, 4294901760
    %v3376 = vsub.f32 %v624, %v3375
    %3377 = vmatpush1.msra.mxu0 %v3376
    %3378 = vmatprep.subr.mxu0 0.0
    %3379 = vmatpush1.msra.mxu0 0.0
    %3380 = vmatprep.subr.mxu0 0.0
    %3381 = vmatpush1.msra.mxu0 0.0
    %3382 = vmatprep.subr.mxu0 0.0
    %3383 = vmatpush1.msra.mxu0 0.0
    %3384 = vmatprep.subr.mxu0 0.0
    %3385 = vmatpush1.msra.mxu0 0.0
    %3386 = vmatprep.subr.mxu0 0.0
    %3387 = vmatpush1.msra.mxu0 0.0
    %3388 = vmatprep.subr.mxu0 0.0
    %3389 = vmatpush1.msra.mxu0 0.0
    %3390 = vmatprep.subr.mxu0 0.0
    %3391 = vmatpush1.msra.mxu0 0.0
    %3392 = vmatprep.subr.mxu0 0.0
    %3393 = vmatpush1.msra.mxu0 0.0
    %3394 = vmatprep.subr.mxu0 0.0
    %3395 = vmatpush1.msra.mxu0 0.0
    %3396 = vmatprep.subr.mxu0 0.0
    %3397 = vmatpush1.msra.mxu0 0.0
    %3398 = vmatprep.subr.mxu0 0.0
    %3399 = vmatpush1.msra.mxu0 0.0
    %3400 = vmatprep.subr.mxu0 0.0
    %3401 = vmatpush1.msra.mxu0 0.0
    %3402 = vmatprep.subr.mxu0 0.0
    %3403 = vmatpush1.msra.mxu0 0.0
    %3404 = vmatprep.subr.mxu0 0.0
    %3405 = vmatpush1.msra.mxu0 0.0
    %3406 = vmatprep.subr.mxu0 0.0
    %3407 = vmatpush1.msra.mxu0 0.0
    %3408 = vmatprep.subr.mxu0 0.0
    %3409 = vmatpush1.msra.mxu0 0.0
    %3410 = vmatprep.subr.mxu0 0.0
    %3411 = vmatpush1.msra.mxu0 0.0
    %3412 = vmatprep.subr.mxu0 0.0
    %3413 = vmatpush1.msra.mxu0 0.0
    %3414 = vmatprep.subr.mxu0 0.0
    %3415 = vmatpush1.msra.mxu0 0.0
    %3416 = vmatprep.subr.mxu0 0.0
    %3417 = vmatpush1.msra.mxu0 0.0
    %3418 = vmatprep.subr.mxu0 0.0
    %3419 = vmatpush1.msra.mxu0 0.0
    %3420 = vmatprep.subr.mxu0 0.0
    %3421 = vmatpush1.msra.mxu0 0.0
    %3422 = vmatprep.subr.mxu0 0.0
    %3423 = vmatpush1.msra.mxu0 0.0
    %3424 = vmatprep.subr.mxu0 0.0
    %3425 = vmatpush1.msra.mxu0 0.0
    %3426 = vmatprep.subr.mxu0 0.0
    %3427 = vmatpush1.msra.mxu0 0.0
    %3428 = vmatprep.subr.mxu0 0.0
    %3429 = vmatpush1.msra.mxu0 0.0
    %3430 = vmatprep.subr.mxu0 0.0
    %3431 = vmatpush1.msra.mxu0 0.0
    %3432 = vmatprep.subr.mxu0 0.0
    %3433 = vmatpush1.msra.mxu0 0.0
    %3434 = vmatprep.mubr.f32.mxu0 0.0
    %v3435 = vand.u32 %v3190, 4294901760
    %v3436 = vsub.f32 %v3190, %v3435
    %3437 = vmatmul.mubr.f32.gmra.mrb[0].mxu0 %v3436
    %v3438 = vpop.f32.mrb[0].mxu0
    %v3439 = vadd.f32 %v3359, %v3438
    %v3440 = vpop.f32.mrb[0].mxu0
    %3441 = vdwg.mxu0
    %3442 = vmatprep.subr.mxu0 0.0
    %v3443 = vand.u32 %v621, 4294901760
    %3444 = vmatpush1.msra.mxu0 %v3443
    %3445 = vmatprep.subr.mxu0 0.0
    %v3446 = vand.u32 %v622, 4294901760
    %3447 = vmatpush1.msra.mxu0 %v3446
    %3448 = vmatprep.subr.mxu0 0.0
    %v3449 = vand.u32 %v623, 4294901760
    %3450 = vmatpush1.msra.mxu0 %v3449
    %3451 = vmatprep.subr.mxu0 0.0
    %v3452 = vand.u32 %v624, 4294901760
    %3453 = vmatpush1.msra.mxu0 %v3452
    %3454 = vmatprep.subr.mxu0 0.0
    %3455 = vmatpush1.msra.mxu0 0.0
    %3456 = vmatprep.subr.mxu0 0.0
    %3457 = vmatpush1.msra.mxu0 0.0
    %3458 = vmatprep.subr.mxu0 0.0
    %3459 = vmatpush1.msra.mxu0 0.0
    %3460 = vmatprep.subr.mxu0 0.0
    %3461 = vmatpush1.msra.mxu0 0.0
    %3462 = vmatprep.subr.mxu0 0.0
    %3463 = vmatpush1.msra.mxu0 0.0
    %3464 = vmatprep.subr.mxu0 0.0
    %3465 = vmatpush1.msra.mxu0 0.0
    %3466 = vmatprep.subr.mxu0 0.0
    %3467 = vmatpush1.msra.mxu0 0.0
    %3468 = vmatprep.subr.mxu0 0.0
    %3469 = vmatpush1.msra.mxu0 0.0
    %3470 = vmatprep.subr.mxu0 0.0
    %3471 = vmatpush1.msra.mxu0 0.0
    %3472 = vmatprep.subr.mxu0 0.0
    %3473 = vmatpush1.msra.mxu0 0.0
    %3474 = vmatprep.subr.mxu0 0.0
    %3475 = vmatpush1.msra.mxu0 0.0
    %3476 = vmatprep.subr.mxu0 0.0
    %3477 = vmatpush1.msra.mxu0 0.0
    %3478 = vmatprep.subr.mxu0 0.0
    %3479 = vmatpush1.msra.mxu0 0.0
    %3480 = vmatprep.subr.mxu0 0.0
    %3481 = vmatpush1.msra.mxu0 0.0
    %3482 = vmatprep.subr.mxu0 0.0
    %3483 = vmatpush1.msra.mxu0 0.0
    %3484 = vmatprep.subr.mxu0 0.0
    %3485 = vmatpush1.msra.mxu0 0.0
    %3486 = vmatprep.subr.mxu0 0.0
    %3487 = vmatpush1.msra.mxu0 0.0
    %3488 = vmatprep.subr.mxu0 0.0
    %3489 = vmatpush1.msra.mxu0 0.0
    %3490 = vmatprep.subr.mxu0 0.0
    %3491 = vmatpush1.msra.mxu0 0.0
    %3492 = vmatprep.subr.mxu0 0.0
    %3493 = vmatpush1.msra.mxu0 0.0
    %3494 = vmatprep.subr.mxu0 0.0
    %3495 = vmatpush1.msra.mxu0 0.0
    %3496 = vmatprep.subr.mxu0 0.0
    %3497 = vmatpush1.msra.mxu0 0.0
    %3498 = vmatprep.subr.mxu0 0.0
    %3499 = vmatpush1.msra.mxu0 0.0
    %3500 = vmatprep.subr.mxu0 0.0
    %3501 = vmatpush1.msra.mxu0 0.0
    %3502 = vmatprep.subr.mxu0 0.0
    %3503 = vmatpush1.msra.mxu0 0.0
    %3504 = vmatprep.subr.mxu0 0.0
    %3505 = vmatpush1.msra.mxu0 0.0
    %3506 = vmatprep.subr.mxu0 0.0
    %3507 = vmatpush1.msra.mxu0 0.0
    %3508 = vmatprep.subr.mxu0 0.0
    %3509 = vmatpush1.msra.mxu0 0.0
    %3510 = vmatprep.mubr.f32.mxu0 0.0
    %v3511 = vand.u32 %v3190, 4294901760
    %v3512 = vsub.f32 %v3190, %v3511
    %v3513 = vand.u32 %v3512, 4294901760
    %3514 = vmatmul.mubr.f32.gmra.mrb[0].mxu0 %v3513
    %v3515 = vpop.f32.mrb[0].mxu0
    %v3516 = vadd.f32 %v3439, %v3515
    %v3517 = vpop.f32.mrb[0].mxu0
    %3518 = vdwg.mxu0
    %3519 = vmatprep.subr.mxu0 0.0
    %v3520 = vand.u32 %v621, 4294901760
    %v3521 = vsub.f32 %v621, %v3520
    %v3522 = vand.u32 %v3521, 4294901760
    %3523 = vmatpush1.msra.mxu0 %v3522
    %3524 = vmatprep.subr.mxu0 0.0
    %v3525 = vand.u32 %v622, 4294901760
    %v3526 = vsub.f32 %v622, %v3525
    %v3527 = vand.u32 %v3526, 4294901760
    %3528 = vmatpush1.msra.mxu0 %v3527
    %3529 = vmatprep.subr.mxu0 0.0
    %v3530 = vand.u32 %v623, 4294901760
    %v3531 = vsub.f32 %v623, %v3530
    %v3532 = vand.u32 %v3531, 4294901760
    %3533 = vmatpush1.msra.mxu0 %v3532
    %3534 = vmatprep.subr.mxu0 0.0
    %v3535 = vand.u32 %v624, 4294901760
    %v3536 = vsub.f32 %v624, %v3535
    %v3537 = vand.u32 %v3536, 4294901760
    %3538 = vmatpush1.msra.mxu0 %v3537
    %3539 = vmatprep.subr.mxu0 0.0
    %3540 = vmatpush1.msra.mxu0 0.0
    %3541 = vmatprep.subr.mxu0 0.0
    %3542 = vmatpush1.msra.mxu0 0.0
    %3543 = vmatprep.subr.mxu0 0.0
    %3544 = vmatpush1.msra.mxu0 0.0
    %3545 = vmatprep.subr.mxu0 0.0
    %3546 = vmatpush1.msra.mxu0 0.0
    %3547 = vmatprep.subr.mxu0 0.0
    %3548 = vmatpush1.msra.mxu0 0.0
    %3549 = vmatprep.subr.mxu0 0.0
    %3550 = vmatpush1.msra.mxu0 0.0
    %3551 = vmatprep.subr.mxu0 0.0
    %3552 = vmatpush1.msra.mxu0 0.0
    %3553 = vmatprep.subr.mxu0 0.0
    %3554 = vmatpush1.msra.mxu0 0.0
    %3555 = vmatprep.subr.mxu0 0.0
    %3556 = vmatpush1.msra.mxu0 0.0
    %3557 = vmatprep.subr.mxu0 0.0
    %3558 = vmatpush1.msra.mxu0 0.0
    %3559 = vmatprep.subr.mxu0 0.0
    %3560 = vmatpush1.msra.mxu0 0.0
    %3561 = vmatprep.subr.mxu0 0.0
    %3562 = vmatpush1.msra.mxu0 0.0
    %3563 = vmatprep.subr.mxu0 0.0
    %3564 = vmatpush1.msra.mxu0 0.0
    %3565 = vmatprep.subr.mxu0 0.0
    %3566 = vmatpush1.msra.mxu0 0.0
    %3567 = vmatprep.subr.mxu0 0.0
    %3568 = vmatpush1.msra.mxu0 0.0
    %3569 = vmatprep.subr.mxu0 0.0
    %3570 = vmatpush1.msra.mxu0 0.0
    %3571 = vmatprep.subr.mxu0 0.0
    %3572 = vmatpush1.msra.mxu0 0.0
    %3573 = vmatprep.subr.mxu0 0.0
    %3574 = vmatpush1.msra.mxu0 0.0
    %3575 = vmatprep.subr.mxu0 0.0
    %3576 = vmatpush1.msra.mxu0 0.0
    %3577 = vmatprep.subr.mxu0 0.0
    %3578 = vmatpush1.msra.mxu0 0.0
    %3579 = vmatprep.subr.mxu0 0.0
    %3580 = vmatpush1.msra.mxu0 0.0
    %3581 = vmatprep.subr.mxu0 0.0
    %3582 = vmatpush1.msra.mxu0 0.0
    %3583 = vmatprep.subr.mxu0 0.0
    %3584 = vmatpush1.msra.mxu0 0.0
    %3585 = vmatprep.subr.mxu0 0.0
    %3586 = vmatpush1.msra.mxu0 0.0
    %3587 = vmatprep.subr.mxu0 0.0
    %3588 = vmatpush1.msra.mxu0 0.0
    %3589 = vmatprep.subr.mxu0 0.0
    %3590 = vmatpush1.msra.mxu0 0.0
    %3591 = vmatprep.subr.mxu0 0.0
    %3592 = vmatpush1.msra.mxu0 0.0
    %3593 = vmatprep.subr.mxu0 0.0
    %3594 = vmatpush1.msra.mxu0 0.0
    %3595 = vmatprep.mubr.f32.mxu0 0.0
    %v3596 = vand.u32 %v3190, 4294901760
    %3597 = vmatmul.mubr.f32.gmra.mrb[0].mxu0 %v3596
    %v3598 = vpop.f32.mrb[0].mxu0
    %v3599 = vadd.f32 %v3516, %v3598
    %v3600 = vpop.f32.mrb[0].mxu0
    %3601 = vdwg.mxu0
    %3602 = vmatprep.subr.mxu0 0.0
    %v3603 = vand.u32 %v621, 4294901760
    %3604 = vmatpush1.msra.mxu0 %v3603
    %3605 = vmatprep.subr.mxu0 0.0
    %v3606 = vand.u32 %v622, 4294901760
    %3607 = vmatpush1.msra.mxu0 %v3606
    %3608 = vmatprep.subr.mxu0 0.0
    %v3609 = vand.u32 %v623, 4294901760
    %3610 = vmatpush1.msra.mxu0 %v3609
    %3611 = vmatprep.subr.mxu0 0.0
    %v3612 = vand.u32 %v624, 4294901760
    %3613 = vmatpush1.msra.mxu0 %v3612
    %3614 = vmatprep.subr.mxu0 0.0
    %3615 = vmatpush1.msra.mxu0 0.0
    %3616 = vmatprep.subr.mxu0 0.0
    %3617 = vmatpush1.msra.mxu0 0.0
    %3618 = vmatprep.subr.mxu0 0.0
    %3619 = vmatpush1.msra.mxu0 0.0
    %3620 = vmatprep.subr.mxu0 0.0
    %3621 = vmatpush1.msra.mxu0 0.0
    %3622 = vmatprep.subr.mxu0 0.0
    %3623 = vmatpush1.msra.mxu0 0.0
    %3624 = vmatprep.subr.mxu0 0.0
    %3625 = vmatpush1.msra.mxu0 0.0
    %3626 = vmatprep.subr.mxu0 0.0
    %3627 = vmatpush1.msra.mxu0 0.0
    %3628 = vmatprep.subr.mxu0 0.0
    %3629 = vmatpush1.msra.mxu0 0.0
    %3630 = vmatprep.subr.mxu0 0.0
    %3631 = vmatpush1.msra.mxu0 0.0
    %3632 = vmatprep.subr.mxu0 0.0
    %3633 = vmatpush1.msra.mxu0 0.0
    %3634 = vmatprep.subr.mxu0 0.0
    %3635 = vmatpush1.msra.mxu0 0.0
    %3636 = vmatprep.subr.mxu0 0.0
    %3637 = vmatpush1.msra.mxu0 0.0
    %3638 = vmatprep.subr.mxu0 0.0
    %3639 = vmatpush1.msra.mxu0 0.0
    %3640 = vmatprep.subr.mxu0 0.0
    %3641 = vmatpush1.msra.mxu0 0.0
    %3642 = vmatprep.subr.mxu0 0.0
    %3643 = vmatpush1.msra.mxu0 0.0
    %3644 = vmatprep.subr.mxu0 0.0
    %3645 = vmatpush1.msra.mxu0 0.0
    %3646 = vmatprep.subr.mxu0 0.0
    %3647 = vmatpush1.msra.mxu0 0.0
    %3648 = vmatprep.subr.mxu0 0.0
    %3649 = vmatpush1.msra.mxu0 0.0
    %3650 = vmatprep.subr.mxu0 0.0
    %3651 = vmatpush1.msra.mxu0 0.0
    %3652 = vmatprep.subr.mxu0 0.0
    %3653 = vmatpush1.msra.mxu0 0.0
    %3654 = vmatprep.subr.mxu0 0.0
    %3655 = vmatpush1.msra.mxu0 0.0
    %3656 = vmatprep.subr.mxu0 0.0
    %3657 = vmatpush1.msra.mxu0 0.0
    %3658 = vmatprep.subr.mxu0 0.0
    %3659 = vmatpush1.msra.mxu0 0.0
    %3660 = vmatprep.subr.mxu0 0.0
    %3661 = vmatpush1.msra.mxu0 0.0
    %3662 = vmatprep.subr.mxu0 0.0
    %3663 = vmatpush1.msra.mxu0 0.0
    %3664 = vmatprep.subr.mxu0 0.0
    %3665 = vmatpush1.msra.mxu0 0.0
    %3666 = vmatprep.subr.mxu0 0.0
    %3667 = vmatpush1.msra.mxu0 0.0
    %3668 = vmatprep.subr.mxu0 0.0
    %3669 = vmatpush1.msra.mxu0 0.0
    %3670 = vmatprep.mubr.f32.mxu0 0.0
    %v3671 = vand.u32 %v3190, 4294901760
    %3672 = vmatmul.mubr.f32.gmra.mrb[0].mxu0 %v3671
    %v3673 = vpop.f32.mrb[0].mxu0
    %v3674 = vadd.f32 %v3599, %v3673
    %v3675 = vpop.f32.mrb[0].mxu0
    %3676 = vdwg.mxu0
    %v3678 = vrot.slane %v3674, 4
    %v3679 = vrot.slane %v3674, 5
    %v3680 = vrot.slane %v3674, 6
    %v3681 = vrot.slane %v3674, 7
    %v3686 = vadd.f32 %v600, %v3678
    %v3687 = vadd.f32 %v606, %v3679
    %v3688 = vadd.f32 %v612, %v3680
    %v3689 = vadd.f32 %v618, %v3681
    %v3690 = vxor.u32 %v3686, 2147483648
    %v3691 = vxor.u32 %v3687, 2147483648
    %v3692 = vxor.u32 %v3688, 2147483648
    %v3693 = vxor.u32 %v3689, 2147483648
    %v3694 = vmul.f32 %v3690, 1.442695
    %v3695 = vpow.pop %v3694
    %v3696 = vmul.f32 %v3691, 1.442695
    %v3697 = vpow.pop %v3696
    %v3698 = vmul.f32 %v3692, 1.442695
    %v3699 = vpow.pop %v3698
    %v3700 = vmul.f32 %v3693, 1.442695
    %v3701 = vpow.pop %v3700
    %v3702 = vadd.f32 %v3695, 1.0
    %v3703 = vadd.f32 %v3697, 1.0
    %v3704 = vadd.f32 %v3699, 1.0
    %v3705 = vadd.f32 %v3701, 1.0
    %v3706 = vrcp.pop %v3702
    %v3707 = vmul.f32 1.0, %v3706
    %v3708 = vrcp.pop %v3703
    %v3709 = vmul.f32 1.0, %v3708
    %v3710 = vrcp.pop %v3704
    %v3711 = vmul.f32 1.0, %v3710
    %v3712 = vrcp.pop %v3705
    %v3713 = vmul.f32 1.0, %v3712
    %v3714 = vtanh.pop %v3686
    %v3715 = vtanh.pop %v3687
    %v3716 = vtanh.pop %v3688
    %v3717 = vtanh.pop %v3689
    %v3722 = vrot.slane %v3128, 7
    %v3723 = vrot.slane %v3129, 7
    %v3724 = vrot.slane %v3130, 7
    %v3725 = vrot.slane %v3131, 7
    %v3730 = vmul.f32 %v3707, %v3722
    %v3731 = vmul.f32 %v3709, %v3723
    %v3732 = vmul.f32 %v3711, %v3724
    %v3733 = vmul.f32 %v3713, %v3725
    %3738 = vrot.lane.b32.xlu0 %v3714, 32
    %v3739 = vpop.permute.xlu0 %3738
    %3740 = vrot.lane.b32.xlu0 %v3715, 32
    %v3741 = vpop.permute.xlu0 %3740
    %3742 = vrot.lane.b32.xlu0 %v3716, 32
    %v3743 = vpop.permute.xlu0 %3742
    %3744 = vrot.lane.b32.xlu0 %v3717, 32
    %v3745 = vpop.permute.xlu0 %3744
    %v3750 = vmul.f32 %v3707, %v3739
    %v3751 = vmul.f32 %v3709, %v3741
    %v3752 = vmul.f32 %v3711, %v3743
    %v3753 = vmul.f32 %v3713, %v3745
    %3758 = vrot.lane.b32.xlu0 %v3750, 32
    %v3759 = vpop.permute.xlu0 %3758
    %3760 = vrot.lane.b32.xlu0 %v3751, 32
    %v3761 = vpop.permute.xlu0 %3760
    %3762 = vrot.lane.b32.xlu0 %v3752, 32
    %v3763 = vpop.permute.xlu0 %3762
    %3764 = vrot.lane.b32.xlu0 %v3753, 32
    %v3765 = vpop.permute.xlu0 %3764
    %v3770 = vadd.f32 %v3730, %v3759
    %v3771 = vadd.f32 %v3731, %v3761
    %v3772 = vadd.f32 %v3732, %v3763
    %v3773 = vadd.f32 %v3733, %v3765
    %v3774 = vtanh.pop %v3770
    %v3775 = vtanh.pop %v3771
    %v3776 = vtanh.pop %v3772
    %v3777 = vtanh.pop %v3773
    %3782 = vrot.lane.b32.xlu0 %v3774, 32
    %v3783 = vpop.permute.xlu0 %3782
    %3784 = vrot.lane.b32.xlu0 %v3775, 32
    %v3785 = vpop.permute.xlu0 %3784
    %3786 = vrot.lane.b32.xlu0 %v3776, 32
    %v3787 = vpop.permute.xlu0 %3786
    %3788 = vrot.lane.b32.xlu0 %v3777, 32
    %v3789 = vpop.permute.xlu0 %3788
    %v3794 = vmul.f32 %v3707, %v3783
    %v3795 = vmul.f32 %v3709, %v3785
    %v3796 = vmul.f32 %v3711, %v3787
    %v3797 = vmul.f32 %v3713, %v3789
    %v3798 = vmul.f32 %v3794, %v1229
    %v3799 = vmul.f32 %v3795, %v1229
    %v3800 = vmul.f32 %v3796, %v1229
    %v3801 = vmul.f32 %v3797, %v1229
    %v3806 = vrot.slane %v3799, 7
    %v3807 = vsel %vm2528, %v3806, %v3798
    %v3808 = vrot.slane %v3800, 6
    %v3809 = vsel %vm3169, %v3808, %v3807
    %v3810 = vrot.slane %v3801, 5
    %vm3811 = vcmask 1047559
    %v3812 = vsel %vm3811, %v3810, %v3809
    %3813 = vrot.lane.b32.xlu0 %v3812, 64
    %v3814 = vpop.permute.xlu0 %3813
    %vm3816 = vcmask 261124
    %v3817 = vsel %vm3816, %v3814, 0.0
    %3818 = vadd.xlane.f32.xlu0 %v3817
    %v3819 = vpop.xlane.xlu0 %3818
    %v3824 = vrot.slane %v3794, 4
    %v3825 = vrot.slane %v3795, 3
    %v3826 = vsel %vm1240, %v3825, %v3824
    %v3827 = vrot.slane %v3796, 2
    %v3828 = vsel %vm1243, %v3827, %v3826
    %v3829 = vrot.slane %v3797, 1
    %v3830 = vsel %vm1246, %v3829, %v3828
    %3831 = vrot.lane.b32.xlu0 %v3830, 64
    %v3832 = vpop.permute.xlu0 %3831
    %v3833 = vsel %vm626, %v3832, 0
    %3835 = vmatprep.subr.mxu0 0.0
    %v3836 = vand.u32 %v621, 4294901760
    %3837 = vmatpush1.msra.mxu0 %v3836
    %3838 = vmatprep.subr.mxu0 0.0
    %v3839 = vand.u32 %v622, 4294901760
    %3840 = vmatpush1.msra.mxu0 %v3839
    %3841 = vmatprep.subr.mxu0 0.0
    %v3842 = vand.u32 %v623, 4294901760
    %3843 = vmatpush1.msra.mxu0 %v3842
    %3844 = vmatprep.subr.mxu0 0.0
    %v3845 = vand.u32 %v624, 4294901760
    %3846 = vmatpush1.msra.mxu0 %v3845
    %3847 = vmatprep.subr.mxu0 0.0
    %3848 = vmatpush1.msra.mxu0 0.0
    %3849 = vmatprep.subr.mxu0 0.0
    %3850 = vmatpush1.msra.mxu0 0.0
    %3851 = vmatprep.subr.mxu0 0.0
    %3852 = vmatpush1.msra.mxu0 0.0
    %3853 = vmatprep.subr.mxu0 0.0
    %3854 = vmatpush1.msra.mxu0 0.0
    %3855 = vmatprep.subr.mxu0 0.0
    %3856 = vmatpush1.msra.mxu0 0.0
    %3857 = vmatprep.subr.mxu0 0.0
    %3858 = vmatpush1.msra.mxu0 0.0
    %3859 = vmatprep.subr.mxu0 0.0
    %3860 = vmatpush1.msra.mxu0 0.0
    %3861 = vmatprep.subr.mxu0 0.0
    %3862 = vmatpush1.msra.mxu0 0.0
    %3863 = vmatprep.subr.mxu0 0.0
    %3864 = vmatpush1.msra.mxu0 0.0
    %3865 = vmatprep.subr.mxu0 0.0
    %3866 = vmatpush1.msra.mxu0 0.0
    %3867 = vmatprep.subr.mxu0 0.0
    %3868 = vmatpush1.msra.mxu0 0.0
    %3869 = vmatprep.subr.mxu0 0.0
    %3870 = vmatpush1.msra.mxu0 0.0
    %3871 = vmatprep.subr.mxu0 0.0
    %3872 = vmatpush1.msra.mxu0 0.0
    %3873 = vmatprep.subr.mxu0 0.0
    %3874 = vmatpush1.msra.mxu0 0.0
    %3875 = vmatprep.subr.mxu0 0.0
    %3876 = vmatpush1.msra.mxu0 0.0
    %3877 = vmatprep.subr.mxu0 0.0
    %3878 = vmatpush1.msra.mxu0 0.0
    %3879 = vmatprep.subr.mxu0 0.0
    %3880 = vmatpush1.msra.mxu0 0.0
    %3881 = vmatprep.subr.mxu0 0.0
    %3882 = vmatpush1.msra.mxu0 0.0
    %3883 = vmatprep.subr.mxu0 0.0
    %3884 = vmatpush1.msra.mxu0 0.0
    %3885 = vmatprep.subr.mxu0 0.0
    %3886 = vmatpush1.msra.mxu0 0.0
    %3887 = vmatprep.subr.mxu0 0.0
    %3888 = vmatpush1.msra.mxu0 0.0
    %3889 = vmatprep.subr.mxu0 0.0
    %3890 = vmatpush1.msra.mxu0 0.0
    %3891 = vmatprep.subr.mxu0 0.0
    %3892 = vmatpush1.msra.mxu0 0.0
    %3893 = vmatprep.subr.mxu0 0.0
    %3894 = vmatpush1.msra.mxu0 0.0
    %3895 = vmatprep.subr.mxu0 0.0
    %3896 = vmatpush1.msra.mxu0 0.0
    %3897 = vmatprep.subr.mxu0 0.0
    %3898 = vmatpush1.msra.mxu0 0.0
    %3899 = vmatprep.subr.mxu0 0.0
    %3900 = vmatpush1.msra.mxu0 0.0
    %3901 = vmatprep.subr.mxu0 0.0
    %3902 = vmatpush1.msra.mxu0 0.0
    %3903 = vmatprep.mubr.f32.mxu0 0.0
    %v3904 = vand.u32 %v3833, 4294901760
    %v3905 = vsub.f32 %v3833, %v3904
    %v3906 = vand.u32 %v3905, 4294901760
    %v3907 = vsub.f32 %v3905, %v3906
    %v3908 = vand.u32 %v3907, 4294901760
    %3909 = vmatmul.mubr.f32.gmra.mrb[0].mxu0 %v3908
    %v3910 = vpop.f32.mrb[0].mxu0
    %v3911 = vadd.f32 0.0, %v3910
    %v3912 = vpop.f32.mrb[0].mxu0
    %3913 = vdwg.mxu0
    %3914 = vmatprep.subr.mxu0 0.0
    %v3915 = vand.u32 %v621, 4294901760
    %v3916 = vsub.f32 %v621, %v3915
    %v3917 = vand.u32 %v3916, 4294901760
    %v3918 = vsub.f32 %v3916, %v3917
    %v3919 = vand.u32 %v3918, 4294901760
    %3920 = vmatpush1.msra.mxu0 %v3919
    %3921 = vmatprep.subr.mxu0 0.0
    %v3922 = vand.u32 %v622, 4294901760
    %v3923 = vsub.f32 %v622, %v3922
    %v3924 = vand.u32 %v3923, 4294901760
    %v3925 = vsub.f32 %v3923, %v3924
    %v3926 = vand.u32 %v3925, 4294901760
    %3927 = vmatpush1.msra.mxu0 %v3926
    %3928 = vmatprep.subr.mxu0 0.0
    %v3929 = vand.u32 %v623, 4294901760
    %v3930 = vsub.f32 %v623, %v3929
    %v3931 = vand.u32 %v3930, 4294901760
    %v3932 = vsub.f32 %v3930, %v3931
    %v3933 = vand.u32 %v3932, 4294901760
    %3934 = vmatpush1.msra.mxu0 %v3933
    %3935 = vmatprep.subr.mxu0 0.0
    %v3936 = vand.u32 %v624, 4294901760
    %v3937 = vsub.f32 %v624, %v3936
    %v3938 = vand.u32 %v3937, 4294901760
    %v3939 = vsub.f32 %v3937, %v3938
    %v3940 = vand.u32 %v3939, 4294901760
    %3941 = vmatpush1.msra.mxu0 %v3940
    %3942 = vmatprep.subr.mxu0 0.0
    %3943 = vmatpush1.msra.mxu0 0.0
    %3944 = vmatprep.subr.mxu0 0.0
    %3945 = vmatpush1.msra.mxu0 0.0
    %3946 = vmatprep.subr.mxu0 0.0
    %3947 = vmatpush1.msra.mxu0 0.0
    %3948 = vmatprep.subr.mxu0 0.0
    %3949 = vmatpush1.msra.mxu0 0.0
    %3950 = vmatprep.subr.mxu0 0.0
    %3951 = vmatpush1.msra.mxu0 0.0
    %3952 = vmatprep.subr.mxu0 0.0
    %3953 = vmatpush1.msra.mxu0 0.0
    %3954 = vmatprep.subr.mxu0 0.0
    %3955 = vmatpush1.msra.mxu0 0.0
    %3956 = vmatprep.subr.mxu0 0.0
    %3957 = vmatpush1.msra.mxu0 0.0
    %3958 = vmatprep.subr.mxu0 0.0
    %3959 = vmatpush1.msra.mxu0 0.0
    %3960 = vmatprep.subr.mxu0 0.0
    %3961 = vmatpush1.msra.mxu0 0.0
    %3962 = vmatprep.subr.mxu0 0.0
    %3963 = vmatpush1.msra.mxu0 0.0
    %3964 = vmatprep.subr.mxu0 0.0
    %3965 = vmatpush1.msra.mxu0 0.0
    %3966 = vmatprep.subr.mxu0 0.0
    %3967 = vmatpush1.msra.mxu0 0.0
    %3968 = vmatprep.subr.mxu0 0.0
    %3969 = vmatpush1.msra.mxu0 0.0
    %3970 = vmatprep.subr.mxu0 0.0
    %3971 = vmatpush1.msra.mxu0 0.0
    %3972 = vmatprep.subr.mxu0 0.0
    %3973 = vmatpush1.msra.mxu0 0.0
    %3974 = vmatprep.subr.mxu0 0.0
    %3975 = vmatpush1.msra.mxu0 0.0
    %3976 = vmatprep.subr.mxu0 0.0
    %3977 = vmatpush1.msra.mxu0 0.0
    %3978 = vmatprep.subr.mxu0 0.0
    %3979 = vmatpush1.msra.mxu0 0.0
    %3980 = vmatprep.subr.mxu0 0.0
    %3981 = vmatpush1.msra.mxu0 0.0
    %3982 = vmatprep.subr.mxu0 0.0
    %3983 = vmatpush1.msra.mxu0 0.0
    %3984 = vmatprep.subr.mxu0 0.0
    %3985 = vmatpush1.msra.mxu0 0.0
    %3986 = vmatprep.subr.mxu0 0.0
    %3987 = vmatpush1.msra.mxu0 0.0
    %3988 = vmatprep.subr.mxu0 0.0
    %3989 = vmatpush1.msra.mxu0 0.0
    %3990 = vmatprep.subr.mxu0 0.0
    %3991 = vmatpush1.msra.mxu0 0.0
    %3992 = vmatprep.subr.mxu0 0.0
    %3993 = vmatpush1.msra.mxu0 0.0
    %3994 = vmatprep.subr.mxu0 0.0
    %3995 = vmatpush1.msra.mxu0 0.0
    %3996 = vmatprep.subr.mxu0 0.0
    %3997 = vmatpush1.msra.mxu0 0.0
    %3998 = vmatprep.mubr.f32.mxu0 0.0
    %v3999 = vand.u32 %v3833, 4294901760
    %4000 = vmatmul.mubr.f32.gmra.mrb[0].mxu0 %v3999
    %v4001 = vpop.f32.mrb[0].mxu0
    %v4002 = vadd.f32 %v3911, %v4001
    %v4003 = vpop.f32.mrb[0].mxu0
    %4004 = vdwg.mxu0
    %4005 = vmatprep.subr.mxu0 0.0
    %v4006 = vand.u32 %v621, 4294901760
    %v4007 = vsub.f32 %v621, %v4006
    %4008 = vmatpush1.msra.mxu0 %v4007
    %4009 = vmatprep.subr.mxu0 0.0
    %v4010 = vand.u32 %v622, 4294901760
    %v4011 = vsub.f32 %v622, %v4010
    %4012 = vmatpush1.msra.mxu0 %v4011
    %4013 = vmatprep.subr.mxu0 0.0
    %v4014 = vand.u32 %v623, 4294901760
    %v4015 = vsub.f32 %v623, %v4014
    %4016 = vmatpush1.msra.mxu0 %v4015
    %4017 = vmatprep.subr.mxu0 0.0
    %v4018 = vand.u32 %v624, 4294901760
    %v4019 = vsub.f32 %v624, %v4018
    %4020 = vmatpush1.msra.mxu0 %v4019
    %4021 = vmatprep.subr.mxu0 0.0
    %4022 = vmatpush1.msra.mxu0 0.0
    %4023 = vmatprep.subr.mxu0 0.0
    %4024 = vmatpush1.msra.mxu0 0.0
    %4025 = vmatprep.subr.mxu0 0.0
    %4026 = vmatpush1.msra.mxu0 0.0
    %4027 = vmatprep.subr.mxu0 0.0
    %4028 = vmatpush1.msra.mxu0 0.0
    %4029 = vmatprep.subr.mxu0 0.0
    %4030 = vmatpush1.msra.mxu0 0.0
    %4031 = vmatprep.subr.mxu0 0.0
    %4032 = vmatpush1.msra.mxu0 0.0
    %4033 = vmatprep.subr.mxu0 0.0
    %4034 = vmatpush1.msra.mxu0 0.0
    %4035 = vmatprep.subr.mxu0 0.0
    %4036 = vmatpush1.msra.mxu0 0.0
    %4037 = vmatprep.subr.mxu0 0.0
    %4038 = vmatpush1.msra.mxu0 0.0
    %4039 = vmatprep.subr.mxu0 0.0
    %4040 = vmatpush1.msra.mxu0 0.0
    %4041 = vmatprep.subr.mxu0 0.0
    %4042 = vmatpush1.msra.mxu0 0.0
    %4043 = vmatprep.subr.mxu0 0.0
    %4044 = vmatpush1.msra.mxu0 0.0
    %4045 = vmatprep.subr.mxu0 0.0
    %4046 = vmatpush1.msra.mxu0 0.0
    %4047 = vmatprep.subr.mxu0 0.0
    %4048 = vmatpush1.msra.mxu0 0.0
    %4049 = vmatprep.subr.mxu0 0.0
    %4050 = vmatpush1.msra.mxu0 0.0
    %4051 = vmatprep.subr.mxu0 0.0
    %4052 = vmatpush1.msra.mxu0 0.0
    %4053 = vmatprep.subr.mxu0 0.0
    %4054 = vmatpush1.msra.mxu0 0.0
    %4055 = vmatprep.subr.mxu0 0.0
    %4056 = vmatpush1.msra.mxu0 0.0
    %4057 = vmatprep.subr.mxu0 0.0
    %4058 = vmatpush1.msra.mxu0 0.0
    %4059 = vmatprep.subr.mxu0 0.0
    %4060 = vmatpush1.msra.mxu0 0.0
    %4061 = vmatprep.subr.mxu0 0.0
    %4062 = vmatpush1.msra.mxu0 0.0
    %4063 = vmatprep.subr.mxu0 0.0
    %4064 = vmatpush1.msra.mxu0 0.0
    %4065 = vmatprep.subr.mxu0 0.0
    %4066 = vmatpush1.msra.mxu0 0.0
    %4067 = vmatprep.subr.mxu0 0.0
    %4068 = vmatpush1.msra.mxu0 0.0
    %4069 = vmatprep.subr.mxu0 0.0
    %4070 = vmatpush1.msra.mxu0 0.0
    %4071 = vmatprep.subr.mxu0 0.0
    %4072 = vmatpush1.msra.mxu0 0.0
    %4073 = vmatprep.subr.mxu0 0.0
    %4074 = vmatpush1.msra.mxu0 0.0
    %4075 = vmatprep.subr.mxu0 0.0
    %4076 = vmatpush1.msra.mxu0 0.0
    %4077 = vmatprep.mubr.f32.mxu0 0.0
    %v4078 = vand.u32 %v3833, 4294901760
    %v4079 = vsub.f32 %v3833, %v4078
    %4080 = vmatmul.mubr.f32.gmra.mrb[0].mxu0 %v4079
    %v4081 = vpop.f32.mrb[0].mxu0
    %v4082 = vadd.f32 %v4002, %v4081
    %v4083 = vpop.f32.mrb[0].mxu0
    %4084 = vdwg.mxu0
    %4085 = vmatprep.subr.mxu0 0.0
    %v4086 = vand.u32 %v621, 4294901760
    %4087 = vmatpush1.msra.mxu0 %v4086
    %4088 = vmatprep.subr.mxu0 0.0
    %v4089 = vand.u32 %v622, 4294901760
    %4090 = vmatpush1.msra.mxu0 %v4089
    %4091 = vmatprep.subr.mxu0 0.0
    %v4092 = vand.u32 %v623, 4294901760
    %4093 = vmatpush1.msra.mxu0 %v4092
    %4094 = vmatprep.subr.mxu0 0.0
    %v4095 = vand.u32 %v624, 4294901760
    %4096 = vmatpush1.msra.mxu0 %v4095
    %4097 = vmatprep.subr.mxu0 0.0
    %4098 = vmatpush1.msra.mxu0 0.0
    %4099 = vmatprep.subr.mxu0 0.0
    %4100 = vmatpush1.msra.mxu0 0.0
    %4101 = vmatprep.subr.mxu0 0.0
    %4102 = vmatpush1.msra.mxu0 0.0
    %4103 = vmatprep.subr.mxu0 0.0
    %4104 = vmatpush1.msra.mxu0 0.0
    %4105 = vmatprep.subr.mxu0 0.0
    %4106 = vmatpush1.msra.mxu0 0.0
    %4107 = vmatprep.subr.mxu0 0.0
    %4108 = vmatpush1.msra.mxu0 0.0
    %4109 = vmatprep.subr.mxu0 0.0
    %4110 = vmatpush1.msra.mxu0 0.0
    %4111 = vmatprep.subr.mxu0 0.0
    %4112 = vmatpush1.msra.mxu0 0.0
    %4113 = vmatprep.subr.mxu0 0.0
    %4114 = vmatpush1.msra.mxu0 0.0
    %4115 = vmatprep.subr.mxu0 0.0
    %4116 = vmatpush1.msra.mxu0 0.0
    %4117 = vmatprep.subr.mxu0 0.0
    %4118 = vmatpush1.msra.mxu0 0.0
    %4119 = vmatprep.subr.mxu0 0.0
    %4120 = vmatpush1.msra.mxu0 0.0
    %4121 = vmatprep.subr.mxu0 0.0
    %4122 = vmatpush1.msra.mxu0 0.0
    %4123 = vmatprep.subr.mxu0 0.0
    %4124 = vmatpush1.msra.mxu0 0.0
    %4125 = vmatprep.subr.mxu0 0.0
    %4126 = vmatpush1.msra.mxu0 0.0
    %4127 = vmatprep.subr.mxu0 0.0
    %4128 = vmatpush1.msra.mxu0 0.0
    %4129 = vmatprep.subr.mxu0 0.0
    %4130 = vmatpush1.msra.mxu0 0.0
    %4131 = vmatprep.subr.mxu0 0.0
    %4132 = vmatpush1.msra.mxu0 0.0
    %4133 = vmatprep.subr.mxu0 0.0
    %4134 = vmatpush1.msra.mxu0 0.0
    %4135 = vmatprep.subr.mxu0 0.0
    %4136 = vmatpush1.msra.mxu0 0.0
    %4137 = vmatprep.subr.mxu0 0.0
    %4138 = vmatpush1.msra.mxu0 0.0
    %4139 = vmatprep.subr.mxu0 0.0
    %4140 = vmatpush1.msra.mxu0 0.0
    %4141 = vmatprep.subr.mxu0 0.0
    %4142 = vmatpush1.msra.mxu0 0.0
    %4143 = vmatprep.subr.mxu0 0.0
    %4144 = vmatpush1.msra.mxu0 0.0
    %4145 = vmatprep.subr.mxu0 0.0
    %4146 = vmatpush1.msra.mxu0 0.0
    %4147 = vmatprep.subr.mxu0 0.0
    %4148 = vmatpush1.msra.mxu0 0.0
    %4149 = vmatprep.subr.mxu0 0.0
    %4150 = vmatpush1.msra.mxu0 0.0
    %4151 = vmatprep.subr.mxu0 0.0
    %4152 = vmatpush1.msra.mxu0 0.0
    %4153 = vmatprep.mubr.f32.mxu0 0.0
    %v4154 = vand.u32 %v3833, 4294901760
    %v4155 = vsub.f32 %v3833, %v4154
    %v4156 = vand.u32 %v4155, 4294901760
    %4157 = vmatmul.mubr.f32.gmra.mrb[0].mxu0 %v4156
    %v4158 = vpop.f32.mrb[0].mxu0
    %v4159 = vadd.f32 %v4082, %v4158
    %v4160 = vpop.f32.mrb[0].mxu0
    %4161 = vdwg.mxu0
    %4162 = vmatprep.subr.mxu0 0.0
    %v4163 = vand.u32 %v621, 4294901760
    %v4164 = vsub.f32 %v621, %v4163
    %v4165 = vand.u32 %v4164, 4294901760
    %4166 = vmatpush1.msra.mxu0 %v4165
    %4167 = vmatprep.subr.mxu0 0.0
    %v4168 = vand.u32 %v622, 4294901760
    %v4169 = vsub.f32 %v622, %v4168
    %v4170 = vand.u32 %v4169, 4294901760
    %4171 = vmatpush1.msra.mxu0 %v4170
    %4172 = vmatprep.subr.mxu0 0.0
    %v4173 = vand.u32 %v623, 4294901760
    %v4174 = vsub.f32 %v623, %v4173
    %v4175 = vand.u32 %v4174, 4294901760
    %4176 = vmatpush1.msra.mxu0 %v4175
    %4177 = vmatprep.subr.mxu0 0.0
    %v4178 = vand.u32 %v624, 4294901760
    %v4179 = vsub.f32 %v624, %v4178
    %v4180 = vand.u32 %v4179, 4294901760
    %4181 = vmatpush1.msra.mxu0 %v4180
    %4182 = vmatprep.subr.mxu0 0.0
    %4183 = vmatpush1.msra.mxu0 0.0
    %4184 = vmatprep.subr.mxu0 0.0
    %4185 = vmatpush1.msra.mxu0 0.0
    %4186 = vmatprep.subr.mxu0 0.0
    %4187 = vmatpush1.msra.mxu0 0.0
    %4188 = vmatprep.subr.mxu0 0.0
    %4189 = vmatpush1.msra.mxu0 0.0
    %4190 = vmatprep.subr.mxu0 0.0
    %4191 = vmatpush1.msra.mxu0 0.0
    %4192 = vmatprep.subr.mxu0 0.0
    %4193 = vmatpush1.msra.mxu0 0.0
    %4194 = vmatprep.subr.mxu0 0.0
    %4195 = vmatpush1.msra.mxu0 0.0
    %4196 = vmatprep.subr.mxu0 0.0
    %4197 = vmatpush1.msra.mxu0 0.0
    %4198 = vmatprep.subr.mxu0 0.0
    %4199 = vmatpush1.msra.mxu0 0.0
    %4200 = vmatprep.subr.mxu0 0.0
    %4201 = vmatpush1.msra.mxu0 0.0
    %4202 = vmatprep.subr.mxu0 0.0
    %4203 = vmatpush1.msra.mxu0 0.0
    %4204 = vmatprep.subr.mxu0 0.0
    %4205 = vmatpush1.msra.mxu0 0.0
    %4206 = vmatprep.subr.mxu0 0.0
    %4207 = vmatpush1.msra.mxu0 0.0
    %4208 = vmatprep.subr.mxu0 0.0
    %4209 = vmatpush1.msra.mxu0 0.0
    %4210 = vmatprep.subr.mxu0 0.0
    %4211 = vmatpush1.msra.mxu0 0.0
    %4212 = vmatprep.subr.mxu0 0.0
    %4213 = vmatpush1.msra.mxu0 0.0
    %4214 = vmatprep.subr.mxu0 0.0
    %4215 = vmatpush1.msra.mxu0 0.0
    %4216 = vmatprep.subr.mxu0 0.0
    %4217 = vmatpush1.msra.mxu0 0.0
    %4218 = vmatprep.subr.mxu0 0.0
    %4219 = vmatpush1.msra.mxu0 0.0
    %4220 = vmatprep.subr.mxu0 0.0
    %4221 = vmatpush1.msra.mxu0 0.0
    %4222 = vmatprep.subr.mxu0 0.0
    %4223 = vmatpush1.msra.mxu0 0.0
    %4224 = vmatprep.subr.mxu0 0.0
    %4225 = vmatpush1.msra.mxu0 0.0
    %4226 = vmatprep.subr.mxu0 0.0
    %4227 = vmatpush1.msra.mxu0 0.0
    %4228 = vmatprep.subr.mxu0 0.0
    %4229 = vmatpush1.msra.mxu0 0.0
    %4230 = vmatprep.subr.mxu0 0.0
    %4231 = vmatpush1.msra.mxu0 0.0
    %4232 = vmatprep.subr.mxu0 0.0
    %4233 = vmatpush1.msra.mxu0 0.0
    %4234 = vmatprep.subr.mxu0 0.0
    %4235 = vmatpush1.msra.mxu0 0.0
    %4236 = vmatprep.subr.mxu0 0.0
    %4237 = vmatpush1.msra.mxu0 0.0
    %4238 = vmatprep.mubr.f32.mxu0 0.0
    %v4239 = vand.u32 %v3833, 4294901760
    %4240 = vmatmul.mubr.f32.gmra.mrb[0].mxu0 %v4239
    %v4241 = vpop.f32.mrb[0].mxu0
    %v4242 = vadd.f32 %v4159, %v4241
    %v4243 = vpop.f32.mrb[0].mxu0
    %4244 = vdwg.mxu0
    %4245 = vmatprep.subr.mxu0 0.0
    %v4246 = vand.u32 %v621, 4294901760
    %4247 = vmatpush1.msra.mxu0 %v4246
    %4248 = vmatprep.subr.mxu0 0.0
    %v4249 = vand.u32 %v622, 4294901760
    %4250 = vmatpush1.msra.mxu0 %v4249
    %4251 = vmatprep.subr.mxu0 0.0
    %v4252 = vand.u32 %v623, 4294901760
    %4253 = vmatpush1.msra.mxu0 %v4252
    %4254 = vmatprep.subr.mxu0 0.0
    %v4255 = vand.u32 %v624, 4294901760
    %4256 = vmatpush1.msra.mxu0 %v4255
    %4257 = vmatprep.subr.mxu0 0.0
    %4258 = vmatpush1.msra.mxu0 0.0
    %4259 = vmatprep.subr.mxu0 0.0
    %4260 = vmatpush1.msra.mxu0 0.0
    %4261 = vmatprep.subr.mxu0 0.0
    %4262 = vmatpush1.msra.mxu0 0.0
    %4263 = vmatprep.subr.mxu0 0.0
    %4264 = vmatpush1.msra.mxu0 0.0
    %4265 = vmatprep.subr.mxu0 0.0
    %4266 = vmatpush1.msra.mxu0 0.0
    %4267 = vmatprep.subr.mxu0 0.0
    %4268 = vmatpush1.msra.mxu0 0.0
    %4269 = vmatprep.subr.mxu0 0.0
    %4270 = vmatpush1.msra.mxu0 0.0
    %4271 = vmatprep.subr.mxu0 0.0
    %4272 = vmatpush1.msra.mxu0 0.0
    %4273 = vmatprep.subr.mxu0 0.0
    %4274 = vmatpush1.msra.mxu0 0.0
    %4275 = vmatprep.subr.mxu0 0.0
    %4276 = vmatpush1.msra.mxu0 0.0
    %4277 = vmatprep.subr.mxu0 0.0
    %4278 = vmatpush1.msra.mxu0 0.0
    %4279 = vmatprep.subr.mxu0 0.0
    %4280 = vmatpush1.msra.mxu0 0.0
    %4281 = vmatprep.subr.mxu0 0.0
    %4282 = vmatpush1.msra.mxu0 0.0
    %4283 = vmatprep.subr.mxu0 0.0
    %4284 = vmatpush1.msra.mxu0 0.0
    %4285 = vmatprep.subr.mxu0 0.0
    %4286 = vmatpush1.msra.mxu0 0.0
    %4287 = vmatprep.subr.mxu0 0.0
    %4288 = vmatpush1.msra.mxu0 0.0
    %4289 = vmatprep.subr.mxu0 0.0
    %4290 = vmatpush1.msra.mxu0 0.0
    %4291 = vmatprep.subr.mxu0 0.0
    %4292 = vmatpush1.msra.mxu0 0.0
    %4293 = vmatprep.subr.mxu0 0.0
    %4294 = vmatpush1.msra.mxu0 0.0
    %4295 = vmatprep.subr.mxu0 0.0
    %4296 = vmatpush1.msra.mxu0 0.0
    %4297 = vmatprep.subr.mxu0 0.0
    %4298 = vmatpush1.msra.mxu0 0.0
    %4299 = vmatprep.subr.mxu0 0.0
    %4300 = vmatpush1.msra.mxu0 0.0
    %4301 = vmatprep.subr.mxu0 0.0
    %4302 = vmatpush1.msra.mxu0 0.0
    %4303 = vmatprep.subr.mxu0 0.0
    %4304 = vmatpush1.msra.mxu0 0.0
    %4305 = vmatprep.subr.mxu0 0.0
    %4306 = vmatpush1.msra.mxu0 0.0
    %4307 = vmatprep.subr.mxu0 0.0
    %4308 = vmatpush1.msra.mxu0 0.0
    %4309 = vmatprep.subr.mxu0 0.0
    %4310 = vmatpush1.msra.mxu0 0.0
    %4311 = vmatprep.subr.mxu0 0.0
    %4312 = vmatpush1.msra.mxu0 0.0
    %4313 = vmatprep.mubr.f32.mxu0 0.0
    %v4314 = vand.u32 %v3833, 4294901760
    %4315 = vmatmul.mubr.f32.gmra.mrb[0].mxu0 %v4314
    %v4316 = vpop.f32.mrb[0].mxu0
    %v4317 = vadd.f32 %v4242, %v4316
    %v4318 = vpop.f32.mrb[0].mxu0
    %4319 = vdwg.mxu0
    %v4321 = vrot.slane %v4317, 3
    %v4322 = vrot.slane %v4317, 4
    %v4323 = vrot.slane %v4317, 5
    %v4324 = vrot.slane %v4317, 6
    %v4329 = vadd.f32 %v600, %v4321
    %v4330 = vadd.f32 %v606, %v4322
    %v4331 = vadd.f32 %v612, %v4323
    %v4332 = vadd.f32 %v618, %v4324
    %v4333 = vxor.u32 %v4329, 2147483648
    %v4334 = vxor.u32 %v4330, 2147483648
    %v4335 = vxor.u32 %v4331, 2147483648
    %v4336 = vxor.u32 %v4332, 2147483648
    %v4337 = vmul.f32 %v4333, 1.442695
    %v4338 = vpow.pop %v4337
    %v4339 = vmul.f32 %v4334, 1.442695
    %v4340 = vpow.pop %v4339
    %v4341 = vmul.f32 %v4335, 1.442695
    %v4342 = vpow.pop %v4341
    %v4343 = vmul.f32 %v4336, 1.442695
    %v4344 = vpow.pop %v4343
    %v4345 = vadd.f32 %v4338, 1.0
    %v4346 = vadd.f32 %v4340, 1.0
    %v4347 = vadd.f32 %v4342, 1.0
    %v4348 = vadd.f32 %v4344, 1.0
    %v4349 = vrcp.pop %v4345
    %v4350 = vmul.f32 1.0, %v4349
    %v4351 = vrcp.pop %v4346
    %v4352 = vmul.f32 1.0, %v4351
    %v4353 = vrcp.pop %v4347
    %v4354 = vmul.f32 1.0, %v4353
    %v4355 = vrcp.pop %v4348
    %v4356 = vmul.f32 1.0, %v4355
    %v4357 = vtanh.pop %v4329
    %v4358 = vtanh.pop %v4330
    %v4359 = vtanh.pop %v4331
    %v4360 = vtanh.pop %v4332
    %v4365 = vrot.slane %v3770, 7
    %v4366 = vrot.slane %v3771, 7
    %v4367 = vrot.slane %v3772, 7
    %v4368 = vrot.slane %v3773, 7
    %v4373 = vmul.f32 %v4350, %v4365
    %v4374 = vmul.f32 %v4352, %v4366
    %v4375 = vmul.f32 %v4354, %v4367
    %v4376 = vmul.f32 %v4356, %v4368
    %4381 = vrot.lane.b32.xlu0 %v4357, 32
    %v4382 = vpop.permute.xlu0 %4381
    %4383 = vrot.lane.b32.xlu0 %v4358, 32
    %v4384 = vpop.permute.xlu0 %4383
    %4385 = vrot.lane.b32.xlu0 %v4359, 32
    %v4386 = vpop.permute.xlu0 %4385
    %4387 = vrot.lane.b32.xlu0 %v4360, 32
    %v4388 = vpop.permute.xlu0 %4387
    %v4393 = vmul.f32 %v4350, %v4382
    %v4394 = vmul.f32 %v4352, %v4384
    %v4395 = vmul.f32 %v4354, %v4386
    %v4396 = vmul.f32 %v4356, %v4388
    %4401 = vrot.lane.b32.xlu0 %v4393, 32
    %v4402 = vpop.permute.xlu0 %4401
    %4403 = vrot.lane.b32.xlu0 %v4394, 32
    %v4404 = vpop.permute.xlu0 %4403
    %4405 = vrot.lane.b32.xlu0 %v4395, 32
    %v4406 = vpop.permute.xlu0 %4405
    %4407 = vrot.lane.b32.xlu0 %v4396, 32
    %v4408 = vpop.permute.xlu0 %4407
    %v4413 = vadd.f32 %v4373, %v4402
    %v4414 = vadd.f32 %v4374, %v4404
    %v4415 = vadd.f32 %v4375, %v4406
    %v4416 = vadd.f32 %v4376, %v4408
    %v4417 = vtanh.pop %v4413
    %v4418 = vtanh.pop %v4414
    %v4419 = vtanh.pop %v4415
    %v4420 = vtanh.pop %v4416
    %4425 = vrot.lane.b32.xlu0 %v4417, 32
    %v4426 = vpop.permute.xlu0 %4425
    %4427 = vrot.lane.b32.xlu0 %v4418, 32
    %v4428 = vpop.permute.xlu0 %4427
    %4429 = vrot.lane.b32.xlu0 %v4419, 32
    %v4430 = vpop.permute.xlu0 %4429
    %4431 = vrot.lane.b32.xlu0 %v4420, 32
    %v4432 = vpop.permute.xlu0 %4431
    %v4437 = vmul.f32 %v4350, %v4426
    %v4438 = vmul.f32 %v4352, %v4428
    %v4439 = vmul.f32 %v4354, %v4430
    %v4440 = vmul.f32 %v4356, %v4432
    %v4441 = vmul.f32 %v4437, %v1229
    %v4442 = vmul.f32 %v4438, %v1229
    %v4443 = vmul.f32 %v4439, %v1229
    %v4444 = vmul.f32 %v4440, %v1229
    %v4449 = vrot.slane %v4442, 7
    %v4450 = vsel %vm3169, %v4449, %v4441
    %v4451 = vrot.slane %v4443, 6
    %v4452 = vsel %vm3811, %v4451, %v4450
    %v4453 = vrot.slane %v4444, 5
    %4454 = vrot.lane.b32.xlu0 %v4452, 64
    %v4455 = vpop.permute.xlu0 %4454
    %4456 = vrot.lane.b32.xlu0 %v4453, 64
    %v4457 = vpop.permute.xlu0 %4456
    %vm4460 = vcmask 261125
    %v4461 = vsel %vm4460, %v4455, 0.0
    %4462 = vadd.xlane.f32.xlu0 %v4461
    %v4463 = vpop.xlane.xlu0 %4462
    %vm4464 = vcmask 253952
    %v4465 = vsel %vm4464, %v4457, 0.0
    %4466 = vadd.xlane.f32.xlu0 %v4465
    %v4467 = vpop.xlane.xlu0 %4466
    %v4472 = vrot.slane %v4437, 5
    %v4473 = vrot.slane %v4438, 4
    %v4474 = vsel %vm1240, %v4473, %v4472
    %v4475 = vrot.slane %v4439, 3
    %v4476 = vsel %vm1243, %v4475, %v4474
    %v4477 = vrot.slane %v4440, 2
    %v4478 = vsel %vm1246, %v4477, %v4476
    %4479 = vrot.lane.b32.xlu0 %v4478, 64
    %v4480 = vpop.permute.xlu0 %4479
    %v4481 = vsel %vm626, %v4480, 0
    %4483 = vmatprep.subr.mxu0 0.0
    %v4484 = vand.u32 %v621, 4294901760
    %4485 = vmatpush1.msra.mxu0 %v4484
    %4486 = vmatprep.subr.mxu0 0.0
    %v4487 = vand.u32 %v622, 4294901760
    %4488 = vmatpush1.msra.mxu0 %v4487
    %4489 = vmatprep.subr.mxu0 0.0
    %v4490 = vand.u32 %v623, 4294901760
    %4491 = vmatpush1.msra.mxu0 %v4490
    %4492 = vmatprep.subr.mxu0 0.0
    %v4493 = vand.u32 %v624, 4294901760
    %4494 = vmatpush1.msra.mxu0 %v4493
    %4495 = vmatprep.subr.mxu0 0.0
    %4496 = vmatpush1.msra.mxu0 0.0
    %4497 = vmatprep.subr.mxu0 0.0
    %4498 = vmatpush1.msra.mxu0 0.0
    %4499 = vmatprep.subr.mxu0 0.0
    %4500 = vmatpush1.msra.mxu0 0.0
    %4501 = vmatprep.subr.mxu0 0.0
    %4502 = vmatpush1.msra.mxu0 0.0
    %4503 = vmatprep.subr.mxu0 0.0
    %4504 = vmatpush1.msra.mxu0 0.0
    %4505 = vmatprep.subr.mxu0 0.0
    %4506 = vmatpush1.msra.mxu0 0.0
    %4507 = vmatprep.subr.mxu0 0.0
    %4508 = vmatpush1.msra.mxu0 0.0
    %4509 = vmatprep.subr.mxu0 0.0
    %4510 = vmatpush1.msra.mxu0 0.0
    %4511 = vmatprep.subr.mxu0 0.0
    %4512 = vmatpush1.msra.mxu0 0.0
    %4513 = vmatprep.subr.mxu0 0.0
    %4514 = vmatpush1.msra.mxu0 0.0
    %4515 = vmatprep.subr.mxu0 0.0
    %4516 = vmatpush1.msra.mxu0 0.0
    %4517 = vmatprep.subr.mxu0 0.0
    %4518 = vmatpush1.msra.mxu0 0.0
    %4519 = vmatprep.subr.mxu0 0.0
    %4520 = vmatpush1.msra.mxu0 0.0
    %4521 = vmatprep.subr.mxu0 0.0
    %4522 = vmatpush1.msra.mxu0 0.0
    %4523 = vmatprep.subr.mxu0 0.0
    %4524 = vmatpush1.msra.mxu0 0.0
    %4525 = vmatprep.subr.mxu0 0.0
    %4526 = vmatpush1.msra.mxu0 0.0
    %4527 = vmatprep.subr.mxu0 0.0
    %4528 = vmatpush1.msra.mxu0 0.0
    %4529 = vmatprep.subr.mxu0 0.0
    %4530 = vmatpush1.msra.mxu0 0.0
    %4531 = vmatprep.subr.mxu0 0.0
    %4532 = vmatpush1.msra.mxu0 0.0
    %4533 = vmatprep.subr.mxu0 0.0
    %4534 = vmatpush1.msra.mxu0 0.0
    %4535 = vmatprep.subr.mxu0 0.0
    %4536 = vmatpush1.msra.mxu0 0.0
    %4537 = vmatprep.subr.mxu0 0.0
    %4538 = vmatpush1.msra.mxu0 0.0
    %4539 = vmatprep.subr.mxu0 0.0
    %4540 = vmatpush1.msra.mxu0 0.0
    %4541 = vmatprep.subr.mxu0 0.0
    %4542 = vmatpush1.msra.mxu0 0.0
    %4543 = vmatprep.subr.mxu0 0.0
    %4544 = vmatpush1.msra.mxu0 0.0
    %4545 = vmatprep.subr.mxu0 0.0
    %4546 = vmatpush1.msra.mxu0 0.0
    %4547 = vmatprep.subr.mxu0 0.0
    %4548 = vmatpush1.msra.mxu0 0.0
    %4549 = vmatprep.subr.mxu0 0.0
    %4550 = vmatpush1.msra.mxu0 0.0
    %4551 = vmatprep.mubr.f32.mxu0 0.0
    %v4552 = vand.u32 %v4481, 4294901760
    %v4553 = vsub.f32 %v4481, %v4552
    %v4554 = vand.u32 %v4553, 4294901760
    %v4555 = vsub.f32 %v4553, %v4554
    %v4556 = vand.u32 %v4555, 4294901760
    %4557 = vmatmul.mubr.f32.gmra.mrb[0].mxu0 %v4556
    %v4558 = vpop.f32.mrb[0].mxu0
    %v4559 = vadd.f32 0.0, %v4558
    %v4560 = vpop.f32.mrb[0].mxu0
    %4561 = vdwg.mxu0
    %4562 = vmatprep.subr.mxu0 0.0
    %v4563 = vand.u32 %v621, 4294901760
    %v4564 = vsub.f32 %v621, %v4563
    %v4565 = vand.u32 %v4564, 4294901760
    %v4566 = vsub.f32 %v4564, %v4565
    %v4567 = vand.u32 %v4566, 4294901760
    %4568 = vmatpush1.msra.mxu0 %v4567
    %4569 = vmatprep.subr.mxu0 0.0
    %v4570 = vand.u32 %v622, 4294901760
    %v4571 = vsub.f32 %v622, %v4570
    %v4572 = vand.u32 %v4571, 4294901760
    %v4573 = vsub.f32 %v4571, %v4572
    %v4574 = vand.u32 %v4573, 4294901760
    %4575 = vmatpush1.msra.mxu0 %v4574
    %4576 = vmatprep.subr.mxu0 0.0
    %v4577 = vand.u32 %v623, 4294901760
    %v4578 = vsub.f32 %v623, %v4577
    %v4579 = vand.u32 %v4578, 4294901760
    %v4580 = vsub.f32 %v4578, %v4579
    %v4581 = vand.u32 %v4580, 4294901760
    %4582 = vmatpush1.msra.mxu0 %v4581
    %4583 = vmatprep.subr.mxu0 0.0
    %v4584 = vand.u32 %v624, 4294901760
    %v4585 = vsub.f32 %v624, %v4584
    %v4586 = vand.u32 %v4585, 4294901760
    %v4587 = vsub.f32 %v4585, %v4586
    %v4588 = vand.u32 %v4587, 4294901760
    %4589 = vmatpush1.msra.mxu0 %v4588
    %4590 = vmatprep.subr.mxu0 0.0
    %4591 = vmatpush1.msra.mxu0 0.0
    %4592 = vmatprep.subr.mxu0 0.0
    %4593 = vmatpush1.msra.mxu0 0.0
    %4594 = vmatprep.subr.mxu0 0.0
    %4595 = vmatpush1.msra.mxu0 0.0
    %4596 = vmatprep.subr.mxu0 0.0
    %4597 = vmatpush1.msra.mxu0 0.0
    %4598 = vmatprep.subr.mxu0 0.0
    %4599 = vmatpush1.msra.mxu0 0.0
    %4600 = vmatprep.subr.mxu0 0.0
    %4601 = vmatpush1.msra.mxu0 0.0
    %4602 = vmatprep.subr.mxu0 0.0
    %4603 = vmatpush1.msra.mxu0 0.0
    %4604 = vmatprep.subr.mxu0 0.0
    %4605 = vmatpush1.msra.mxu0 0.0
    %4606 = vmatprep.subr.mxu0 0.0
    %4607 = vmatpush1.msra.mxu0 0.0
    %4608 = vmatprep.subr.mxu0 0.0
    %4609 = vmatpush1.msra.mxu0 0.0
    %4610 = vmatprep.subr.mxu0 0.0
    %4611 = vmatpush1.msra.mxu0 0.0
    %4612 = vmatprep.subr.mxu0 0.0
    %4613 = vmatpush1.msra.mxu0 0.0
    %4614 = vmatprep.subr.mxu0 0.0
    %4615 = vmatpush1.msra.mxu0 0.0
    %4616 = vmatprep.subr.mxu0 0.0
    %4617 = vmatpush1.msra.mxu0 0.0
    %4618 = vmatprep.subr.mxu0 0.0
    %4619 = vmatpush1.msra.mxu0 0.0
    %4620 = vmatprep.subr.mxu0 0.0
    %4621 = vmatpush1.msra.mxu0 0.0
    %4622 = vmatprep.subr.mxu0 0.0
    %4623 = vmatpush1.msra.mxu0 0.0
    %4624 = vmatprep.subr.mxu0 0.0
    %4625 = vmatpush1.msra.mxu0 0.0
    %4626 = vmatprep.subr.mxu0 0.0
    %4627 = vmatpush1.msra.mxu0 0.0
    %4628 = vmatprep.subr.mxu0 0.0
    %4629 = vmatpush1.msra.mxu0 0.0
    %4630 = vmatprep.subr.mxu0 0.0
    %4631 = vmatpush1.msra.mxu0 0.0
    %4632 = vmatprep.subr.mxu0 0.0
    %4633 = vmatpush1.msra.mxu0 0.0
    %4634 = vmatprep.subr.mxu0 0.0
    %4635 = vmatpush1.msra.mxu0 0.0
    %4636 = vmatprep.subr.mxu0 0.0
    %4637 = vmatpush1.msra.mxu0 0.0
    %4638 = vmatprep.subr.mxu0 0.0
    %4639 = vmatpush1.msra.mxu0 0.0
    %4640 = vmatprep.subr.mxu0 0.0
    %4641 = vmatpush1.msra.mxu0 0.0
    %4642 = vmatprep.subr.mxu0 0.0
    %4643 = vmatpush1.msra.mxu0 0.0
    %4644 = vmatprep.subr.mxu0 0.0
    %4645 = vmatpush1.msra.mxu0 0.0
    %4646 = vmatprep.mubr.f32.mxu0 0.0
    %v4647 = vand.u32 %v4481, 4294901760
    %4648 = vmatmul.mubr.f32.gmra.mrb[0].mxu0 %v4647
    %v4649 = vpop.f32.mrb[0].mxu0
    %v4650 = vadd.f32 %v4559, %v4649
    %v4651 = vpop.f32.mrb[0].mxu0
    %4652 = vdwg.mxu0
    %4653 = vmatprep.subr.mxu0 0.0
    %v4654 = vand.u32 %v621, 4294901760
    %v4655 = vsub.f32 %v621, %v4654
    %4656 = vmatpush1.msra.mxu0 %v4655
    %4657 = vmatprep.subr.mxu0 0.0
    %v4658 = vand.u32 %v622, 4294901760
    %v4659 = vsub.f32 %v622, %v4658
    %4660 = vmatpush1.msra.mxu0 %v4659
    %4661 = vmatprep.subr.mxu0 0.0
    %v4662 = vand.u32 %v623, 4294901760
    %v4663 = vsub.f32 %v623, %v4662
    %4664 = vmatpush1.msra.mxu0 %v4663
    %4665 = vmatprep.subr.mxu0 0.0
    %v4666 = vand.u32 %v624, 4294901760
    %v4667 = vsub.f32 %v624, %v4666
    %4668 = vmatpush1.msra.mxu0 %v4667
    %4669 = vmatprep.subr.mxu0 0.0
    %4670 = vmatpush1.msra.mxu0 0.0
    %4671 = vmatprep.subr.mxu0 0.0
    %4672 = vmatpush1.msra.mxu0 0.0
    %4673 = vmatprep.subr.mxu0 0.0
    %4674 = vmatpush1.msra.mxu0 0.0
    %4675 = vmatprep.subr.mxu0 0.0
    %4676 = vmatpush1.msra.mxu0 0.0
    %4677 = vmatprep.subr.mxu0 0.0
    %4678 = vmatpush1.msra.mxu0 0.0
    %4679 = vmatprep.subr.mxu0 0.0
    %4680 = vmatpush1.msra.mxu0 0.0
    %4681 = vmatprep.subr.mxu0 0.0
    %4682 = vmatpush1.msra.mxu0 0.0
    %4683 = vmatprep.subr.mxu0 0.0
    %4684 = vmatpush1.msra.mxu0 0.0
    %4685 = vmatprep.subr.mxu0 0.0
    %4686 = vmatpush1.msra.mxu0 0.0
    %4687 = vmatprep.subr.mxu0 0.0
    %4688 = vmatpush1.msra.mxu0 0.0
    %4689 = vmatprep.subr.mxu0 0.0
    %4690 = vmatpush1.msra.mxu0 0.0
    %4691 = vmatprep.subr.mxu0 0.0
    %4692 = vmatpush1.msra.mxu0 0.0
    %4693 = vmatprep.subr.mxu0 0.0
    %4694 = vmatpush1.msra.mxu0 0.0
    %4695 = vmatprep.subr.mxu0 0.0
    %4696 = vmatpush1.msra.mxu0 0.0
    %4697 = vmatprep.subr.mxu0 0.0
    %4698 = vmatpush1.msra.mxu0 0.0
    %4699 = vmatprep.subr.mxu0 0.0
    %4700 = vmatpush1.msra.mxu0 0.0
    %4701 = vmatprep.subr.mxu0 0.0
    %4702 = vmatpush1.msra.mxu0 0.0
    %4703 = vmatprep.subr.mxu0 0.0
    %4704 = vmatpush1.msra.mxu0 0.0
    %4705 = vmatprep.subr.mxu0 0.0
    %4706 = vmatpush1.msra.mxu0 0.0
    %4707 = vmatprep.subr.mxu0 0.0
    %4708 = vmatpush1.msra.mxu0 0.0
    %4709 = vmatprep.subr.mxu0 0.0
    %4710 = vmatpush1.msra.mxu0 0.0
    %4711 = vmatprep.subr.mxu0 0.0
    %4712 = vmatpush1.msra.mxu0 0.0
    %4713 = vmatprep.subr.mxu0 0.0
    %4714 = vmatpush1.msra.mxu0 0.0
    %4715 = vmatprep.subr.mxu0 0.0
    %4716 = vmatpush1.msra.mxu0 0.0
    %4717 = vmatprep.subr.mxu0 0.0
    %4718 = vmatpush1.msra.mxu0 0.0
    %4719 = vmatprep.subr.mxu0 0.0
    %4720 = vmatpush1.msra.mxu0 0.0
    %4721 = vmatprep.subr.mxu0 0.0
    %4722 = vmatpush1.msra.mxu0 0.0
    %4723 = vmatprep.subr.mxu0 0.0
    %4724 = vmatpush1.msra.mxu0 0.0
    %4725 = vmatprep.mubr.f32.mxu0 0.0
    %v4726 = vand.u32 %v4481, 4294901760
    %v4727 = vsub.f32 %v4481, %v4726
    %4728 = vmatmul.mubr.f32.gmra.mrb[0].mxu0 %v4727
    %v4729 = vpop.f32.mrb[0].mxu0
    %v4730 = vadd.f32 %v4650, %v4729
    %v4731 = vpop.f32.mrb[0].mxu0
    %4732 = vdwg.mxu0
    %4733 = vmatprep.subr.mxu0 0.0
    %v4734 = vand.u32 %v621, 4294901760
    %4735 = vmatpush1.msra.mxu0 %v4734
    %4736 = vmatprep.subr.mxu0 0.0
    %v4737 = vand.u32 %v622, 4294901760
    %4738 = vmatpush1.msra.mxu0 %v4737
    %4739 = vmatprep.subr.mxu0 0.0
    %v4740 = vand.u32 %v623, 4294901760
    %4741 = vmatpush1.msra.mxu0 %v4740
    %4742 = vmatprep.subr.mxu0 0.0
    %v4743 = vand.u32 %v624, 4294901760
    %4744 = vmatpush1.msra.mxu0 %v4743
    %4745 = vmatprep.subr.mxu0 0.0
    %4746 = vmatpush1.msra.mxu0 0.0
    %4747 = vmatprep.subr.mxu0 0.0
    %4748 = vmatpush1.msra.mxu0 0.0
    %4749 = vmatprep.subr.mxu0 0.0
    %4750 = vmatpush1.msra.mxu0 0.0
    %4751 = vmatprep.subr.mxu0 0.0
    %4752 = vmatpush1.msra.mxu0 0.0
    %4753 = vmatprep.subr.mxu0 0.0
    %4754 = vmatpush1.msra.mxu0 0.0
    %4755 = vmatprep.subr.mxu0 0.0
    %4756 = vmatpush1.msra.mxu0 0.0
    %4757 = vmatprep.subr.mxu0 0.0
    %4758 = vmatpush1.msra.mxu0 0.0
    %4759 = vmatprep.subr.mxu0 0.0
    %4760 = vmatpush1.msra.mxu0 0.0
    %4761 = vmatprep.subr.mxu0 0.0
    %4762 = vmatpush1.msra.mxu0 0.0
    %4763 = vmatprep.subr.mxu0 0.0
    %4764 = vmatpush1.msra.mxu0 0.0
    %4765 = vmatprep.subr.mxu0 0.0
    %4766 = vmatpush1.msra.mxu0 0.0
    %4767 = vmatprep.subr.mxu0 0.0
    %4768 = vmatpush1.msra.mxu0 0.0
    %4769 = vmatprep.subr.mxu0 0.0
    %4770 = vmatpush1.msra.mxu0 0.0
    %4771 = vmatprep.subr.mxu0 0.0
    %4772 = vmatpush1.msra.mxu0 0.0
    %4773 = vmatprep.subr.mxu0 0.0
    %4774 = vmatpush1.msra.mxu0 0.0
    %4775 = vmatprep.subr.mxu0 0.0
    %4776 = vmatpush1.msra.mxu0 0.0
    %4777 = vmatprep.subr.mxu0 0.0
    %4778 = vmatpush1.msra.mxu0 0.0
    %4779 = vmatprep.subr.mxu0 0.0
    %4780 = vmatpush1.msra.mxu0 0.0
    %4781 = vmatprep.subr.mxu0 0.0
    %4782 = vmatpush1.msra.mxu0 0.0
    %4783 = vmatprep.subr.mxu0 0.0
    %4784 = vmatpush1.msra.mxu0 0.0
    %4785 = vmatprep.subr.mxu0 0.0
    %4786 = vmatpush1.msra.mxu0 0.0
    %4787 = vmatprep.subr.mxu0 0.0
    %4788 = vmatpush1.msra.mxu0 0.0
    %4789 = vmatprep.subr.mxu0 0.0
    %4790 = vmatpush1.msra.mxu0 0.0
    %4791 = vmatprep.subr.mxu0 0.0
    %4792 = vmatpush1.msra.mxu0 0.0
    %4793 = vmatprep.subr.mxu0 0.0
    %4794 = vmatpush1.msra.mxu0 0.0
    %4795 = vmatprep.subr.mxu0 0.0
    %4796 = vmatpush1.msra.mxu0 0.0
    %4797 = vmatprep.subr.mxu0 0.0
    %4798 = vmatpush1.msra.mxu0 0.0
    %4799 = vmatprep.subr.mxu0 0.0
    %4800 = vmatpush1.msra.mxu0 0.0
    %4801 = vmatprep.mubr.f32.mxu0 0.0
    %v4802 = vand.u32 %v4481, 4294901760
    %v4803 = vsub.f32 %v4481, %v4802
    %v4804 = vand.u32 %v4803, 4294901760
    %4805 = vmatmul.mubr.f32.gmra.mrb[0].mxu0 %v4804
    %v4806 = vpop.f32.mrb[0].mxu0
    %v4807 = vadd.f32 %v4730, %v4806
    %v4808 = vpop.f32.mrb[0].mxu0
    %4809 = vdwg.mxu0
    %4810 = vmatprep.subr.mxu0 0.0
    %v4811 = vand.u32 %v621, 4294901760
    %v4812 = vsub.f32 %v621, %v4811
    %v4813 = vand.u32 %v4812, 4294901760
    %4814 = vmatpush1.msra.mxu0 %v4813
    %4815 = vmatprep.subr.mxu0 0.0
    %v4816 = vand.u32 %v622, 4294901760
    %v4817 = vsub.f32 %v622, %v4816
    %v4818 = vand.u32 %v4817, 4294901760
    %4819 = vmatpush1.msra.mxu0 %v4818
    %4820 = vmatprep.subr.mxu0 0.0
    %v4821 = vand.u32 %v623, 4294901760
    %v4822 = vsub.f32 %v623, %v4821
    %v4823 = vand.u32 %v4822, 4294901760
    %4824 = vmatpush1.msra.mxu0 %v4823
    %4825 = vmatprep.subr.mxu0 0.0
    %v4826 = vand.u32 %v624, 4294901760
    %v4827 = vsub.f32 %v624, %v4826
    %v4828 = vand.u32 %v4827, 4294901760
    %4829 = vmatpush1.msra.mxu0 %v4828
    %4830 = vmatprep.subr.mxu0 0.0
    %4831 = vmatpush1.msra.mxu0 0.0
    %4832 = vmatprep.subr.mxu0 0.0
    %4833 = vmatpush1.msra.mxu0 0.0
    %4834 = vmatprep.subr.mxu0 0.0
    %4835 = vmatpush1.msra.mxu0 0.0
    %4836 = vmatprep.subr.mxu0 0.0
    %4837 = vmatpush1.msra.mxu0 0.0
    %4838 = vmatprep.subr.mxu0 0.0
    %4839 = vmatpush1.msra.mxu0 0.0
    %4840 = vmatprep.subr.mxu0 0.0
    %4841 = vmatpush1.msra.mxu0 0.0
    %4842 = vmatprep.subr.mxu0 0.0
    %4843 = vmatpush1.msra.mxu0 0.0
    %4844 = vmatprep.subr.mxu0 0.0
    %4845 = vmatpush1.msra.mxu0 0.0
    %4846 = vmatprep.subr.mxu0 0.0
    %4847 = vmatpush1.msra.mxu0 0.0
    %4848 = vmatprep.subr.mxu0 0.0
    %4849 = vmatpush1.msra.mxu0 0.0
    %4850 = vmatprep.subr.mxu0 0.0
    %4851 = vmatpush1.msra.mxu0 0.0
    %4852 = vmatprep.subr.mxu0 0.0
    %4853 = vmatpush1.msra.mxu0 0.0
    %4854 = vmatprep.subr.mxu0 0.0
    %4855 = vmatpush1.msra.mxu0 0.0
    %4856 = vmatprep.subr.mxu0 0.0
    %4857 = vmatpush1.msra.mxu0 0.0
    %4858 = vmatprep.subr.mxu0 0.0
    %4859 = vmatpush1.msra.mxu0 0.0
    %4860 = vmatprep.subr.mxu0 0.0
    %4861 = vmatpush1.msra.mxu0 0.0
    %4862 = vmatprep.subr.mxu0 0.0
    %4863 = vmatpush1.msra.mxu0 0.0
    %4864 = vmatprep.subr.mxu0 0.0
    %4865 = vmatpush1.msra.mxu0 0.0
    %4866 = vmatprep.subr.mxu0 0.0
    %4867 = vmatpush1.msra.mxu0 0.0
    %4868 = vmatprep.subr.mxu0 0.0
    %4869 = vmatpush1.msra.mxu0 0.0
    %4870 = vmatprep.subr.mxu0 0.0
    %4871 = vmatpush1.msra.mxu0 0.0
    %4872 = vmatprep.subr.mxu0 0.0
    %4873 = vmatpush1.msra.mxu0 0.0
    %4874 = vmatprep.subr.mxu0 0.0
    %4875 = vmatpush1.msra.mxu0 0.0
    %4876 = vmatprep.subr.mxu0 0.0
    %4877 = vmatpush1.msra.mxu0 0.0
    %4878 = vmatprep.subr.mxu0 0.0
    %4879 = vmatpush1.msra.mxu0 0.0
    %4880 = vmatprep.subr.mxu0 0.0
    %4881 = vmatpush1.msra.mxu0 0.0
    %4882 = vmatprep.subr.mxu0 0.0
    %4883 = vmatpush1.msra.mxu0 0.0
    %4884 = vmatprep.subr.mxu0 0.0
    %4885 = vmatpush1.msra.mxu0 0.0
    %4886 = vmatprep.mubr.f32.mxu0 0.0
    %v4887 = vand.u32 %v4481, 4294901760
    %4888 = vmatmul.mubr.f32.gmra.mrb[0].mxu0 %v4887
    %v4889 = vpop.f32.mrb[0].mxu0
    %v4890 = vadd.f32 %v4807, %v4889
    %v4891 = vpop.f32.mrb[0].mxu0
    %4892 = vdwg.mxu0
    %4893 = vmatprep.subr.mxu0 0.0
    %v4894 = vand.u32 %v621, 4294901760
    %4895 = vmatpush1.msra.mxu0 %v4894
    %4896 = vmatprep.subr.mxu0 0.0
    %v4897 = vand.u32 %v622, 4294901760
    %4898 = vmatpush1.msra.mxu0 %v4897
    %4899 = vmatprep.subr.mxu0 0.0
    %v4900 = vand.u32 %v623, 4294901760
    %4901 = vmatpush1.msra.mxu0 %v4900
    %4902 = vmatprep.subr.mxu0 0.0
    %v4903 = vand.u32 %v624, 4294901760
    %4904 = vmatpush1.msra.mxu0 %v4903
    %4905 = vmatprep.subr.mxu0 0.0
    %4906 = vmatpush1.msra.mxu0 0.0
    %4907 = vmatprep.subr.mxu0 0.0
    %4908 = vmatpush1.msra.mxu0 0.0
    %4909 = vmatprep.subr.mxu0 0.0
    %4910 = vmatpush1.msra.mxu0 0.0
    %4911 = vmatprep.subr.mxu0 0.0
    %4912 = vmatpush1.msra.mxu0 0.0
    %4913 = vmatprep.subr.mxu0 0.0
    %4914 = vmatpush1.msra.mxu0 0.0
    %4915 = vmatprep.subr.mxu0 0.0
    %4916 = vmatpush1.msra.mxu0 0.0
    %4917 = vmatprep.subr.mxu0 0.0
    %4918 = vmatpush1.msra.mxu0 0.0
    %4919 = vmatprep.subr.mxu0 0.0
    %4920 = vmatpush1.msra.mxu0 0.0
    %4921 = vmatprep.subr.mxu0 0.0
    %4922 = vmatpush1.msra.mxu0 0.0
    %4923 = vmatprep.subr.mxu0 0.0
    %4924 = vmatpush1.msra.mxu0 0.0
    %4925 = vmatprep.subr.mxu0 0.0
    %4926 = vmatpush1.msra.mxu0 0.0
    %4927 = vmatprep.subr.mxu0 0.0
    %4928 = vmatpush1.msra.mxu0 0.0
    %4929 = vmatprep.subr.mxu0 0.0
    %4930 = vmatpush1.msra.mxu0 0.0
    %4931 = vmatprep.subr.mxu0 0.0
    %4932 = vmatpush1.msra.mxu0 0.0
    %4933 = vmatprep.subr.mxu0 0.0
    %4934 = vmatpush1.msra.mxu0 0.0
    %4935 = vmatprep.subr.mxu0 0.0
    %4936 = vmatpush1.msra.mxu0 0.0
    %4937 = vmatprep.subr.mxu0 0.0
    %4938 = vmatpush1.msra.mxu0 0.0
    %4939 = vmatprep.subr.mxu0 0.0
    %4940 = vmatpush1.msra.mxu0 0.0
    %4941 = vmatprep.subr.mxu0 0.0
    %4942 = vmatpush1.msra.mxu0 0.0
    %4943 = vmatprep.subr.mxu0 0.0
    %4944 = vmatpush1.msra.mxu0 0.0
    %4945 = vmatprep.subr.mxu0 0.0
    %4946 = vmatpush1.msra.mxu0 0.0
    %4947 = vmatprep.subr.mxu0 0.0
    %4948 = vmatpush1.msra.mxu0 0.0
    %4949 = vmatprep.subr.mxu0 0.0
    %4950 = vmatpush1.msra.mxu0 0.0
    %4951 = vmatprep.subr.mxu0 0.0
    %4952 = vmatpush1.msra.mxu0 0.0
    %4953 = vmatprep.subr.mxu0 0.0
    %4954 = vmatpush1.msra.mxu0 0.0
    %4955 = vmatprep.subr.mxu0 0.0
    %4956 = vmatpush1.msra.mxu0 0.0
    %4957 = vmatprep.subr.mxu0 0.0
    %4958 = vmatpush1.msra.mxu0 0.0
    %4959 = vmatprep.subr.mxu0 0.0
    %4960 = vmatpush1.msra.mxu0 0.0
    %4961 = vmatprep.mubr.f32.mxu0 0.0
    %v4962 = vand.u32 %v4481, 4294901760
    %4963 = vmatmul.mubr.f32.gmra.mrb[0].mxu0 %v4962
    %v4964 = vpop.f32.mrb[0].mxu0
    %v4965 = vadd.f32 %v4890, %v4964
    %v4966 = vpop.f32.mrb[0].mxu0
    %4967 = vdwg.mxu0
    %v4969 = vrot.slane %v4965, 2
    %v4970 = vrot.slane %v4965, 3
    %v4971 = vrot.slane %v4965, 4
    %v4972 = vrot.slane %v4965, 5
    %v4977 = vadd.f32 %v600, %v4969
    %v4978 = vadd.f32 %v606, %v4970
    %v4979 = vadd.f32 %v612, %v4971
    %v4980 = vadd.f32 %v618, %v4972
    %v4981 = vxor.u32 %v4977, 2147483648
    %v4982 = vxor.u32 %v4978, 2147483648
    %v4983 = vxor.u32 %v4979, 2147483648
    %v4984 = vxor.u32 %v4980, 2147483648
    %v4985 = vmul.f32 %v4981, 1.442695
    %v4986 = vpow.pop %v4985
    %v4987 = vmul.f32 %v4982, 1.442695
    %v4988 = vpow.pop %v4987
    %v4989 = vmul.f32 %v4983, 1.442695
    %v4990 = vpow.pop %v4989
    %v4991 = vmul.f32 %v4984, 1.442695
    %v4992 = vpow.pop %v4991
    %v4993 = vadd.f32 %v4986, 1.0
    %v4994 = vadd.f32 %v4988, 1.0
    %v4995 = vadd.f32 %v4990, 1.0
    %v4996 = vadd.f32 %v4992, 1.0
    %v4997 = vrcp.pop %v4993
    %v4998 = vmul.f32 1.0, %v4997
    %v4999 = vrcp.pop %v4994
    %v5000 = vmul.f32 1.0, %v4999
    %v5001 = vrcp.pop %v4995
    %v5002 = vmul.f32 1.0, %v5001
    %v5003 = vrcp.pop %v4996
    %v5004 = vmul.f32 1.0, %v5003
    %v5005 = vtanh.pop %v4977
    %v5006 = vtanh.pop %v4978
    %v5007 = vtanh.pop %v4979
    %v5008 = vtanh.pop %v4980
    %v5013 = vrot.slane %v4413, 7
    %v5014 = vrot.slane %v4414, 7
    %v5015 = vrot.slane %v4415, 7
    %v5016 = vrot.slane %v4416, 7
    %v5021 = vmul.f32 %v4998, %v5013
    %v5022 = vmul.f32 %v5000, %v5014
    %v5023 = vmul.f32 %v5002, %v5015
    %v5024 = vmul.f32 %v5004, %v5016
    %5029 = vrot.lane.b32.xlu0 %v5005, 32
    %v5030 = vpop.permute.xlu0 %5029
    %5031 = vrot.lane.b32.xlu0 %v5006, 32
    %v5032 = vpop.permute.xlu0 %5031
    %5033 = vrot.lane.b32.xlu0 %v5007, 32
    %v5034 = vpop.permute.xlu0 %5033
    %5035 = vrot.lane.b32.xlu0 %v5008, 32
    %v5036 = vpop.permute.xlu0 %5035
    %v5041 = vmul.f32 %v4998, %v5030
    %v5042 = vmul.f32 %v5000, %v5032
    %v5043 = vmul.f32 %v5002, %v5034
    %v5044 = vmul.f32 %v5004, %v5036
    %5049 = vrot.lane.b32.xlu0 %v5041, 32
    %v5050 = vpop.permute.xlu0 %5049
    %5051 = vrot.lane.b32.xlu0 %v5042, 32
    %v5052 = vpop.permute.xlu0 %5051
    %5053 = vrot.lane.b32.xlu0 %v5043, 32
    %v5054 = vpop.permute.xlu0 %5053
    %5055 = vrot.lane.b32.xlu0 %v5044, 32
    %v5056 = vpop.permute.xlu0 %5055
    %v5061 = vadd.f32 %v5021, %v5050
    %v5062 = vadd.f32 %v5022, %v5052
    %v5063 = vadd.f32 %v5023, %v5054
    %v5064 = vadd.f32 %v5024, %v5056
    %v5065 = vtanh.pop %v5061
    %v5066 = vtanh.pop %v5062
    %v5067 = vtanh.pop %v5063
    %v5068 = vtanh.pop %v5064
    %5073 = vrot.lane.b32.xlu0 %v5065, 32
    %v5074 = vpop.permute.xlu0 %5073
    %5075 = vrot.lane.b32.xlu0 %v5066, 32
    %v5076 = vpop.permute.xlu0 %5075
    %5077 = vrot.lane.b32.xlu0 %v5067, 32
    %v5078 = vpop.permute.xlu0 %5077
    %5079 = vrot.lane.b32.xlu0 %v5068, 32
    %v5080 = vpop.permute.xlu0 %5079
    %v5085 = vmul.f32 %v4998, %v5074
    %v5086 = vmul.f32 %v5000, %v5076
    %v5087 = vmul.f32 %v5002, %v5078
    %v5088 = vmul.f32 %v5004, %v5080
    %v5089 = vmul.f32 %v5085, %v1229
    %v5090 = vmul.f32 %v5086, %v1229
    %v5091 = vmul.f32 %v5087, %v1229
    %v5092 = vmul.f32 %v5088, %v1229
    %v5097 = vrot.slane %v5090, 7
    %v5098 = vsel %vm3811, %v5097, %v5089
    %v5099 = vrot.slane %v5091, 6
    %v5100 = vrot.slane %v5092, 5
    %v5101 = vsel %vm1240, %v5100, %v5099
    %5102 = vrot.lane.b32.xlu0 %v5098, 64
    %v5103 = vpop.permute.xlu0 %5102
    %5104 = vrot.lane.b32.xlu0 %v5101, 64
    %v5105 = vpop.permute.xlu0 %5104
    %vm5108 = vcmask 261126
    %v5109 = vsel %vm5108, %v5103, 0.0
    %5110 = vadd.xlane.f32.xlu0 %v5109
    %v5111 = vpop.xlane.xlu0 %5110
    %vm5112 = vcmask 254976
    %v5113 = vsel %vm5112, %v5105, 0.0
    %5114 = vadd.xlane.f32.xlu0 %v5113
    %v5115 = vpop.xlane.xlu0 %5114
    %v5120 = vrot.slane %v5085, 6
    %v5121 = vrot.slane %v5086, 5
    %v5122 = vsel %vm1240, %v5121, %v5120
    %v5123 = vrot.slane %v5087, 4
    %v5124 = vsel %vm1243, %v5123, %v5122
    %v5125 = vrot.slane %v5088, 3
    %v5126 = vsel %vm1246, %v5125, %v5124
    %5127 = vrot.lane.b32.xlu0 %v5126, 64
    %v5128 = vpop.permute.xlu0 %5127
    %v5129 = vsel %vm626, %v5128, 0
    %5131 = vmatprep.subr.mxu0 0.0
    %v5132 = vand.u32 %v621, 4294901760
    %5133 = vmatpush1.msra.mxu0 %v5132
    %5134 = vmatprep.subr.mxu0 0.0
    %v5135 = vand.u32 %v622, 4294901760
    %5136 = vmatpush1.msra.mxu0 %v5135
    %5137 = vmatprep.subr.mxu0 0.0
    %v5138 = vand.u32 %v623, 4294901760
    %5139 = vmatpush1.msra.mxu0 %v5138
    %5140 = vmatprep.subr.mxu0 0.0
    %v5141 = vand.u32 %v624, 4294901760
    %5142 = vmatpush1.msra.mxu0 %v5141
    %5143 = vmatprep.subr.mxu0 0.0
    %5144 = vmatpush1.msra.mxu0 0.0
    %5145 = vmatprep.subr.mxu0 0.0
    %5146 = vmatpush1.msra.mxu0 0.0
    %5147 = vmatprep.subr.mxu0 0.0
    %5148 = vmatpush1.msra.mxu0 0.0
    %5149 = vmatprep.subr.mxu0 0.0
    %5150 = vmatpush1.msra.mxu0 0.0
    %5151 = vmatprep.subr.mxu0 0.0
    %5152 = vmatpush1.msra.mxu0 0.0
    %5153 = vmatprep.subr.mxu0 0.0
    %5154 = vmatpush1.msra.mxu0 0.0
    %5155 = vmatprep.subr.mxu0 0.0
    %5156 = vmatpush1.msra.mxu0 0.0
    %5157 = vmatprep.subr.mxu0 0.0
    %5158 = vmatpush1.msra.mxu0 0.0
    %5159 = vmatprep.subr.mxu0 0.0
    %5160 = vmatpush1.msra.mxu0 0.0
    %5161 = vmatprep.subr.mxu0 0.0
    %5162 = vmatpush1.msra.mxu0 0.0
    %5163 = vmatprep.subr.mxu0 0.0
    %5164 = vmatpush1.msra.mxu0 0.0
    %5165 = vmatprep.subr.mxu0 0.0
    %5166 = vmatpush1.msra.mxu0 0.0
    %5167 = vmatprep.subr.mxu0 0.0
    %5168 = vmatpush1.msra.mxu0 0.0
    %5169 = vmatprep.subr.mxu0 0.0
    %5170 = vmatpush1.msra.mxu0 0.0
    %5171 = vmatprep.subr.mxu0 0.0
    %5172 = vmatpush1.msra.mxu0 0.0
    %5173 = vmatprep.subr.mxu0 0.0
    %5174 = vmatpush1.msra.mxu0 0.0
    %5175 = vmatprep.subr.mxu0 0.0
    %5176 = vmatpush1.msra.mxu0 0.0
    %5177 = vmatprep.subr.mxu0 0.0
    %5178 = vmatpush1.msra.mxu0 0.0
    %5179 = vmatprep.subr.mxu0 0.0
    %5180 = vmatpush1.msra.mxu0 0.0
    %5181 = vmatprep.subr.mxu0 0.0
    %5182 = vmatpush1.msra.mxu0 0.0
    %5183 = vmatprep.subr.mxu0 0.0
    %5184 = vmatpush1.msra.mxu0 0.0
    %5185 = vmatprep.subr.mxu0 0.0
    %5186 = vmatpush1.msra.mxu0 0.0
    %5187 = vmatprep.subr.mxu0 0.0
    %5188 = vmatpush1.msra.mxu0 0.0
    %5189 = vmatprep.subr.mxu0 0.0
    %5190 = vmatpush1.msra.mxu0 0.0
    %5191 = vmatprep.subr.mxu0 0.0
    %5192 = vmatpush1.msra.mxu0 0.0
    %5193 = vmatprep.subr.mxu0 0.0
    %5194 = vmatpush1.msra.mxu0 0.0
    %5195 = vmatprep.subr.mxu0 0.0
    %5196 = vmatpush1.msra.mxu0 0.0
    %5197 = vmatprep.subr.mxu0 0.0
    %5198 = vmatpush1.msra.mxu0 0.0
    %5199 = vmatprep.mubr.f32.mxu0 0.0
    %v5200 = vand.u32 %v5129, 4294901760
    %v5201 = vsub.f32 %v5129, %v5200
    %v5202 = vand.u32 %v5201, 4294901760
    %v5203 = vsub.f32 %v5201, %v5202
    %v5204 = vand.u32 %v5203, 4294901760
    %5205 = vmatmul.mubr.f32.gmra.mrb[0].mxu0 %v5204
    %v5206 = vpop.f32.mrb[0].mxu0
    %v5207 = vadd.f32 0.0, %v5206
    %v5208 = vpop.f32.mrb[0].mxu0
    %5209 = vdwg.mxu0
    %5210 = vmatprep.subr.mxu0 0.0
    %v5211 = vand.u32 %v621, 4294901760
    %v5212 = vsub.f32 %v621, %v5211
    %v5213 = vand.u32 %v5212, 4294901760
    %v5214 = vsub.f32 %v5212, %v5213
    %v5215 = vand.u32 %v5214, 4294901760
    %5216 = vmatpush1.msra.mxu0 %v5215
    %5217 = vmatprep.subr.mxu0 0.0
    %v5218 = vand.u32 %v622, 4294901760
    %v5219 = vsub.f32 %v622, %v5218
    %v5220 = vand.u32 %v5219, 4294901760
    %v5221 = vsub.f32 %v5219, %v5220
    %v5222 = vand.u32 %v5221, 4294901760
    %5223 = vmatpush1.msra.mxu0 %v5222
    %5224 = vmatprep.subr.mxu0 0.0
    %v5225 = vand.u32 %v623, 4294901760
    %v5226 = vsub.f32 %v623, %v5225
    %v5227 = vand.u32 %v5226, 4294901760
    %v5228 = vsub.f32 %v5226, %v5227
    %v5229 = vand.u32 %v5228, 4294901760
    %5230 = vmatpush1.msra.mxu0 %v5229
    %5231 = vmatprep.subr.mxu0 0.0
    %v5232 = vand.u32 %v624, 4294901760
    %v5233 = vsub.f32 %v624, %v5232
    %v5234 = vand.u32 %v5233, 4294901760
    %v5235 = vsub.f32 %v5233, %v5234
    %v5236 = vand.u32 %v5235, 4294901760
    %5237 = vmatpush1.msra.mxu0 %v5236
    %5238 = vmatprep.subr.mxu0 0.0
    %5239 = vmatpush1.msra.mxu0 0.0
    %5240 = vmatprep.subr.mxu0 0.0
    %5241 = vmatpush1.msra.mxu0 0.0
    %5242 = vmatprep.subr.mxu0 0.0
    %5243 = vmatpush1.msra.mxu0 0.0
    %5244 = vmatprep.subr.mxu0 0.0
    %5245 = vmatpush1.msra.mxu0 0.0
    %5246 = vmatprep.subr.mxu0 0.0
    %5247 = vmatpush1.msra.mxu0 0.0
    %5248 = vmatprep.subr.mxu0 0.0
    %5249 = vmatpush1.msra.mxu0 0.0
    %5250 = vmatprep.subr.mxu0 0.0
    %5251 = vmatpush1.msra.mxu0 0.0
    %5252 = vmatprep.subr.mxu0 0.0
    %5253 = vmatpush1.msra.mxu0 0.0
    %5254 = vmatprep.subr.mxu0 0.0
    %5255 = vmatpush1.msra.mxu0 0.0
    %5256 = vmatprep.subr.mxu0 0.0
    %5257 = vmatpush1.msra.mxu0 0.0
    %5258 = vmatprep.subr.mxu0 0.0
    %5259 = vmatpush1.msra.mxu0 0.0
    %5260 = vmatprep.subr.mxu0 0.0
    %5261 = vmatpush1.msra.mxu0 0.0
    %5262 = vmatprep.subr.mxu0 0.0
    %5263 = vmatpush1.msra.mxu0 0.0
    %5264 = vmatprep.subr.mxu0 0.0
    %5265 = vmatpush1.msra.mxu0 0.0
    %5266 = vmatprep.subr.mxu0 0.0
    %5267 = vmatpush1.msra.mxu0 0.0
    %5268 = vmatprep.subr.mxu0 0.0
    %5269 = vmatpush1.msra.mxu0 0.0
    %5270 = vmatprep.subr.mxu0 0.0
    %5271 = vmatpush1.msra.mxu0 0.0
    %5272 = vmatprep.subr.mxu0 0.0
    %5273 = vmatpush1.msra.mxu0 0.0
    %5274 = vmatprep.subr.mxu0 0.0
    %5275 = vmatpush1.msra.mxu0 0.0
    %5276 = vmatprep.subr.mxu0 0.0
    %5277 = vmatpush1.msra.mxu0 0.0
    %5278 = vmatprep.subr.mxu0 0.0
    %5279 = vmatpush1.msra.mxu0 0.0
    %5280 = vmatprep.subr.mxu0 0.0
    %5281 = vmatpush1.msra.mxu0 0.0
    %5282 = vmatprep.subr.mxu0 0.0
    %5283 = vmatpush1.msra.mxu0 0.0
    %5284 = vmatprep.subr.mxu0 0.0
    %5285 = vmatpush1.msra.mxu0 0.0
    %5286 = vmatprep.subr.mxu0 0.0
    %5287 = vmatpush1.msra.mxu0 0.0
    %5288 = vmatprep.subr.mxu0 0.0
    %5289 = vmatpush1.msra.mxu0 0.0
    %5290 = vmatprep.subr.mxu0 0.0
    %5291 = vmatpush1.msra.mxu0 0.0
    %5292 = vmatprep.subr.mxu0 0.0
    %5293 = vmatpush1.msra.mxu0 0.0
    %5294 = vmatprep.mubr.f32.mxu0 0.0
    %v5295 = vand.u32 %v5129, 4294901760
    %5296 = vmatmul.mubr.f32.gmra.mrb[0].mxu0 %v5295
    %v5297 = vpop.f32.mrb[0].mxu0
    %v5298 = vadd.f32 %v5207, %v5297
    %v5299 = vpop.f32.mrb[0].mxu0
    %5300 = vdwg.mxu0
    %5301 = vmatprep.subr.mxu0 0.0
    %v5302 = vand.u32 %v621, 4294901760
    %v5303 = vsub.f32 %v621, %v5302
    %5304 = vmatpush1.msra.mxu0 %v5303
    %5305 = vmatprep.subr.mxu0 0.0
    %v5306 = vand.u32 %v622, 4294901760
    %v5307 = vsub.f32 %v622, %v5306
    %5308 = vmatpush1.msra.mxu0 %v5307
    %5309 = vmatprep.subr.mxu0 0.0
    %v5310 = vand.u32 %v623, 4294901760
    %v5311 = vsub.f32 %v623, %v5310
    %5312 = vmatpush1.msra.mxu0 %v5311
    %5313 = vmatprep.subr.mxu0 0.0
    %v5314 = vand.u32 %v624, 4294901760
    %v5315 = vsub.f32 %v624, %v5314
    %5316 = vmatpush1.msra.mxu0 %v5315
    %5317 = vmatprep.subr.mxu0 0.0
    %5318 = vmatpush1.msra.mxu0 0.0
    %5319 = vmatprep.subr.mxu0 0.0
    %5320 = vmatpush1.msra.mxu0 0.0
    %5321 = vmatprep.subr.mxu0 0.0
    %5322 = vmatpush1.msra.mxu0 0.0
    %5323 = vmatprep.subr.mxu0 0.0
    %5324 = vmatpush1.msra.mxu0 0.0
    %5325 = vmatprep.subr.mxu0 0.0
    %5326 = vmatpush1.msra.mxu0 0.0
    %5327 = vmatprep.subr.mxu0 0.0
    %5328 = vmatpush1.msra.mxu0 0.0
    %5329 = vmatprep.subr.mxu0 0.0
    %5330 = vmatpush1.msra.mxu0 0.0
    %5331 = vmatprep.subr.mxu0 0.0
    %5332 = vmatpush1.msra.mxu0 0.0
    %5333 = vmatprep.subr.mxu0 0.0
    %5334 = vmatpush1.msra.mxu0 0.0
    %5335 = vmatprep.subr.mxu0 0.0
    %5336 = vmatpush1.msra.mxu0 0.0
    %5337 = vmatprep.subr.mxu0 0.0
    %5338 = vmatpush1.msra.mxu0 0.0
    %5339 = vmatprep.subr.mxu0 0.0
    %5340 = vmatpush1.msra.mxu0 0.0
    %5341 = vmatprep.subr.mxu0 0.0
    %5342 = vmatpush1.msra.mxu0 0.0
    %5343 = vmatprep.subr.mxu0 0.0
    %5344 = vmatpush1.msra.mxu0 0.0
    %5345 = vmatprep.subr.mxu0 0.0
    %5346 = vmatpush1.msra.mxu0 0.0
    %5347 = vmatprep.subr.mxu0 0.0
    %5348 = vmatpush1.msra.mxu0 0.0
    %5349 = vmatprep.subr.mxu0 0.0
    %5350 = vmatpush1.msra.mxu0 0.0
    %5351 = vmatprep.subr.mxu0 0.0
    %5352 = vmatpush1.msra.mxu0 0.0
    %5353 = vmatprep.subr.mxu0 0.0
    %5354 = vmatpush1.msra.mxu0 0.0
    %5355 = vmatprep.subr.mxu0 0.0
    %5356 = vmatpush1.msra.mxu0 0.0
    %5357 = vmatprep.subr.mxu0 0.0
    %5358 = vmatpush1.msra.mxu0 0.0
    %5359 = vmatprep.subr.mxu0 0.0
    %5360 = vmatpush1.msra.mxu0 0.0
    %5361 = vmatprep.subr.mxu0 0.0
    %5362 = vmatpush1.msra.mxu0 0.0
    %5363 = vmatprep.subr.mxu0 0.0
    %5364 = vmatpush1.msra.mxu0 0.0
    %5365 = vmatprep.subr.mxu0 0.0
    %5366 = vmatpush1.msra.mxu0 0.0
    %5367 = vmatprep.subr.mxu0 0.0
    %5368 = vmatpush1.msra.mxu0 0.0
    %5369 = vmatprep.subr.mxu0 0.0
    %5370 = vmatpush1.msra.mxu0 0.0
    %5371 = vmatprep.subr.mxu0 0.0
    %5372 = vmatpush1.msra.mxu0 0.0
    %5373 = vmatprep.mubr.f32.mxu0 0.0
    %v5374 = vand.u32 %v5129, 4294901760
    %v5375 = vsub.f32 %v5129, %v5374
    %5376 = vmatmul.mubr.f32.gmra.mrb[0].mxu0 %v5375
    %v5377 = vpop.f32.mrb[0].mxu0
    %v5378 = vadd.f32 %v5298, %v5377
    %v5379 = vpop.f32.mrb[0].mxu0
    %5380 = vdwg.mxu0
    %5381 = vmatprep.subr.mxu0 0.0
    %v5382 = vand.u32 %v621, 4294901760
    %5383 = vmatpush1.msra.mxu0 %v5382
    %5384 = vmatprep.subr.mxu0 0.0
    %v5385 = vand.u32 %v622, 4294901760
    %5386 = vmatpush1.msra.mxu0 %v5385
    %5387 = vmatprep.subr.mxu0 0.0
    %v5388 = vand.u32 %v623, 4294901760
    %5389 = vmatpush1.msra.mxu0 %v5388
    %5390 = vmatprep.subr.mxu0 0.0
    %v5391 = vand.u32 %v624, 4294901760
    %5392 = vmatpush1.msra.mxu0 %v5391
    %5393 = vmatprep.subr.mxu0 0.0
    %5394 = vmatpush1.msra.mxu0 0.0
    %5395 = vmatprep.subr.mxu0 0.0
    %5396 = vmatpush1.msra.mxu0 0.0
    %5397 = vmatprep.subr.mxu0 0.0
    %5398 = vmatpush1.msra.mxu0 0.0
    %5399 = vmatprep.subr.mxu0 0.0
    %5400 = vmatpush1.msra.mxu0 0.0
    %5401 = vmatprep.subr.mxu0 0.0
    %5402 = vmatpush1.msra.mxu0 0.0
    %5403 = vmatprep.subr.mxu0 0.0
    %5404 = vmatpush1.msra.mxu0 0.0
    %5405 = vmatprep.subr.mxu0 0.0
    %5406 = vmatpush1.msra.mxu0 0.0
    %5407 = vmatprep.subr.mxu0 0.0
    %5408 = vmatpush1.msra.mxu0 0.0
    %5409 = vmatprep.subr.mxu0 0.0
    %5410 = vmatpush1.msra.mxu0 0.0
    %5411 = vmatprep.subr.mxu0 0.0
    %5412 = vmatpush1.msra.mxu0 0.0
    %5413 = vmatprep.subr.mxu0 0.0
    %5414 = vmatpush1.msra.mxu0 0.0
    %5415 = vmatprep.subr.mxu0 0.0
    %5416 = vmatpush1.msra.mxu0 0.0
    %5417 = vmatprep.subr.mxu0 0.0
    %5418 = vmatpush1.msra.mxu0 0.0
    %5419 = vmatprep.subr.mxu0 0.0
    %5420 = vmatpush1.msra.mxu0 0.0
    %5421 = vmatprep.subr.mxu0 0.0
    %5422 = vmatpush1.msra.mxu0 0.0
    %5423 = vmatprep.subr.mxu0 0.0
    %5424 = vmatpush1.msra.mxu0 0.0
    %5425 = vmatprep.subr.mxu0 0.0
    %5426 = vmatpush1.msra.mxu0 0.0
    %5427 = vmatprep.subr.mxu0 0.0
    %5428 = vmatpush1.msra.mxu0 0.0
    %5429 = vmatprep.subr.mxu0 0.0
    %5430 = vmatpush1.msra.mxu0 0.0
    %5431 = vmatprep.subr.mxu0 0.0
    %5432 = vmatpush1.msra.mxu0 0.0
    %5433 = vmatprep.subr.mxu0 0.0
    %5434 = vmatpush1.msra.mxu0 0.0
    %5435 = vmatprep.subr.mxu0 0.0
    %5436 = vmatpush1.msra.mxu0 0.0
    %5437 = vmatprep.subr.mxu0 0.0
    %5438 = vmatpush1.msra.mxu0 0.0
    %5439 = vmatprep.subr.mxu0 0.0
    %5440 = vmatpush1.msra.mxu0 0.0
    %5441 = vmatprep.subr.mxu0 0.0
    %5442 = vmatpush1.msra.mxu0 0.0
    %5443 = vmatprep.subr.mxu0 0.0
    %5444 = vmatpush1.msra.mxu0 0.0
    %5445 = vmatprep.subr.mxu0 0.0
    %5446 = vmatpush1.msra.mxu0 0.0
    %5447 = vmatprep.subr.mxu0 0.0
    %5448 = vmatpush1.msra.mxu0 0.0
    %5449 = vmatprep.mubr.f32.mxu0 0.0
    %v5450 = vand.u32 %v5129, 4294901760
    %v5451 = vsub.f32 %v5129, %v5450
    %v5452 = vand.u32 %v5451, 4294901760
    %5453 = vmatmul.mubr.f32.gmra.mrb[0].mxu0 %v5452
    %v5454 = vpop.f32.mrb[0].mxu0
    %v5455 = vadd.f32 %v5378, %v5454
    %v5456 = vpop.f32.mrb[0].mxu0
    %5457 = vdwg.mxu0
    %5458 = vmatprep.subr.mxu0 0.0
    %v5459 = vand.u32 %v621, 4294901760
    %v5460 = vsub.f32 %v621, %v5459
    %v5461 = vand.u32 %v5460, 4294901760
    %5462 = vmatpush1.msra.mxu0 %v5461
    %5463 = vmatprep.subr.mxu0 0.0
    %v5464 = vand.u32 %v622, 4294901760
    %v5465 = vsub.f32 %v622, %v5464
    %v5466 = vand.u32 %v5465, 4294901760
    %5467 = vmatpush1.msra.mxu0 %v5466
    %5468 = vmatprep.subr.mxu0 0.0
    %v5469 = vand.u32 %v623, 4294901760
    %v5470 = vsub.f32 %v623, %v5469
    %v5471 = vand.u32 %v5470, 4294901760
    %5472 = vmatpush1.msra.mxu0 %v5471
    %5473 = vmatprep.subr.mxu0 0.0
    %v5474 = vand.u32 %v624, 4294901760
    %v5475 = vsub.f32 %v624, %v5474
    %v5476 = vand.u32 %v5475, 4294901760
    %5477 = vmatpush1.msra.mxu0 %v5476
    %5478 = vmatprep.subr.mxu0 0.0
    %5479 = vmatpush1.msra.mxu0 0.0
    %5480 = vmatprep.subr.mxu0 0.0
    %5481 = vmatpush1.msra.mxu0 0.0
    %5482 = vmatprep.subr.mxu0 0.0
    %5483 = vmatpush1.msra.mxu0 0.0
    %5484 = vmatprep.subr.mxu0 0.0
    %5485 = vmatpush1.msra.mxu0 0.0
    %5486 = vmatprep.subr.mxu0 0.0
    %5487 = vmatpush1.msra.mxu0 0.0
    %5488 = vmatprep.subr.mxu0 0.0
    %5489 = vmatpush1.msra.mxu0 0.0
    %5490 = vmatprep.subr.mxu0 0.0
    %5491 = vmatpush1.msra.mxu0 0.0
    %5492 = vmatprep.subr.mxu0 0.0
    %5493 = vmatpush1.msra.mxu0 0.0
    %5494 = vmatprep.subr.mxu0 0.0
    %5495 = vmatpush1.msra.mxu0 0.0
    %5496 = vmatprep.subr.mxu0 0.0
    %5497 = vmatpush1.msra.mxu0 0.0
    %5498 = vmatprep.subr.mxu0 0.0
    %5499 = vmatpush1.msra.mxu0 0.0
    %5500 = vmatprep.subr.mxu0 0.0
    %5501 = vmatpush1.msra.mxu0 0.0
    %5502 = vmatprep.subr.mxu0 0.0
    %5503 = vmatpush1.msra.mxu0 0.0
    %5504 = vmatprep.subr.mxu0 0.0
    %5505 = vmatpush1.msra.mxu0 0.0
    %5506 = vmatprep.subr.mxu0 0.0
    %5507 = vmatpush1.msra.mxu0 0.0
    %5508 = vmatprep.subr.mxu0 0.0
    %5509 = vmatpush1.msra.mxu0 0.0
    %5510 = vmatprep.subr.mxu0 0.0
    %5511 = vmatpush1.msra.mxu0 0.0
    %5512 = vmatprep.subr.mxu0 0.0
    %5513 = vmatpush1.msra.mxu0 0.0
    %5514 = vmatprep.subr.mxu0 0.0
    %5515 = vmatpush1.msra.mxu0 0.0
    %5516 = vmatprep.subr.mxu0 0.0
    %5517 = vmatpush1.msra.mxu0 0.0
    %5518 = vmatprep.subr.mxu0 0.0
    %5519 = vmatpush1.msra.mxu0 0.0
    %5520 = vmatprep.subr.mxu0 0.0
    %5521 = vmatpush1.msra.mxu0 0.0
    %5522 = vmatprep.subr.mxu0 0.0
    %5523 = vmatpush1.msra.mxu0 0.0
    %5524 = vmatprep.subr.mxu0 0.0
    %5525 = vmatpush1.msra.mxu0 0.0
    %5526 = vmatprep.subr.mxu0 0.0
    %5527 = vmatpush1.msra.mxu0 0.0
    %5528 = vmatprep.subr.mxu0 0.0
    %5529 = vmatpush1.msra.mxu0 0.0
    %5530 = vmatprep.subr.mxu0 0.0
    %5531 = vmatpush1.msra.mxu0 0.0
    %5532 = vmatprep.subr.mxu0 0.0
    %5533 = vmatpush1.msra.mxu0 0.0
    %5534 = vmatprep.mubr.f32.mxu0 0.0
    %v5535 = vand.u32 %v5129, 4294901760
    %5536 = vmatmul.mubr.f32.gmra.mrb[0].mxu0 %v5535
    %v5537 = vpop.f32.mrb[0].mxu0
    %v5538 = vadd.f32 %v5455, %v5537
    %v5539 = vpop.f32.mrb[0].mxu0
    %5540 = vdwg.mxu0
    %5541 = vmatprep.subr.mxu0 0.0
    %v5542 = vand.u32 %v621, 4294901760
    %5543 = vmatpush1.msra.mxu0 %v5542
    %5544 = vmatprep.subr.mxu0 0.0
    %v5545 = vand.u32 %v622, 4294901760
    %5546 = vmatpush1.msra.mxu0 %v5545
    %5547 = vmatprep.subr.mxu0 0.0
    %v5548 = vand.u32 %v623, 4294901760
    %5549 = vmatpush1.msra.mxu0 %v5548
    %5550 = vmatprep.subr.mxu0 0.0
    %v5551 = vand.u32 %v624, 4294901760
    %5552 = vmatpush1.msra.mxu0 %v5551
    %5553 = vmatprep.subr.mxu0 0.0
    %5554 = vmatpush1.msra.mxu0 0.0
    %5555 = vmatprep.subr.mxu0 0.0
    %5556 = vmatpush1.msra.mxu0 0.0
    %5557 = vmatprep.subr.mxu0 0.0
    %5558 = vmatpush1.msra.mxu0 0.0
    %5559 = vmatprep.subr.mxu0 0.0
    %5560 = vmatpush1.msra.mxu0 0.0
    %5561 = vmatprep.subr.mxu0 0.0
    %5562 = vmatpush1.msra.mxu0 0.0
    %5563 = vmatprep.subr.mxu0 0.0
    %5564 = vmatpush1.msra.mxu0 0.0
    %5565 = vmatprep.subr.mxu0 0.0
    %5566 = vmatpush1.msra.mxu0 0.0
    %5567 = vmatprep.subr.mxu0 0.0
    %5568 = vmatpush1.msra.mxu0 0.0
    %5569 = vmatprep.subr.mxu0 0.0
    %5570 = vmatpush1.msra.mxu0 0.0
    %5571 = vmatprep.subr.mxu0 0.0
    %5572 = vmatpush1.msra.mxu0 0.0
    %5573 = vmatprep.subr.mxu0 0.0
    %5574 = vmatpush1.msra.mxu0 0.0
    %5575 = vmatprep.subr.mxu0 0.0
    %5576 = vmatpush1.msra.mxu0 0.0
    %5577 = vmatprep.subr.mxu0 0.0
    %5578 = vmatpush1.msra.mxu0 0.0
    %5579 = vmatprep.subr.mxu0 0.0
    %5580 = vmatpush1.msra.mxu0 0.0
    %5581 = vmatprep.subr.mxu0 0.0
    %5582 = vmatpush1.msra.mxu0 0.0
    %5583 = vmatprep.subr.mxu0 0.0
    %5584 = vmatpush1.msra.mxu0 0.0
    %5585 = vmatprep.subr.mxu0 0.0
    %5586 = vmatpush1.msra.mxu0 0.0
    %5587 = vmatprep.subr.mxu0 0.0
    %5588 = vmatpush1.msra.mxu0 0.0
    %5589 = vmatprep.subr.mxu0 0.0
    %5590 = vmatpush1.msra.mxu0 0.0
    %5591 = vmatprep.subr.mxu0 0.0
    %5592 = vmatpush1.msra.mxu0 0.0
    %5593 = vmatprep.subr.mxu0 0.0
    %5594 = vmatpush1.msra.mxu0 0.0
    %5595 = vmatprep.subr.mxu0 0.0
    %5596 = vmatpush1.msra.mxu0 0.0
    %5597 = vmatprep.subr.mxu0 0.0
    %5598 = vmatpush1.msra.mxu0 0.0
    %5599 = vmatprep.subr.mxu0 0.0
    %5600 = vmatpush1.msra.mxu0 0.0
    %5601 = vmatprep.subr.mxu0 0.0
    %5602 = vmatpush1.msra.mxu0 0.0
    %5603 = vmatprep.subr.mxu0 0.0
    %5604 = vmatpush1.msra.mxu0 0.0
    %5605 = vmatprep.subr.mxu0 0.0
    %5606 = vmatpush1.msra.mxu0 0.0
    %5607 = vmatprep.subr.mxu0 0.0
    %5608 = vmatpush1.msra.mxu0 0.0
    %5609 = vmatprep.mubr.f32.mxu0 0.0
    %v5610 = vand.u32 %v5129, 4294901760
    %5611 = vmatmul.mubr.f32.gmra.mrb[0].mxu0 %v5610
    %v5612 = vpop.f32.mrb[0].mxu0
    %v5613 = vadd.f32 %v5538, %v5612
    %v5614 = vpop.f32.mrb[0].mxu0
    %5615 = vdwg.mxu0
    %v5617 = vrot.slane %v5613, 1
    %v5618 = vrot.slane %v5613, 2
    %v5619 = vrot.slane %v5613, 3
    %v5620 = vrot.slane %v5613, 4
    %v5625 = vadd.f32 %v600, %v5617
    %v5626 = vadd.f32 %v606, %v5618
    %v5627 = vadd.f32 %v612, %v5619
    %v5628 = vadd.f32 %v618, %v5620
    %v5629 = vxor.u32 %v5625, 2147483648
    %v5630 = vxor.u32 %v5626, 2147483648
    %v5631 = vxor.u32 %v5627, 2147483648
    %v5632 = vxor.u32 %v5628, 2147483648
    %v5633 = vmul.f32 %v5629, 1.442695
    %v5634 = vpow.pop %v5633
    %v5635 = vmul.f32 %v5630, 1.442695
    %v5636 = vpow.pop %v5635
    %v5637 = vmul.f32 %v5631, 1.442695
    %v5638 = vpow.pop %v5637
    %v5639 = vmul.f32 %v5632, 1.442695
    %v5640 = vpow.pop %v5639
    %v5641 = vadd.f32 %v5634, 1.0
    %v5642 = vadd.f32 %v5636, 1.0
    %v5643 = vadd.f32 %v5638, 1.0
    %v5644 = vadd.f32 %v5640, 1.0
    %v5645 = vrcp.pop %v5641
    %v5646 = vmul.f32 1.0, %v5645
    %v5647 = vrcp.pop %v5642
    %v5648 = vmul.f32 1.0, %v5647
    %v5649 = vrcp.pop %v5643
    %v5650 = vmul.f32 1.0, %v5649
    %v5651 = vrcp.pop %v5644
    %v5652 = vmul.f32 1.0, %v5651
    %v5653 = vtanh.pop %v5625
    %v5654 = vtanh.pop %v5626
    %v5655 = vtanh.pop %v5627
    %v5656 = vtanh.pop %v5628
    %v5661 = vrot.slane %v5061, 7
    %v5662 = vrot.slane %v5062, 7
    %v5663 = vrot.slane %v5063, 7
    %v5664 = vrot.slane %v5064, 7
    %v5669 = vmul.f32 %v5646, %v5661
    %v5670 = vmul.f32 %v5648, %v5662
    %v5671 = vmul.f32 %v5650, %v5663
    %v5672 = vmul.f32 %v5652, %v5664
    %5677 = vrot.lane.b32.xlu0 %v5653, 32
    %v5678 = vpop.permute.xlu0 %5677
    %5679 = vrot.lane.b32.xlu0 %v5654, 32
    %v5680 = vpop.permute.xlu0 %5679
    %5681 = vrot.lane.b32.xlu0 %v5655, 32
    %v5682 = vpop.permute.xlu0 %5681
    %5683 = vrot.lane.b32.xlu0 %v5656, 32
    %v5684 = vpop.permute.xlu0 %5683
    %v5689 = vmul.f32 %v5646, %v5678
    %v5690 = vmul.f32 %v5648, %v5680
    %v5691 = vmul.f32 %v5650, %v5682
    %v5692 = vmul.f32 %v5652, %v5684
    %5697 = vrot.lane.b32.xlu0 %v5689, 32
    %v5698 = vpop.permute.xlu0 %5697
    %5699 = vrot.lane.b32.xlu0 %v5690, 32
    %v5700 = vpop.permute.xlu0 %5699
    %5701 = vrot.lane.b32.xlu0 %v5691, 32
    %v5702 = vpop.permute.xlu0 %5701
    %5703 = vrot.lane.b32.xlu0 %v5692, 32
    %v5704 = vpop.permute.xlu0 %5703
    %v5709 = vadd.f32 %v5669, %v5698
    %v5710 = vadd.f32 %v5670, %v5700
    %v5711 = vadd.f32 %v5671, %v5702
    %v5712 = vadd.f32 %v5672, %v5704
    %v5713 = vtanh.pop %v5709
    %v5714 = vtanh.pop %v5710
    %v5715 = vtanh.pop %v5711
    %v5716 = vtanh.pop %v5712
    %5721 = vrot.lane.b32.xlu0 %v5713, 32
    %v5722 = vpop.permute.xlu0 %5721
    %5723 = vrot.lane.b32.xlu0 %v5714, 32
    %v5724 = vpop.permute.xlu0 %5723
    %5725 = vrot.lane.b32.xlu0 %v5715, 32
    %v5726 = vpop.permute.xlu0 %5725
    %5727 = vrot.lane.b32.xlu0 %v5716, 32
    %v5728 = vpop.permute.xlu0 %5727
    %v5733 = vmul.f32 %v5646, %v5722
    %v5734 = vmul.f32 %v5648, %v5724
    %v5735 = vmul.f32 %v5650, %v5726
    %v5736 = vmul.f32 %v5652, %v5728
    %v5737 = vmul.f32 %v5733, %v1229
    %v5738 = vmul.f32 %v5734, %v1229
    %v5739 = vmul.f32 %v5735, %v1229
    %v5740 = vmul.f32 %v5736, %v1229
    %v5745 = vrot.slane %v5738, 7
    %v5746 = vrot.slane %v5739, 6
    %v5747 = vsel %vm1240, %v5746, %v5745
    %v5748 = vrot.slane %v5740, 5
    %v5749 = vsel %vm1243, %v5748, %v5747
    %5750 = vrot.lane.b32.xlu0 %v5737, 64
    %v5751 = vpop.permute.xlu0 %5750
    %5752 = vrot.lane.b32.xlu0 %v5749, 64
    %v5753 = vpop.permute.xlu0 %5752
    %vm5756 = vcmask 261127
    %v5757 = vsel %vm5756, %v5751, 0.0
    %5758 = vadd.xlane.f32.xlu0 %v5757
    %v5759 = vpop.xlane.xlu0 %5758
    %vm5760 = vcmask 256000
    %v5761 = vsel %vm5760, %v5753, 0.0
    %5762 = vadd.xlane.f32.xlu0 %v5761
    %v5763 = vpop.xlane.xlu0 %5762
    %v5765 = vrot.slane %v1895, 1
    %v5768 = vrot.slane %v2536, 2
    %v5771 = vrot.slane %v3177, 3
    %v5774 = vrot.slane %v3819, 4
    %vm5778 = vcmask 1042432
    %v5779 = vrot.slane %v4463, 5
    %v5780 = vrot.slane %v4467, 5
    %v5781 = vsel %vm5778, %v5779, %v5780
    %vm5785 = vcmask 1041408
    %v5786 = vrot.slane %v5111, 6
    %v5787 = vrot.slane %v5115, 6
    %v5788 = vsel %vm5785, %v5786, %v5787
    %vm5792 = vcmask 1040384
    %v5793 = vrot.slane %v5759, 7
    %v5794 = vrot.slane %v5763, 7
    %v5795 = vsel %vm5792, %v5793, %v5794
    %vm5797 = vcmask 7168
    %v5798 = vsel %vm5797, %v1254, %v5765
    %vm5799 = vcmask 15360
    %v5800 = vsel %vm5799, %v5798, %v5768
    %vm5801 = vcmask 23552
    %v5802 = vsel %vm5801, %v5800, %v5771
    %vm5803 = vcmask 31744
    %v5804 = vsel %vm5803, %v5802, %v5774
    %vm5805 = vcmask 39936
    %v5806 = vsel %vm5805, %v5804, %v5781
    %vm5807 = vcmask 48128
    %v5808 = vsel %vm5807, %v5806, %v5788
    %vm5809 = vcmask 56320
    %v5810 = vsel %vm5809, %v5808, %v5795
    %vm5811 = vcmask 60416
    %5812 = vst.msk [vmem:[#allocation2] sm:$0xf] %vm5811, %v5810
    // Predicated region
    $region22: #{should_model_forward.1} parent=1 // pred_check
      _
    $region23: #{should_model_forward.1} parent=1 // pred_check_branch
      %5814 = sbr.rel (0) target = $region25
    $region24: #{should_model_forward.1} parent=1 // pred_region
      %s5816 = ssub.s32 64, 64
      %5817 = vsyncadd [#allocation3], %s5816
      %s5819 = sshll.u32 [#allocation2], 4
      %s5820 = int_to_ptr.vmem [resolvable:$true] %s5819
      %5822 = dma.vmem_to_hbm [thread:$0]  %s5820, 64, %s5, [#allocation3]
    $region25: #{should_model_forward.1} parent=1 // pred_fallthru
      _
    // Predicated region
    $region26: #{should_model_forward.1} parent=1 // pred_check
      _
    $region27: #{should_model_forward.1} parent=1 // pred_check_branch
      %5824 = sbr.rel (0) target = $region29
    $region28: #{should_model_forward.1} parent=1 // pred_region
      %5825 = dma.done [#allocation3], 64
    $region29: #{should_model_forward.1} parent=1 // pred_fallthru
      _
    %5826 = vsyncpa [#allocation3], 1

</llo_original>
